<compile_context>
chip_gen: v7x
topology: tpu7x:2x2x1
jax: 0.10.0
libtpu: 0.0.40
codegen_flags: <defaults>
</compile_context>

<pallas_src>
import functools

import jax
import jax.numpy as jnp
from jax import lax
from jax.experimental import pallas as pl
from jax.experimental.pallas import tpu as pltpu


def _celu(x):
    # CELU(alpha=1): x for x>0 else exp(x)-1. exp input is clamped at 0 so the
    # unselected branch never produces inf (keeps a future VJP well-behaved).
    return jnp.where(x > 0, x, jnp.exp(jnp.minimum(x, 0.0)) - 1.0)


def odefunc_kernel(c_ref, w1_ref, b1_ref, w2_ref, b2_ref, out_ref, *, approx_recip):
    c = c_ref[...]                                        # (tm, D) f32
    mxu_dtype = w1_ref.dtype                              # f32, or bf16 if weights pre-cast

    # Linear1 + CELU. Weights are kept in torch (out, in) layout -> contract
    # dim 1 of both operands (x @ W^T); no transpose emitted anywhere.
    h = lax.dot_general(c.astype(mxu_dtype), w1_ref[...],
                        (((1,), (1,)), ((), ())),
                        preferred_element_type=jnp.float32) + b1_ref[...]
    h = _celu(h)                                          # (tm, H) f32

    # Linear2
    dcdt = lax.dot_general(h.astype(mxu_dtype), w2_ref[...],
                           (((1,), (1,)), ((), ())),
                           preferred_element_type=jnp.float32) + b2_ref[...]

    # ortho projection: dcdt -= <dcdt,c>/<c,c> * c   (all f32; recip -> EUP slot)
    num = jnp.sum(dcdt * c, axis=-1, keepdims=True)       # (tm, 1)
    den = jnp.sum(c * c, axis=-1, keepdims=True)          # (tm, 1); NaN for all-zero
    scale = num * pl.reciprocal(den, approx=approx_recip)  # rows, same as PyTorch
    out_ref[...] = (dcdt - scale * c).astype(out_ref.dtype)


def _pick_tile_m(n_rows, dim_c, tile_m):
    """Choose a row tile: multiple of 8, several grid steps, modest VMEM."""
    if tile_m is not None:
        assert tile_m == n_rows or (n_rows % tile_m == 0 and tile_m % 8 == 0), (
            "tile_m must be a multiple of 8 that divides N (or equal N)")
        return tile_m
    if n_rows % 8 != 0:
        return n_rows  # single full-extent block (always legal)
    # Keep the double-buffered (c + out) tiles <= ~4 MiB so the same plan fits
    # v7x (64 MiB physical) and v5e (16 MiB scoped default); weights are
    # single-buffered separately.
    vmem_cap = max(8, (4 * 1024 * 1024) // (16 * dim_c))
    vmem_cap -= vmem_cap % 8
    steps_cap = max(8, (n_rows // 4) - (n_rows // 4) % 8)  # aim for >=4 grid steps
    cap = min(512, steps_cap, vmem_cap)
    best, tm = 8, 8
    while tm <= cap:
        if n_rows % tm == 0:
            best = tm
        tm += 8
    return best


def cast_params_for_matmul(params, matmul_dtype):
    """One-time (outside the ODE-solver loop) cast of the weight matrices, e.g.
    to bf16 for native MXU passes on v6e/v7x. Biases and all elementwise math
    stay f32."""
    w1, b1, w2, b2 = params
    return (w1.astype(matmul_dtype), b1, w2.astype(matmul_dtype), b2)


def odefunc_forward(t, c, params, *, tile_m=None, approx_recip=True):
    """ODEFunc.forward(t, c). `t` is unused (parity with the PyTorch module)."""
    del t
    w1, b1, w2, b2 = params
    N, D = c.shape
    H, D_w = w1.shape
    assert D_w == D and w2.shape == (D, H)

    tm = _pick_tile_m(N, D, tile_m)
    grid = (N // tm,)

    # Free metadata reshapes only (vectors are contiguous).
    b1_2d = b1.reshape(1, H)
    b2_2d = b2.reshape(1, D)

    # Advisory cost for XLA scheduling of the surrounding solver graph.
    cost = pl.CostEstimate(
        flops=4 * N * D * H + 8 * N * D,
        transcendentals=N * H,
        bytes_accessed=(2 * N * D * c.dtype.itemsize
                        + w1.size * w1.dtype.itemsize + w2.size * w2.dtype.itemsize
                        + (H + D) * 4),
    )

    kernel = functools.partial(odefunc_kernel, approx_recip=approx_recip)
    out_shape = jax.ShapeDtypeStruct((N, D), c.dtype)

    def build(single_buffer_weights):
        def const_spec(shape):
            # Grid-invariant operands: single-buffer to halve their VMEM cost.
            if single_buffer_weights:
                return pl.BlockSpec(shape, lambda i: (0, 0),
                                    pipeline_mode=pl.Buffered(1))
            return pl.BlockSpec(shape, lambda i: (0, 0))

        grid_spec = pltpu.PrefetchScalarGridSpec(
            num_scalar_prefetch=0,
            grid=grid,
            in_specs=[
                pl.BlockSpec((tm, D), lambda i: (i, 0)),   # c tile (double-buffered)
                const_spec((H, D)),                        # W1 (out, in), resident
                const_spec((1, H)),                        # b1
                const_spec((D, H)),                        # W2 (out, in), resident
                const_spec((1, D)),                        # b2
            ],
            out_specs=pl.BlockSpec((tm, D), lambda i: (i, 0)),
        )
        return pl.pallas_call(
            kernel,
            out_shape=out_shape,
            grid_spec=grid_spec,
            compiler_params=pltpu.CompilerParams(
                dimension_semantics=("parallel",)),
            cost_estimate=cost,
        )

    args = (c, w1, b1_2d, w2, b2_2d)
    try:
        return build(True)(*args)
    except Exception:
        # Fallback if this jax build rejects pipeline_mode / Buffered(1);
        # correctness is identical, only weight double-buffering differs.
        return build(False)(*args)


def init_params(key, dim_c, dim_hidden):
    # Matches nn.init.normal_(std=0.1) for weights, uniform_(-0.1, 0.1) for biases.
    k1, k2, k3, k4 = jax.random.split(key, 4)
    w1 = 0.1 * jax.random.normal(k1, (dim_hidden, dim_c), dtype=jnp.float32)   # Linear1.weight (out, in)
    b1 = jax.random.uniform(k2, (dim_hidden,), minval=-0.1, maxval=0.1, dtype=jnp.float32)
    w2 = 0.1 * jax.random.normal(k3, (dim_c, dim_hidden), dtype=jnp.float32)   # Linear2.weight (out, in)
    b2 = jax.random.uniform(k4, (dim_c,), minval=-0.1, maxval=0.1, dtype=jnp.float32)
    return (w1, b1, w2, b2)


def _reference(c, params):
    # Pure-JAX reference of the same forward (sanity check).
    w1, b1, w2, b2 = params
    h = c @ w1.T + b1
    h = jnp.where(h > 0, h, jnp.exp(h) - 1.0)
    dcdt = h @ w2.T + b2
    num = jnp.sum(dcdt * c, axis=-1, keepdims=True)
    den = jnp.sum(c * c, axis=-1, keepdims=True)
    return dcdt - num / den * c


if __name__ == "__main__":
    # Lane-dense dim_c (=128) so output stores are full-lane vst; batch=1024 with
    # auto tile_m=256 gives a 4-step "parallel" grid (pipelining + v7x dual-TC).
    dim_c, dim_hidden, batch = 128, 256, 1024

    key = jax.random.PRNGKey(0)
    kp, kc = jax.random.split(key)
    params = init_params(kp, dim_c, dim_hidden)
    c = jax.random.normal(kc, (batch, dim_c), dtype=jnp.float32)
    t = jnp.float32(0.0)   # unused by forward, kept for signature parity

    ref = _reference(c, params)

    # f32 path, exact reciprocal: strict check (MXU f32 is multi-pass bf16, so
    # allow ~1e-3 vs the XLA reference matmul).
    out = jax.block_until_ready(odefunc_forward(t, c, params, approx_recip=False))
    assert out.shape == (batch, dim_c)
    assert jnp.allclose(out, ref, atol=1e-3, rtol=1e-3), "f32 path mismatch"

    # Fast path: approx reciprocal + bf16 MXU inputs (weights cast once; f32
    # accumulation and f32 ortho/elementwise math) -- looser tolerance.
    params_bf16 = cast_params_for_matmul(params, jnp.bfloat16)
    out_fast = jax.block_until_ready(odefunc_forward(t, c, params_bf16))
    assert out_fast.shape == (batch, dim_c)
    assert jnp.allclose(out_fast, ref, atol=0.25, rtol=0.05), "bf16 path mismatch"

    print("KERNEL_OK")
</pallas_src>

<mosaic_0001>
module attributes {stable_mosaic.version = 11 : i64} {
  func.func @odefunc_kernel(%arg0: i32, %arg1: memref<256x128xf32, #tpu.memory_space<vmem>>, %arg2: memref<256x128xf32, #tpu.memory_space<vmem>>, %arg3: memref<1x256xf32, #tpu.memory_space<vmem>>, %arg4: memref<128x256xf32, #tpu.memory_space<vmem>>, %arg5: memref<1x128xf32, #tpu.memory_space<vmem>>, %arg6: memref<256x128xf32, #tpu.memory_space<vmem>>) attributes {dimension_semantics = [#tpu.dimension_semantics<parallel>], iteration_bounds = array<i64: 4>, scalar_prefetch = 0 : i64, scratch_operands = 0 : i64, tpu.core_type = #tpu.core_type<tc>, window_params = [{transform_indices = @transform_0, window_bounds = array<i64: 256, 128>}, {pipeline_mode = #tpu.pipeline_mode<synchronous>, transform_indices = @transform_1, window_bounds = array<i64: 256, 128>}, {pipeline_mode = #tpu.pipeline_mode<synchronous>, transform_indices = @transform_2, window_bounds = array<i64: 1, 256>}, {pipeline_mode = #tpu.pipeline_mode<synchronous>, transform_indices = @transform_3, window_bounds = array<i64: 128, 256>}, {pipeline_mode = #tpu.pipeline_mode<synchronous>, transform_indices = @transform_4, window_bounds = array<i64: 1, 128>}, {transform_indices = @transform_5, window_bounds = array<i64: 256, 128>}]} {
    %c0 = arith.constant 0 : index
    %c0_0 = arith.constant 0 : index
    %0 = vector.load %arg1[%c0, %c0_0] : memref<256x128xf32, #tpu.memory_space<vmem>>, vector<256x128xf32>
    %c0_1 = arith.constant 0 : index
    %c0_2 = arith.constant 0 : index
    %1 = vector.load %arg2[%c0_1, %c0_2] : memref<256x128xf32, #tpu.memory_space<vmem>>, vector<256x128xf32>
    %cst = arith.constant dense<0.000000e+00> : vector<256x256xf32>
    %2 = tpu.matmul %0, %1, %cst {dimension_numbers = #tpu.dot_dimension_numbers<[1], [1], [0], [0], [0, 0, 1, 0], [], []>} : vector<256x128xf32>, vector<256x128xf32>, vector<256x256xf32> -> vector<256x256xf32>
    %c0_3 = arith.constant 0 : index
    %c0_4 = arith.constant 0 : index
    %3 = vector.load %arg3[%c0_3, %c0_4] : memref<1x256xf32, #tpu.memory_space<vmem>>, vector<1x256xf32>
    %4 = vector.broadcast %3 : vector<1x256xf32> to vector<256x256xf32>
    %5 = arith.addf %2, %4 : vector<256x256xf32>
    %cst_5 = arith.constant 0.000000e+00 : f32
    %6 = vector.broadcast %cst_5 : f32 to vector<256x256xf32>
    %7 = arith.cmpf ogt, %5, %6 : vector<256x256xf32>
    %cst_6 = arith.constant 0.000000e+00 : f32
    %8 = vector.broadcast %cst_6 : f32 to vector<256x256xf32>
    %9 = arith.minimumf %5, %8 : vector<256x256xf32>
    %10 = math.exp %9 : vector<256x256xf32>
    %cst_7 = arith.constant 1.000000e+00 : f32
    %11 = vector.broadcast %cst_7 : f32 to vector<256x256xf32>
    %12 = arith.subf %10, %11 : vector<256x256xf32>
    %13 = arith.select %7, %5, %12 : vector<256x256xi1>, vector<256x256xf32>
    %c0_8 = arith.constant 0 : index
    %c0_9 = arith.constant 0 : index
    %14 = vector.load %arg4[%c0_8, %c0_9] : memref<128x256xf32, #tpu.memory_space<vmem>>, vector<128x256xf32>
    %cst_10 = arith.constant dense<0.000000e+00> : vector<256x128xf32>
    %15 = tpu.matmul %13, %14, %cst_10 {dimension_numbers = #tpu.dot_dimension_numbers<[1], [1], [0], [0], [0, 0, 1, 0], [], []>} : vector<256x256xf32>, vector<128x256xf32>, vector<256x128xf32> -> vector<256x128xf32>
    %c0_11 = arith.constant 0 : index
    %c0_12 = arith.constant 0 : index
    %16 = vector.load %arg5[%c0_11, %c0_12] : memref<1x128xf32, #tpu.memory_space<vmem>>, vector<1x128xf32>
    %17 = vector.broadcast %16 : vector<1x128xf32> to vector<256x128xf32>
    %18 = arith.addf %15, %17 : vector<256x128xf32>
    %19 = arith.mulf %18, %0 : vector<256x128xf32>
    %cst_13 = arith.constant dense<0.000000e+00> : vector<256xf32>
    %20 = vector.multi_reduction <add>, %19, %cst_13 [1] : vector<256x128xf32> to vector<256xf32>
    %21 = vector.shape_cast %20 : vector<256xf32> to vector<256x1xf32>
    %22 = arith.mulf %0, %0 : vector<256x128xf32>
    %cst_14 = arith.constant dense<0.000000e+00> : vector<256xf32>
    %23 = vector.multi_reduction <add>, %22, %cst_14 [1] : vector<256x128xf32> to vector<256xf32>
    %24 = vector.shape_cast %23 : vector<256xf32> to vector<256x1xf32>
    %25 = tpu.reciprocal %24 : vector<256x1xf32> -> vector<256x1xf32>
    %26 = arith.mulf %21, %25 : vector<256x1xf32>
    %27 = vector.broadcast %26 : vector<256x1xf32> to vector<256x128xf32>
    %28 = arith.mulf %27, %0 : vector<256x128xf32>
    %29 = arith.subf %18, %28 : vector<256x128xf32>
    %c0_15 = arith.constant 0 : index
    %c0_16 = arith.constant 0 : index
    %30 = vector.load %arg6[%c0_15, %c0_16] : memref<256x128xf32, #tpu.memory_space<vmem>>, vector<256x128xf32>
    tpu.vector_store %arg6[%c0_15, %c0_16], %29 {strides = array<i32>} : memref<256x128xf32, #tpu.memory_space<vmem>>, vector<256x128xf32>,
    return
  }
  func.func @transform_0(%arg0: i32) -> (i32, i32) {
    %c0_i32 = arith.constant 0 : i32
    %c0_i32_0 = arith.constant 0 : i32
    return %arg0, %c0_i32 : i32, i32
  }
  func.func @transform_1(%arg0: i32) -> (i32, i32) {
    %c0_i32 = arith.constant 0 : i32
    %c0_i32_0 = arith.constant 0 : i32
    %c0_i32_1 = arith.constant 0 : i32
    return %c0_i32, %c0_i32_0 : i32, i32
  }
  func.func @transform_2(%arg0: i32) -> (i32, i32) {
    %c0_i32 = arith.constant 0 : i32
    %c0_i32_0 = arith.constant 0 : i32
    %c0_i32_1 = arith.constant 0 : i32
    return %c0_i32, %c0_i32_0 : i32, i32
  }
  func.func @transform_3(%arg0: i32) -> (i32, i32) {
    %c0_i32 = arith.constant 0 : i32
    %c0_i32_0 = arith.constant 0 : i32
    %c0_i32_1 = arith.constant 0 : i32
    return %c0_i32, %c0_i32_0 : i32, i32
  }
  func.func @transform_4(%arg0: i32) -> (i32, i32) {
    %c0_i32 = arith.constant 0 : i32
    %c0_i32_0 = arith.constant 0 : i32
    %c0_i32_1 = arith.constant 0 : i32
    return %c0_i32, %c0_i32_0 : i32, i32
  }
  func.func @transform_5(%arg0: i32) -> (i32, i32) {
    %c0_i32 = arith.constant 0 : i32
    %c0_i32_0 = arith.constant 0 : i32
    return %arg0, %c0_i32 : i32, i32
  }
}

module attributes {stable_mosaic.version = 11 : i64} {
  func.func @odefunc_kernel(%arg0: i32, %arg1: memref<256x128xf32, #tpu.memory_space<vmem>>, %arg2: memref<256x128xf32, #tpu.memory_space<vmem>>, %arg3: memref<1x256xf32, #tpu.memory_space<vmem>>, %arg4: memref<128x256xf32, #tpu.memory_space<vmem>>, %arg5: memref<1x128xf32, #tpu.memory_space<vmem>>, %arg6: memref<256x128xf32, #tpu.memory_space<vmem>>) attributes {dimension_semantics = [#tpu.dimension_semantics<parallel>], iteration_bounds = array<i64: 4>, scalar_prefetch = 0 : i64, scratch_operands = 0 : i64, tpu.core_type = #tpu.core_type<tc>, window_params = [{transform_indices = @transform_0, window_bounds = array<i64: 256, 128>}, {pipeline_mode = #tpu.pipeline_mode<synchronous>, transform_indices = @transform_1, window_bounds = array<i64: 256, 128>}, {pipeline_mode = #tpu.pipeline_mode<synchronous>, transform_indices = @transform_2, window_bounds = array<i64: 1, 256>}, {pipeline_mode = #tpu.pipeline_mode<synchronous>, transform_indices = @transform_3, window_bounds = array<i64: 128, 256>}, {pipeline_mode = #tpu.pipeline_mode<synchronous>, transform_indices = @transform_4, window_bounds = array<i64: 1, 128>}, {transform_indices = @transform_5, window_bounds = array<i64: 256, 128>}]} {
    %c0 = arith.constant 0 : index
    %c0_0 = arith.constant 0 : index
    %0 = vector.load %arg1[%c0, %c0_0] : memref<256x128xf32, #tpu.memory_space<vmem>>, vector<256x128xf32>
    %c0_1 = arith.constant 0 : index
    %c0_2 = arith.constant 0 : index
    %1 = vector.load %arg2[%c0_1, %c0_2] : memref<256x128xf32, #tpu.memory_space<vmem>>, vector<256x128xf32>
    %cst = arith.constant dense<0.000000e+00> : vector<256x256xf32>
    %2 = tpu.matmul %0, %1, %cst {dimension_numbers = #tpu.dot_dimension_numbers<[1], [1], [0], [0], [0, 0, 1, 0], [], []>} : vector<256x128xf32>, vector<256x128xf32>, vector<256x256xf32> -> vector<256x256xf32>
    %c0_3 = arith.constant 0 : index
    %c0_4 = arith.constant 0 : index
    %3 = vector.load %arg3[%c0_3, %c0_4] : memref<1x256xf32, #tpu.memory_space<vmem>>, vector<1x256xf32>
    %4 = vector.broadcast %3 : vector<1x256xf32> to vector<256x256xf32>
    %5 = arith.addf %2, %4 : vector<256x256xf32>
    %cst_5 = arith.constant 0.000000e+00 : f32
    %6 = vector.broadcast %cst_5 : f32 to vector<256x256xf32>
    %7 = arith.cmpf ogt, %5, %6 : vector<256x256xf32>
    %cst_6 = arith.constant 0.000000e+00 : f32
    %8 = vector.broadcast %cst_6 : f32 to vector<256x256xf32>
    %9 = arith.minimumf %5, %8 : vector<256x256xf32>
    %10 = math.exp %9 : vector<256x256xf32>
    %cst_7 = arith.constant 1.000000e+00 : f32
    %11 = vector.broadcast %cst_7 : f32 to vector<256x256xf32>
    %12 = arith.subf %10, %11 : vector<256x256xf32>
    %13 = arith.select %7, %5, %12 : vector<256x256xi1>, vector<256x256xf32>
    %c0_8 = arith.constant 0 : index
    %c0_9 = arith.constant 0 : index
    %14 = vector.load %arg4[%c0_8, %c0_9] : memref<128x256xf32, #tpu.memory_space<vmem>>, vector<128x256xf32>
    %cst_10 = arith.constant dense<0.000000e+00> : vector<256x128xf32>
    %15 = tpu.matmul %13, %14, %cst_10 {dimension_numbers = #tpu.dot_dimension_numbers<[1], [1], [0], [0], [0, 0, 1, 0], [], []>} : vector<256x256xf32>, vector<128x256xf32>, vector<256x128xf32> -> vector<256x128xf32>
    %c0_11 = arith.constant 0 : index
    %c0_12 = arith.constant 0 : index
    %16 = vector.load %arg5[%c0_11, %c0_12] : memref<1x128xf32, #tpu.memory_space<vmem>>, vector<1x128xf32>
    %17 = vector.broadcast %16 : vector<1x128xf32> to vector<256x128xf32>
    %18 = arith.addf %15, %17 : vector<256x128xf32>
    %19 = arith.mulf %18, %0 : vector<256x128xf32>
    %cst_13 = arith.constant dense<0.000000e+00> : vector<256xf32>
    %20 = vector.multi_reduction <add>, %19, %cst_13 [1] : vector<256x128xf32> to vector<256xf32>
    %21 = vector.shape_cast %20 : vector<256xf32> to vector<256x1xf32>
    %22 = arith.mulf %0, %0 : vector<256x128xf32>
    %cst_14 = arith.constant dense<0.000000e+00> : vector<256xf32>
    %23 = vector.multi_reduction <add>, %22, %cst_14 [1] : vector<256x128xf32> to vector<256xf32>
    %24 = vector.shape_cast %23 : vector<256xf32> to vector<256x1xf32>
    %25 = tpu.reciprocal %24 : vector<256x1xf32> -> vector<256x1xf32>
    %26 = arith.mulf %21, %25 : vector<256x1xf32>
    %27 = vector.broadcast %26 : vector<256x1xf32> to vector<256x128xf32>
    %28 = arith.mulf %27, %0 : vector<256x128xf32>
    %29 = arith.subf %18, %28 : vector<256x128xf32>
    %c0_15 = arith.constant 0 : index
    %c0_16 = arith.constant 0 : index
    %30 = vector.load %arg6[%c0_15, %c0_16] : memref<256x128xf32, #tpu.memory_space<vmem>>, vector<256x128xf32>
    tpu.vector_store %arg6[%c0_15, %c0_16], %29 {strides = array<i32>} : memref<256x128xf32, #tpu.memory_space<vmem>>, vector<256x128xf32>,
    return
  }
  func.func @transform_0(%arg0: i32) -> (i32, i32) {
    %c0_i32 = arith.constant 0 : i32
    %c0_i32_0 = arith.constant 0 : i32
    return %arg0, %c0_i32 : i32, i32
  }
  func.func @transform_1(%arg0: i32) -> (i32, i32) {
    %c0_i32 = arith.constant 0 : i32
    %c0_i32_0 = arith.constant 0 : i32
    %c0_i32_1 = arith.constant 0 : i32
    return %c0_i32, %c0_i32_0 : i32, i32
  }
  func.func @transform_2(%arg0: i32) -> (i32, i32) {
    %c0_i32 = arith.constant 0 : i32
    %c0_i32_0 = arith.constant 0 : i32
    %c0_i32_1 = arith.constant 0 : i32
    return %c0_i32, %c0_i32_0 : i32, i32
  }
  func.func @transform_3(%arg0: i32) -> (i32, i32) {
    %c0_i32 = arith.constant 0 : i32
    %c0_i32_0 = arith.constant 0 : i32
    %c0_i32_1 = arith.constant 0 : i32
    return %c0_i32, %c0_i32_0 : i32, i32
  }
  func.func @transform_4(%arg0: i32) -> (i32, i32) {
    %c0_i32 = arith.constant 0 : i32
    %c0_i32_0 = arith.constant 0 : i32
    %c0_i32_1 = arith.constant 0 : i32
    return %c0_i32, %c0_i32_0 : i32, i32
  }
  func.func @transform_5(%arg0: i32) -> (i32, i32) {
    %c0_i32 = arith.constant 0 : i32
    %c0_i32_0 = arith.constant 0 : i32
    return %arg0, %c0_i32 : i32, i32
  }
}

</mosaic_0001>

<llo_original>
// kernel: tpu_custom_call.1
$region0: #{tpu_custom_call.1}
  #allocation0 [shape = 'u32[]', space=smem, size = 0x4, offset = 0x4, fixed_abs, tag = 'smem constant byte address 0x4 - core index']
  #allocation1 [shape = 'u32[144,128]{1,0:T(1,128)}', space=vmem, size = 0x12000, scoped, tag = 'internal scratch']
  %s0 = inlined_call_operand.hbm [shape: f32[1024,128], index: 0, kind: input, shape index: {}]
  %s1 = inlined_call_operand.hbm [shape: f32[256,128], index: 1, kind: input, shape index: {}]
  %s2 = inlined_call_operand.vmem [shape: f32[1,256], index: 2, kind: input, shape index: {}]
  %s3 = inlined_call_operand.hbm [shape: f32[128,256], index: 3, kind: input, shape index: {}]
  %s4 = inlined_call_operand.vmem [shape: f32[1,128], index: 4, kind: input, shape index: {}]
  %s5 = inlined_call_operand.hbm [shape: f32[1024,128], index: 5, kind: output, shape index: {}]
  %s6 = sld [smem:[#allocation0]]
  $region65: #{tpu_custom_call.1} parent=0
    _
  %s8 = ssub.s32 1, %s6
  %s9 = scalar_select 0, %s8, %s6
  $region1: #{tpu_custom_call.1} parent=0
    #allocation2 [shape = 'u8[262144]{0}', space=vmem, size = 0x40000, scoped, tag = 'input window, operand 0']
    #allocation3 [shape = 's32[2]{0}', space=sflag, size = 0x8, scoped, tag = 'scoped memory for tpu_custom_call.1']
    #allocation4 [shape = 's32[2]{0}', space=sflag, size = 0x8, scoped, tag = 'scoped memory for tpu_custom_call.1']
    #allocation5 [shape = 'u8[131072]{0}', space=vmem, size = 0x20000, scoped, tag = 'input window, operand 1, single buffered']
    #allocation6 [shape = 's32[1]{0}', space=sflag, size = 0x4, scoped, tag = 'scoped memory for tpu_custom_call.1']
    #allocation7 [shape = 'u8[131072]{0}', space=vmem, size = 0x20000, scoped, tag = 'input window, operand 3, single buffered']
    #allocation8 [shape = 'u8[262144]{0}', space=vmem, size = 0x40000, scoped, tag = 'output window, operand 0']
    %10 = vsyncpa [#allocation3], 0
    %s11 = scalar_lea.sflag [#allocation3], 1
    %12 = vsyncpa %s11, 0
    %13 = vsyncpa [#allocation6], 0
    %14 = vsyncpa [#allocation4], 0
    %s15 = scalar_lea.sflag [#allocation4], 1
    %16 = vsyncpa %s15, 0
    loop: start=0, step=1, limit=6
    $region2: #{tpu_custom_call.1} parent=1 // loop_pre_header
      _
    $region3: #{tpu_custom_call.1} parent=1 // loop_header
      %s18 = sphi 0, %s22
      %p19 = scmp.ge.s32.totalorder %s18, 6
      %s28 = sphi 0, %s30
      %s31 = sphi 0, %s28
      %s32 = sphi 0, %s31
      %s48 = sphi 0, %s32
      %s52 = sphi 0, %s52
      %s54 = sphi 0, %s52
      %s55 = sphi 0, %s54
      %s69 = sphi 0, %s55
      %s73 = sphi 0, %s73
      %s75 = sphi 0, %s73
      %s76 = sphi 0, %s75
      %s90 = sphi 0, %s76
      %s94 = sphi 0, %s94
      %s96 = sphi 0, %s94
      %s97 = sphi 0, %s96
      %s111 = sphi 0, %s97
      %s115 = sphi 0, %s115
      %s117 = sphi 0, %s115
      %s118 = sphi 0, %s117
      %s132 = sphi 0, %s118
      %s138 = sphi 0, %s140
      %s141 = sphi 0, %s138
      %s142 = sphi 0, %s141
      %s158 = sphi 0, %s142
    $region4: #{tpu_custom_call.1} parent=1 // loop_header_branch
      %21 = sbr.rel (%p19) target = $region8
    $region5: #{tpu_custom_call.1} parent=1 // loop_body
      %s23 = ssub.s32 %s18, 1
      %s24 = ssub.s32 %s18, 2
      %s25 = sadd.s32 %s18, 1
      %s26 = ssub.s32 %s18, %s25
      %p27 = scmp.eq.s32.totalorder %s26, 0
      %s29 = sadd.s32 %s28, 1
      %s30 = scalar_select %p27, %s28, %s29
      %p33 = pneg %p27
      %p34 = scmp.eq.s32.totalorder %s18, 3
      %p35 = por %p33, %p34
      %p36 = scmp.ne.s32.totalorder %s28, %s31
      %p37 = scmp.eq.s32.totalorder %s18, 0
      %p38 = por %p36, %p37
      %p39 = scmp.ne.s32.totalorder %s28, %s31
      %p40 = scmp.eq.s32.totalorder %s23, 3
      %p41 = por %p39, %p40
      %p42 = scmp.ne.s32.totalorder %s31, %s32
      %p43 = scmp.eq.s32.totalorder %s23, 0
      %p44 = por %p42, %p43
      %p45 = scmp.ne.s32.totalorder %s31, %s32
      %p46 = scmp.eq.s32.totalorder %s24, 3
      %p47 = por %p45, %p46
      %p49 = scmp.ne.s32.totalorder %s32, %s48
      %p50 = scmp.eq.s32.totalorder %s24, 0
      %p51 = por %p49, %p50
      %s53 = sadd.s32 %s52, 1
      %p56 = scmp.eq.s32.totalorder %s18, 3
      %p57 = scmp.ne.s32.totalorder %s52, %s54
      %p58 = scmp.eq.s32.totalorder %s18, 0
      %p59 = por %p57, %p58
      %p60 = scmp.ne.s32.totalorder %s52, %s54
      %p61 = scmp.eq.s32.totalorder %s23, 3
      %p62 = por %p60, %p61
      %p63 = scmp.ne.s32.totalorder %s54, %s55
      %p64 = scmp.eq.s32.totalorder %s23, 0
      %p65 = por %p63, %p64
      %p66 = scmp.ne.s32.totalorder %s54, %s55
      %p67 = scmp.eq.s32.totalorder %s24, 3
      %p68 = por %p66, %p67
      %p70 = scmp.ne.s32.totalorder %s55, %s69
      %p71 = scmp.eq.s32.totalorder %s24, 0
      %p72 = por %p70, %p71
      %s74 = sadd.s32 %s73, 1
      %p77 = scmp.eq.s32.totalorder %s18, 3
      %p78 = scmp.ne.s32.totalorder %s73, %s75
      %p79 = scmp.eq.s32.totalorder %s18, 0
      %p80 = por %p78, %p79
      %p81 = scmp.ne.s32.totalorder %s73, %s75
      %p82 = scmp.eq.s32.totalorder %s23, 3
      %p83 = por %p81, %p82
      %p84 = scmp.ne.s32.totalorder %s75, %s76
      %p85 = scmp.eq.s32.totalorder %s23, 0
      %p86 = por %p84, %p85
      %p87 = scmp.ne.s32.totalorder %s75, %s76
      %p88 = scmp.eq.s32.totalorder %s24, 3
      %p89 = por %p87, %p88
      %p91 = scmp.ne.s32.totalorder %s76, %s90
      %p92 = scmp.eq.s32.totalorder %s24, 0
      %p93 = por %p91, %p92
      %s95 = sadd.s32 %s94, 1
      %p98 = scmp.eq.s32.totalorder %s18, 3
      %p99 = scmp.ne.s32.totalorder %s94, %s96
      %p100 = scmp.eq.s32.totalorder %s18, 0
      %p101 = por %p99, %p100
      %p102 = scmp.ne.s32.totalorder %s94, %s96
      %p103 = scmp.eq.s32.totalorder %s23, 3
      %p104 = por %p102, %p103
      %p105 = scmp.ne.s32.totalorder %s96, %s97
      %p106 = scmp.eq.s32.totalorder %s23, 0
      %p107 = por %p105, %p106
      %p108 = scmp.ne.s32.totalorder %s96, %s97
      %p109 = scmp.eq.s32.totalorder %s24, 3
      %p110 = por %p108, %p109
      %p112 = scmp.ne.s32.totalorder %s97, %s111
      %p113 = scmp.eq.s32.totalorder %s24, 0
      %p114 = por %p112, %p113
      %s116 = sadd.s32 %s115, 1
      %p119 = scmp.eq.s32.totalorder %s18, 3
      %p120 = scmp.ne.s32.totalorder %s115, %s117
      %p121 = scmp.eq.s32.totalorder %s18, 0
      %p122 = por %p120, %p121
      %p123 = scmp.ne.s32.totalorder %s115, %s117
      %p124 = scmp.eq.s32.totalorder %s23, 3
      %p125 = por %p123, %p124
      %p126 = scmp.ne.s32.totalorder %s117, %s118
      %p127 = scmp.eq.s32.totalorder %s23, 0
      %p128 = por %p126, %p127
      %p129 = scmp.ne.s32.totalorder %s117, %s118
      %p130 = scmp.eq.s32.totalorder %s24, 3
      %p131 = por %p129, %p130
      %p133 = scmp.ne.s32.totalorder %s118, %s132
      %p134 = scmp.eq.s32.totalorder %s24, 0
      %p135 = por %p133, %p134
      %s136 = ssub.s32 %s18, %s25
      %p137 = scmp.eq.s32.totalorder %s136, 0
      %s139 = sadd.s32 %s138, 1
      %s140 = scalar_select %p137, %s138, %s139
      %p143 = pneg %p137
      %p144 = scmp.eq.s32.totalorder %s18, 3
      %p145 = por %p143, %p144
      %p146 = scmp.ne.s32.totalorder %s138, %s141
      %p147 = scmp.eq.s32.totalorder %s18, 0
      %p148 = por %p146, %p147
      %p149 = scmp.ne.s32.totalorder %s138, %s141
      %p150 = scmp.eq.s32.totalorder %s23, 3
      %p151 = por %p149, %p150
      %p152 = scmp.ne.s32.totalorder %s141, %s142
      %p153 = scmp.eq.s32.totalorder %s23, 0
      %p154 = por %p152, %p153
      %p155 = scmp.ne.s32.totalorder %s141, %s142
      %p156 = scmp.eq.s32.totalorder %s24, 3
      %p157 = por %p155, %p156
      %p159 = scmp.ne.s32.totalorder %s142, %s158
      %p160 = scmp.eq.s32.totalorder %s24, 0
      %p161 = por %p159, %p160
      %p162 = scmp.le.s32.totalorder 1, %s18
      %p163 = scmp.lt.s32.totalorder %s18, 5
      %p164 = pnand %p162, %p163
      %p165 = pneg %p164
      // Predicated region
      $region9: #{tpu_custom_call.1} parent=5 // pred_check
        _
      $region10: #{tpu_custom_call.1} parent=5 // pred_check_branch
        %167 = sbr.rel (%p164) target = $region12
      $region11: #{tpu_custom_call.1} parent=5 // pred_region
        %s168 = ssub.s32 %s18, 1
        // Predicated region
        $region13: #{tpu_custom_call.1} parent=11 // pred_check
          %p169 = pneg %p65
        $region14: #{tpu_custom_call.1} parent=11 // pred_check_branch
          %171 = sbr.rel (%p169) target = $region16
        $region15: #{tpu_custom_call.1} parent=11 // pred_region
          %s173 = ssub.s32 4096, 4096
          %174 = vsyncadd [#allocation6], %s173
          %s175 = sshll.u32 [#allocation5], 4
          %s176 = int_to_ptr.vmem [resolvable:$true] %s175
          %181 = dma.hbm_to_vmem [thread:$0]  %s1, 4096, %s176, [#allocation6], 128, 128, 8
        $region16: #{tpu_custom_call.1} parent=11 // pred_fallthru
          _
        // Predicated region
        $region17: #{tpu_custom_call.1} parent=11 // pred_check
          %p182 = pneg %p86
        $region18: #{tpu_custom_call.1} parent=11 // pred_check_branch
          %184 = sbr.rel (%p182) target = $region20
        $region19: #{tpu_custom_call.1} parent=11 // pred_region
          _
        $region20: #{tpu_custom_call.1} parent=11 // pred_fallthru
          _
        // Predicated region
        $region21: #{tpu_custom_call.1} parent=11 // pred_check
          %p185 = pneg %p107
        $region22: #{tpu_custom_call.1} parent=11 // pred_check_branch
          %187 = sbr.rel (%p185) target = $region24
        $region23: #{tpu_custom_call.1} parent=11 // pred_region
          %s189 = ssub.s32 4096, 4096
          %190 = vsyncadd [#allocation6], %s189
          %s191 = sshll.u32 [#allocation7], 4
          %s192 = int_to_ptr.vmem [resolvable:$true] %s191
          %197 = dma.hbm_to_vmem [thread:$0]  %s3, 4096, %s192, [#allocation6], 256, 256, 16
        $region24: #{tpu_custom_call.1} parent=11 // pred_fallthru
          _
        // Predicated region
        $region25: #{tpu_custom_call.1} parent=11 // pred_check
          %p198 = pneg %p128
        $region26: #{tpu_custom_call.1} parent=11 // pred_check_branch
          %200 = sbr.rel (%p198) target = $region28
        $region27: #{tpu_custom_call.1} parent=11 // pred_region
          _
        $region28: #{tpu_custom_call.1} parent=11 // pred_fallthru
          _
      $region12: #{tpu_custom_call.1} parent=5 // pred_fallthru
        _
      %p201 = scmp.lt.s32.totalorder %s18, 4
      // Predicated region
      $region29: #{tpu_custom_call.1} parent=5 // pred_check
        %p202 = pneg %p201
      $region30: #{tpu_custom_call.1} parent=5 // pred_check_branch
        %204 = sbr.rel (%p202) target = $region32
      $region31: #{tpu_custom_call.1} parent=5 // pred_region
        // Predicated region
        $region33: #{tpu_custom_call.1} parent=31 // pred_check
          %p205 = pneg %p38
        $region34: #{tpu_custom_call.1} parent=31 // pred_check_branch
          %207 = sbr.rel (%p205) target = $region36
        $region35: #{tpu_custom_call.1} parent=31 // pred_region
          %s208 = sand.u32 %s28, 1
          %s209 = scalar_lea.sflag [#allocation3], %s208
          %s210 = sand.u32 %s28, 1
          %s211 = smul.addr %s210, 256
          %s212 = scalar_lea.vmem [#allocation2], %s211
          %s213 = smul.u32 32, %s18
          %s215 = ssub.s32 4096, 4096
          %216 = vsyncadd %s209, %s215
          %s217 = smul.addr %s213, 128
          %s218 = scalar_lea.hbm %s0, %s217
          %s219 = sshll.u32 %s212, 4
          %s220 = int_to_ptr.vmem [resolvable:$true] %s219
          %225 = dma.hbm_to_vmem [thread:$0]  %s218, 4096, %s220, %s209, 128, 128, 8
        $region36: #{tpu_custom_call.1} parent=31 // pred_fallthru
          _
      $region32: #{tpu_custom_call.1} parent=5 // pred_fallthru
        _
      %p226 = scmp.le.s32.totalorder 1, %s18
      %p227 = scmp.lt.s32.totalorder %s18, 5
      %p228 = pnand %p226, %p227
      %p229 = pneg %p228
      // Predicated region
      $region37: #{tpu_custom_call.1} parent=5 // pred_check
        _
      $region38: #{tpu_custom_call.1} parent=5 // pred_check_branch
        %231 = sbr.rel (%p228) target = $region40
      $region39: #{tpu_custom_call.1} parent=5 // pred_region
        %s232 = ssub.s32 %s18, 1
        %s233 = sand.u32 %s31, 1
        %s234 = scalar_lea.sflag [#allocation3], %s233
        %s235 = sand.u32 %s31, 1
        %s236 = smul.addr %s235, 256
        %s237 = scalar_lea.vmem [#allocation2], %s236
        // Predicated region
        $region41: #{tpu_custom_call.1} parent=39 // pred_check
          %p238 = pneg %p44
        $region42: #{tpu_custom_call.1} parent=39 // pred_check_branch
          %240 = sbr.rel (%p238) target = $region44
        $region43: #{tpu_custom_call.1} parent=39 // pred_region
          %241 = dma.done %s234, 4096
        $region44: #{tpu_custom_call.1} parent=39 // pred_fallthru
          _
        // Predicated region
        $region45: #{tpu_custom_call.1} parent=39 // pred_check
          %p242 = pneg %p65
        $region46: #{tpu_custom_call.1} parent=39 // pred_check_branch
          %244 = sbr.rel (%p242) target = $region48
        $region47: #{tpu_custom_call.1} parent=39 // pred_region
          %245 = dma.done [#allocation6], 4096
        $region48: #{tpu_custom_call.1} parent=39 // pred_fallthru
          _
        // Predicated region
        $region49: #{tpu_custom_call.1} parent=39 // pred_check
          %p246 = pneg %p107
        $region50: #{tpu_custom_call.1} parent=39 // pred_check_branch
          %248 = sbr.rel (%p246) target = $region52
        $region51: #{tpu_custom_call.1} parent=39 // pred_region
          %249 = dma.done [#allocation6], 4096
        $region52: #{tpu_custom_call.1} parent=39 // pred_fallthru
          _
        %s250 = sand.u32 %s31, 1
        %s251 = scalar_lea.sflag [#allocation3], %s250
        %s252 = sand.u32 %s31, 1
        %s253 = smul.addr %s252, 256
        %s254 = scalar_lea.vmem [#allocation2], %s253
        %p255 = pneg %p44
        %p256 = pneg %p41
        %p257 = pneg %p65
        %p258 = pneg %p62
        %p259 = pneg %p86
        %p260 = pneg %p83
        %p261 = pneg %p107
        %p262 = pneg %p104
        %p263 = pneg %p128
        %p264 = pneg %p125
        %p265 = pneg %p154
        %p266 = pneg %p151
        %s267 = sand.u32 %s141, 1
        %s268 = scalar_lea.sflag [#allocation4], %s267
        %s269 = sand.u32 %s141, 1
        %s270 = smul.addr %s269, 256
        %s271 = scalar_lea.vmem [#allocation8], %s270
        %s272 = smul.u32 32, %s23
        %s273 = smul.u32 32, %s23
        %v274 = vld [vmem:[%s237] sm:$0xff]
        %v275 = vld [vmem:[%s237 + $0x8] sm:$0xff]
        %v276 = vld [vmem:[%s237 + $0x10] sm:$0xff]
        %v277 = vld [vmem:[%s237 + $0x18] sm:$0xff]
        %v278 = vld [vmem:[%s237 + $0x20] sm:$0xff]
        %v279 = vld [vmem:[%s237 + $0x28] sm:$0xff]
        %v280 = vld [vmem:[%s237 + $0x30] sm:$0xff]
        %v281 = vld [vmem:[%s237 + $0x38] sm:$0xff]
        %v282 = vld [vmem:[%s237 + $0x40] sm:$0xff]
        %v283 = vld [vmem:[%s237 + $0x48] sm:$0xff]
        %v284 = vld [vmem:[%s237 + $0x50] sm:$0xff]
        %v285 = vld [vmem:[%s237 + $0x58] sm:$0xff]
        %v286 = vld [vmem:[%s237 + $0x60] sm:$0xff]
        %v287 = vld [vmem:[%s237 + $0x68] sm:$0xff]
        %v288 = vld [vmem:[%s237 + $0x70] sm:$0xff]
        %v289 = vld [vmem:[%s237 + $0x78] sm:$0xff]
        %v290 = vld [vmem:[%s237 + $0x80] sm:$0xff]
        %v291 = vld [vmem:[%s237 + $0x88] sm:$0xff]
        %v292 = vld [vmem:[%s237 + $0x90] sm:$0xff]
        %v293 = vld [vmem:[%s237 + $0x98] sm:$0xff]
        %v294 = vld [vmem:[%s237 + $0xa0] sm:$0xff]
        %v295 = vld [vmem:[%s237 + $0xa8] sm:$0xff]
        %v296 = vld [vmem:[%s237 + $0xb0] sm:$0xff]
        %v297 = vld [vmem:[%s237 + $0xb8] sm:$0xff]
        %v298 = vld [vmem:[%s237 + $0xc0] sm:$0xff]
        %v299 = vld [vmem:[%s237 + $0xc8] sm:$0xff]
        %v300 = vld [vmem:[%s237 + $0xd0] sm:$0xff]
        %v301 = vld [vmem:[%s237 + $0xd8] sm:$0xff]
        %v302 = vld [vmem:[%s237 + $0xe0] sm:$0xff]
        %v303 = vld [vmem:[%s237 + $0xe8] sm:$0xff]
        %v304 = vld [vmem:[%s237 + $0xf0] sm:$0xff]
        %v305 = vld [vmem:[%s237 + $0xf8] sm:$0xff]
        %v306 = vld [vmem:[#allocation5] sm:$0xff]
        %v307 = vld [vmem:[#allocation5 + $0x8] sm:$0xff]
        %v308 = vld [vmem:[#allocation5 + $0x10] sm:$0xff]
        %v309 = vld [vmem:[#allocation5 + $0x18] sm:$0xff]
        %v310 = vld [vmem:[#allocation5 + $0x20] sm:$0xff]
        %v311 = vld [vmem:[#allocation5 + $0x28] sm:$0xff]
        %v312 = vld [vmem:[#allocation5 + $0x30] sm:$0xff]
        %v313 = vld [vmem:[#allocation5 + $0x38] sm:$0xff]
        %v314 = vld [vmem:[#allocation5 + $0x40] sm:$0xff]
        %v315 = vld [vmem:[#allocation5 + $0x48] sm:$0xff]
        %v316 = vld [vmem:[#allocation5 + $0x50] sm:$0xff]
        %v317 = vld [vmem:[#allocation5 + $0x58] sm:$0xff]
        %v318 = vld [vmem:[#allocation5 + $0x60] sm:$0xff]
        %v319 = vld [vmem:[#allocation5 + $0x68] sm:$0xff]
        %v320 = vld [vmem:[#allocation5 + $0x70] sm:$0xff]
        %v321 = vld [vmem:[#allocation5 + $0x78] sm:$0xff]
        %v322 = vld [vmem:[#allocation5 + $0x80] sm:$0xff]
        %v323 = vld [vmem:[#allocation5 + $0x88] sm:$0xff]
        %v324 = vld [vmem:[#allocation5 + $0x90] sm:$0xff]
        %v325 = vld [vmem:[#allocation5 + $0x98] sm:$0xff]
        %v326 = vld [vmem:[#allocation5 + $0xa0] sm:$0xff]
        %v327 = vld [vmem:[#allocation5 + $0xa8] sm:$0xff]
        %v328 = vld [vmem:[#allocation5 + $0xb0] sm:$0xff]
        %v329 = vld [vmem:[#allocation5 + $0xb8] sm:$0xff]
        %v330 = vld [vmem:[#allocation5 + $0xc0] sm:$0xff]
        %v331 = vld [vmem:[#allocation5 + $0xc8] sm:$0xff]
        %v332 = vld [vmem:[#allocation5 + $0xd0] sm:$0xff]
        %v333 = vld [vmem:[#allocation5 + $0xd8] sm:$0xff]
        %v334 = vld [vmem:[#allocation5 + $0xe0] sm:$0xff]
        %v335 = vld [vmem:[#allocation5 + $0xe8] sm:$0xff]
        %v336 = vld [vmem:[#allocation5 + $0xf0] sm:$0xff]
        %v337 = vld [vmem:[#allocation5 + $0xf8] sm:$0xff]
        %v338 = vld [vmem:[%s2] sm:$0x3]
        %v340 = vlaneseq
        %v341 = vshrl.u32 %v340, 7
        %v342 = vsub.s32 0, %v341
        %v343 = vrot.slane %v338, %v342
        %v344 = vlaneseq
        %v345 = vshrl.u32 %v344, 7
        %v346 = vsub.s32 1, %v345
        %v347 = vrot.slane %v338, %v346
        %350 = vmatprep.subr.mxu0 0.0
        %351 = vmatpush1.xpose.msra.mxu0 %v306
        %352 = vmatprep.subr.mxu0 0.0
        %353 = vmatpush1.xpose.msra.mxu0 %v307
        %354 = vmatprep.subr.mxu0 0.0
        %355 = vmatpush1.xpose.msra.mxu0 %v308
        %356 = vmatprep.subr.mxu0 0.0
        %357 = vmatpush1.xpose.msra.mxu0 %v309
        %358 = vmatprep.subr.mxu0 0.0
        %359 = vmatpush1.xpose.msra.mxu0 %v310
        %360 = vmatprep.subr.mxu0 0.0
        %361 = vmatpush1.xpose.msra.mxu0 %v311
        %362 = vmatprep.subr.mxu0 0.0
        %363 = vmatpush1.xpose.msra.mxu0 %v312
        %364 = vmatprep.subr.mxu0 0.0
        %365 = vmatpush1.xpose.msra.mxu0 %v313
        %366 = vmatprep.subr.mxu0 0.0
        %367 = vmatpush1.xpose.msra.mxu0 %v314
        %368 = vmatprep.subr.mxu0 0.0
        %369 = vmatpush1.xpose.msra.mxu0 %v315
        %370 = vmatprep.subr.mxu0 0.0
        %371 = vmatpush1.xpose.msra.mxu0 %v316
        %372 = vmatprep.subr.mxu0 0.0
        %373 = vmatpush1.xpose.msra.mxu0 %v317
        %374 = vmatprep.subr.mxu0 0.0
        %375 = vmatpush1.xpose.msra.mxu0 %v318
        %376 = vmatprep.subr.mxu0 0.0
        %377 = vmatpush1.xpose.msra.mxu0 %v319
        %378 = vmatprep.subr.mxu0 0.0
        %379 = vmatpush1.xpose.msra.mxu0 %v320
        %380 = vmatprep.subr.mxu0 0.0
        %381 = vmatpush1.xpose.msra.mxu0 %v321
        %382 = vmatprep.subr.mxu0 0.0
        %383 = vmatpush1.xpose.msra.mxu0 %v322
        %384 = vmatprep.subr.mxu0 0.0
        %385 = vmatpush1.xpose.msra.mxu0 %v323
        %386 = vmatprep.subr.mxu0 0.0
        %387 = vmatpush1.xpose.msra.mxu0 %v324
        %388 = vmatprep.subr.mxu0 0.0
        %389 = vmatpush1.xpose.msra.mxu0 %v325
        %390 = vmatprep.subr.mxu0 0.0
        %391 = vmatpush1.xpose.msra.mxu0 %v326
        %392 = vmatprep.subr.mxu0 0.0
        %393 = vmatpush1.xpose.msra.mxu0 %v327
        %394 = vmatprep.subr.mxu0 0.0
        %395 = vmatpush1.xpose.msra.mxu0 %v328
        %396 = vmatprep.subr.mxu0 0.0
        %397 = vmatpush1.xpose.msra.mxu0 %v329
        %398 = vmatprep.subr.mxu0 0.0
        %399 = vmatpush1.xpose.msra.mxu0 %v330
        %400 = vmatprep.subr.mxu0 0.0
        %401 = vmatpush1.xpose.msra.mxu0 %v331
        %402 = vmatprep.subr.mxu0 0.0
        %403 = vmatpush1.xpose.msra.mxu0 %v332
        %404 = vmatprep.subr.mxu0 0.0
        %405 = vmatpush1.xpose.msra.mxu0 %v333
        %406 = vmatprep.subr.mxu0 0.0
        %407 = vmatpush1.xpose.msra.mxu0 %v334
        %408 = vmatprep.subr.mxu0 0.0
        %409 = vmatpush1.xpose.msra.mxu0 %v335
        %410 = vmatprep.subr.mxu0 0.0
        %411 = vmatpush1.xpose.msra.mxu0 %v336
        %412 = vmatprep.subr.mxu0 0.0
        %413 = vmatpush1.xpose.msra.mxu0 %v337
        %414 = vmatprep.mubr.f32.mxu0 0.0
        %415 = vmatmul.mubr.f32.gmra.mrb[0].mxu0 %v274
        %v416 = vpop.f32.mrb[0].mxu0
        %v417 = vadd.f32 %v343, %v416
        %v418 = vpop.f32.mrb[0].mxu0
        %v419 = vadd.f32 %v347, %v418
        %420 = vmatprep.mubr.f32.mxu0 0.0
        %421 = vmatmul.mubr.f32.gmra.mrb[0].mxu0 %v275
        %v422 = vpop.f32.mrb[0].mxu0
        %v423 = vadd.f32 %v343, %v422
        %v424 = vpop.f32.mrb[0].mxu0
        %v425 = vadd.f32 %v347, %v424
        %426 = vmatprep.mubr.f32.mxu0 0.0
        %427 = vmatmul.mubr.f32.gmra.mrb[0].mxu0 %v276
        %v428 = vpop.f32.mrb[0].mxu0
        %v429 = vadd.f32 %v343, %v428
        %v430 = vpop.f32.mrb[0].mxu0
        %v431 = vadd.f32 %v347, %v430
        %432 = vmatprep.mubr.f32.mxu0 0.0
        %433 = vmatmul.mubr.f32.gmra.mrb[0].mxu0 %v277
        %v434 = vpop.f32.mrb[0].mxu0
        %v435 = vadd.f32 %v343, %v434
        %v436 = vpop.f32.mrb[0].mxu0
        %v437 = vadd.f32 %v347, %v436
        %438 = vmatprep.mubr.f32.mxu0 0.0
        %439 = vmatmul.mubr.f32.gmra.mrb[0].mxu0 %v278
        %v440 = vpop.f32.mrb[0].mxu0
        %v441 = vadd.f32 %v343, %v440
        %v442 = vpop.f32.mrb[0].mxu0
        %v443 = vadd.f32 %v347, %v442
        %444 = vmatprep.mubr.f32.mxu0 0.0
        %445 = vmatmul.mubr.f32.gmra.mrb[0].mxu0 %v279
        %v446 = vpop.f32.mrb[0].mxu0
        %v447 = vadd.f32 %v343, %v446
        %v448 = vpop.f32.mrb[0].mxu0
        %v449 = vadd.f32 %v347, %v448
        %450 = vmatprep.mubr.f32.mxu0 0.0
        %451 = vmatmul.mubr.f32.gmra.mrb[0].mxu0 %v280
        %v452 = vpop.f32.mrb[0].mxu0
        %v453 = vadd.f32 %v343, %v452
        %v454 = vpop.f32.mrb[0].mxu0
        %v455 = vadd.f32 %v347, %v454
        %456 = vmatprep.mubr.f32.mxu0 0.0
        %457 = vmatmul.mubr.f32.gmra.mrb[0].mxu0 %v281
        %v458 = vpop.f32.mrb[0].mxu0
        %v459 = vadd.f32 %v343, %v458
        %v460 = vpop.f32.mrb[0].mxu0
        %v461 = vadd.f32 %v347, %v460
        %462 = vmatprep.mubr.f32.mxu0 0.0
        %463 = vmatmul.mubr.f32.gmra.mrb[0].mxu0 %v282
        %v464 = vpop.f32.mrb[0].mxu0
        %v465 = vadd.f32 %v343, %v464
        %v466 = vpop.f32.mrb[0].mxu0
        %v467 = vadd.f32 %v347, %v466
        %468 = vmatprep.mubr.f32.mxu0 0.0
        %469 = vmatmul.mubr.f32.gmra.mrb[0].mxu0 %v283
        %v470 = vpop.f32.mrb[0].mxu0
        %v471 = vadd.f32 %v343, %v470
        %v472 = vpop.f32.mrb[0].mxu0
        %v473 = vadd.f32 %v347, %v472
        %474 = vmatprep.mubr.f32.mxu0 0.0
        %475 = vmatmul.mubr.f32.gmra.mrb[0].mxu0 %v284
        %v476 = vpop.f32.mrb[0].mxu0
        %v477 = vadd.f32 %v343, %v476
        %v478 = vpop.f32.mrb[0].mxu0
        %v479 = vadd.f32 %v347, %v478
        %480 = vmatprep.mubr.f32.mxu0 0.0
        %481 = vmatmul.mubr.f32.gmra.mrb[0].mxu0 %v285
        %v482 = vpop.f32.mrb[0].mxu0
        %v483 = vadd.f32 %v343, %v482
        %v484 = vpop.f32.mrb[0].mxu0
        %v485 = vadd.f32 %v347, %v484
        %486 = vmatprep.mubr.f32.mxu0 0.0
        %487 = vmatmul.mubr.f32.gmra.mrb[0].mxu0 %v286
        %v488 = vpop.f32.mrb[0].mxu0
        %v489 = vadd.f32 %v343, %v488
        %v490 = vpop.f32.mrb[0].mxu0
        %v491 = vadd.f32 %v347, %v490
        %492 = vmatprep.mubr.f32.mxu0 0.0
        %493 = vmatmul.mubr.f32.gmra.mrb[0].mxu0 %v287
        %v494 = vpop.f32.mrb[0].mxu0
        %v495 = vadd.f32 %v343, %v494
        %v496 = vpop.f32.mrb[0].mxu0
        %v497 = vadd.f32 %v347, %v496
        %498 = vmatprep.mubr.f32.mxu0 0.0
        %499 = vmatmul.mubr.f32.gmra.mrb[0].mxu0 %v288
        %v500 = vpop.f32.mrb[0].mxu0
        %v501 = vadd.f32 %v343, %v500
        %v502 = vpop.f32.mrb[0].mxu0
        %v503 = vadd.f32 %v347, %v502
        %504 = vmatprep.mubr.f32.mxu0 0.0
        %505 = vmatmul.mubr.f32.gmra.mrb[0].mxu0 %v289
        %v506 = vpop.f32.mrb[0].mxu0
        %v507 = vadd.f32 %v343, %v506
        %v508 = vpop.f32.mrb[0].mxu0
        %v509 = vadd.f32 %v347, %v508
        %510 = vmatprep.mubr.f32.mxu0 0.0
        %511 = vmatmul.mubr.f32.gmra.mrb[0].mxu0 %v290
        %v512 = vpop.f32.mrb[0].mxu0
        %v513 = vadd.f32 %v343, %v512
        %v514 = vpop.f32.mrb[0].mxu0
        %v515 = vadd.f32 %v347, %v514
        %516 = vmatprep.mubr.f32.mxu0 0.0
        %517 = vmatmul.mubr.f32.gmra.mrb[0].mxu0 %v291
        %v518 = vpop.f32.mrb[0].mxu0
        %v519 = vadd.f32 %v343, %v518
        %v520 = vpop.f32.mrb[0].mxu0
        %v521 = vadd.f32 %v347, %v520
        %522 = vmatprep.mubr.f32.mxu0 0.0
        %523 = vmatmul.mubr.f32.gmra.mrb[0].mxu0 %v292
        %v524 = vpop.f32.mrb[0].mxu0
        %v525 = vadd.f32 %v343, %v524
        %v526 = vpop.f32.mrb[0].mxu0
        %v527 = vadd.f32 %v347, %v526
        %528 = vmatprep.mubr.f32.mxu0 0.0
        %529 = vmatmul.mubr.f32.gmra.mrb[0].mxu0 %v293
        %v530 = vpop.f32.mrb[0].mxu0
        %v531 = vadd.f32 %v343, %v530
        %v532 = vpop.f32.mrb[0].mxu0
        %v533 = vadd.f32 %v347, %v532
        %534 = vmatprep.mubr.f32.mxu0 0.0
        %535 = vmatmul.mubr.f32.gmra.mrb[0].mxu0 %v294
        %v536 = vpop.f32.mrb[0].mxu0
        %v537 = vadd.f32 %v343, %v536
        %v538 = vpop.f32.mrb[0].mxu0
        %v539 = vadd.f32 %v347, %v538
        %540 = vmatprep.mubr.f32.mxu0 0.0
        %541 = vmatmul.mubr.f32.gmra.mrb[0].mxu0 %v295
        %v542 = vpop.f32.mrb[0].mxu0
        %v543 = vadd.f32 %v343, %v542
        %v544 = vpop.f32.mrb[0].mxu0
        %v545 = vadd.f32 %v347, %v544
        %546 = vmatprep.mubr.f32.mxu0 0.0
        %547 = vmatmul.mubr.f32.gmra.mrb[0].mxu0 %v296
        %v548 = vpop.f32.mrb[0].mxu0
        %v549 = vadd.f32 %v343, %v548
        %v550 = vpop.f32.mrb[0].mxu0
        %v551 = vadd.f32 %v347, %v550
        %552 = vmatprep.mubr.f32.mxu0 0.0
        %553 = vmatmul.mubr.f32.gmra.mrb[0].mxu0 %v297
        %v554 = vpop.f32.mrb[0].mxu0
        %v555 = vadd.f32 %v343, %v554
        %v556 = vpop.f32.mrb[0].mxu0
        %v557 = vadd.f32 %v347, %v556
        %558 = vmatprep.mubr.f32.mxu0 0.0
        %559 = vmatmul.mubr.f32.gmra.mrb[0].mxu0 %v298
        %v560 = vpop.f32.mrb[0].mxu0
        %v561 = vadd.f32 %v343, %v560
        %v562 = vpop.f32.mrb[0].mxu0
        %v563 = vadd.f32 %v347, %v562
        %564 = vmatprep.mubr.f32.mxu0 0.0
        %565 = vmatmul.mubr.f32.gmra.mrb[0].mxu0 %v299
        %v566 = vpop.f32.mrb[0].mxu0
        %v567 = vadd.f32 %v343, %v566
        %v568 = vpop.f32.mrb[0].mxu0
        %v569 = vadd.f32 %v347, %v568
        %570 = vmatprep.mubr.f32.mxu0 0.0
        %571 = vmatmul.mubr.f32.gmra.mrb[0].mxu0 %v300
        %v572 = vpop.f32.mrb[0].mxu0
        %v573 = vadd.f32 %v343, %v572
        %v574 = vpop.f32.mrb[0].mxu0
        %v575 = vadd.f32 %v347, %v574
        %576 = vmatprep.mubr.f32.mxu0 0.0
        %577 = vmatmul.mubr.f32.gmra.mrb[0].mxu0 %v301
        %v578 = vpop.f32.mrb[0].mxu0
        %v579 = vadd.f32 %v343, %v578
        %v580 = vpop.f32.mrb[0].mxu0
        %v581 = vadd.f32 %v347, %v580
        %582 = vmatprep.mubr.f32.mxu0 0.0
        %583 = vmatmul.mubr.f32.gmra.mrb[0].mxu0 %v302
        %v584 = vpop.f32.mrb[0].mxu0
        %v585 = vadd.f32 %v343, %v584
        %v586 = vpop.f32.mrb[0].mxu0
        %v587 = vadd.f32 %v347, %v586
        %588 = vmatprep.mubr.f32.mxu0 0.0
        %589 = vmatmul.mubr.f32.gmra.mrb[0].mxu0 %v303
        %v590 = vpop.f32.mrb[0].mxu0
        %v591 = vadd.f32 %v343, %v590
        %v592 = vpop.f32.mrb[0].mxu0
        %v593 = vadd.f32 %v347, %v592
        %594 = vmatprep.mubr.f32.mxu0 0.0
        %595 = vmatmul.mubr.f32.gmra.mrb[0].mxu0 %v304
        %v596 = vpop.f32.mrb[0].mxu0
        %v597 = vadd.f32 %v343, %v596
        %v598 = vpop.f32.mrb[0].mxu0
        %v599 = vadd.f32 %v347, %v598
        %600 = vmatprep.mubr.f32.mxu0 0.0
        %601 = vmatmul.mubr.f32.gmra.mrb[0].mxu0 %v305
        %v602 = vpop.f32.mrb[0].mxu0
        %v603 = vadd.f32 %v343, %v602
        %v604 = vpop.f32.mrb[0].mxu0
        %v605 = vadd.f32 %v347, %v604
        %606 = vdwg.mxu0
        %vm607 = vcmp.gt.f32.partialorder %v417, 0.0
        %vm608 = vcmp.gt.f32.partialorder %v419, 0.0
        %vm609 = vcmp.gt.f32.partialorder %v423, 0.0
        %vm610 = vcmp.gt.f32.partialorder %v425, 0.0
        %vm611 = vcmp.gt.f32.partialorder %v429, 0.0
        %vm612 = vcmp.gt.f32.partialorder %v431, 0.0
        %vm613 = vcmp.gt.f32.partialorder %v435, 0.0
        %vm614 = vcmp.gt.f32.partialorder %v437, 0.0
        %vm615 = vcmp.gt.f32.partialorder %v441, 0.0
        %vm616 = vcmp.gt.f32.partialorder %v443, 0.0
        %vm617 = vcmp.gt.f32.partialorder %v447, 0.0
        %vm618 = vcmp.gt.f32.partialorder %v449, 0.0
        %vm619 = vcmp.gt.f32.partialorder %v453, 0.0
        %vm620 = vcmp.gt.f32.partialorder %v455, 0.0
        %vm621 = vcmp.gt.f32.partialorder %v459, 0.0
        %vm622 = vcmp.gt.f32.partialorder %v461, 0.0
        %vm623 = vcmp.gt.f32.partialorder %v465, 0.0
        %vm624 = vcmp.gt.f32.partialorder %v467, 0.0
        %vm625 = vcmp.gt.f32.partialorder %v471, 0.0
        %vm626 = vcmp.gt.f32.partialorder %v473, 0.0
        %vm627 = vcmp.gt.f32.partialorder %v477, 0.0
        %vm628 = vcmp.gt.f32.partialorder %v479, 0.0
        %vm629 = vcmp.gt.f32.partialorder %v483, 0.0
        %vm630 = vcmp.gt.f32.partialorder %v485, 0.0
        %vm631 = vcmp.gt.f32.partialorder %v489, 0.0
        %vm632 = vcmp.gt.f32.partialorder %v491, 0.0
        %vm633 = vcmp.gt.f32.partialorder %v495, 0.0
        %vm634 = vcmp.gt.f32.partialorder %v497, 0.0
        %vm635 = vcmp.gt.f32.partialorder %v501, 0.0
        %vm636 = vcmp.gt.f32.partialorder %v503, 0.0
        %vm637 = vcmp.gt.f32.partialorder %v507, 0.0
        %vm638 = vcmp.gt.f32.partialorder %v509, 0.0
        %vm639 = vcmp.gt.f32.partialorder %v513, 0.0
        %vm640 = vcmp.gt.f32.partialorder %v515, 0.0
        %vm641 = vcmp.gt.f32.partialorder %v519, 0.0
        %vm642 = vcmp.gt.f32.partialorder %v521, 0.0
        %vm643 = vcmp.gt.f32.partialorder %v525, 0.0
        %vm644 = vcmp.gt.f32.partialorder %v527, 0.0
        %vm645 = vcmp.gt.f32.partialorder %v531, 0.0
        %vm646 = vcmp.gt.f32.partialorder %v533, 0.0
        %vm647 = vcmp.gt.f32.partialorder %v537, 0.0
        %vm648 = vcmp.gt.f32.partialorder %v539, 0.0
        %vm649 = vcmp.gt.f32.partialorder %v543, 0.0
        %vm650 = vcmp.gt.f32.partialorder %v545, 0.0
        %vm651 = vcmp.gt.f32.partialorder %v549, 0.0
        %vm652 = vcmp.gt.f32.partialorder %v551, 0.0
        %vm653 = vcmp.gt.f32.partialorder %v555, 0.0
        %vm654 = vcmp.gt.f32.partialorder %v557, 0.0
        %vm655 = vcmp.gt.f32.partialorder %v561, 0.0
        %vm656 = vcmp.gt.f32.partialorder %v563, 0.0
        %vm657 = vcmp.gt.f32.partialorder %v567, 0.0
        %vm658 = vcmp.gt.f32.partialorder %v569, 0.0
        %vm659 = vcmp.gt.f32.partialorder %v573, 0.0
        %vm660 = vcmp.gt.f32.partialorder %v575, 0.0
        %vm661 = vcmp.gt.f32.partialorder %v579, 0.0
        %vm662 = vcmp.gt.f32.partialorder %v581, 0.0
        %vm663 = vcmp.gt.f32.partialorder %v585, 0.0
        %vm664 = vcmp.gt.f32.partialorder %v587, 0.0
        %vm665 = vcmp.gt.f32.partialorder %v591, 0.0
        %vm666 = vcmp.gt.f32.partialorder %v593, 0.0
        %vm667 = vcmp.gt.f32.partialorder %v597, 0.0
        %vm668 = vcmp.gt.f32.partialorder %v599, 0.0
        %vm669 = vcmp.gt.f32.partialorder %v603, 0.0
        %vm670 = vcmp.gt.f32.partialorder %v605, 0.0
        %v671 = vmin.f32 %v417, 0.0
        %v672 = vmin.f32 %v419, 0.0
        %v673 = vmin.f32 %v423, 0.0
        %v674 = vmin.f32 %v425, 0.0
        %v675 = vmin.f32 %v429, 0.0
        %v676 = vmin.f32 %v431, 0.0
        %v677 = vmin.f32 %v435, 0.0
        %v678 = vmin.f32 %v437, 0.0
        %v679 = vmin.f32 %v441, 0.0
        %v680 = vmin.f32 %v443, 0.0
        %v681 = vmin.f32 %v447, 0.0
        %v682 = vmin.f32 %v449, 0.0
        %v683 = vmin.f32 %v453, 0.0
        %v684 = vmin.f32 %v455, 0.0
        %v685 = vmin.f32 %v459, 0.0
        %v686 = vmin.f32 %v461, 0.0
        %v687 = vmin.f32 %v465, 0.0
        %v688 = vmin.f32 %v467, 0.0
        %v689 = vmin.f32 %v471, 0.0
        %v690 = vmin.f32 %v473, 0.0
        %v691 = vmin.f32 %v477, 0.0
        %v692 = vmin.f32 %v479, 0.0
        %v693 = vmin.f32 %v483, 0.0
        %v694 = vmin.f32 %v485, 0.0
        %v695 = vmin.f32 %v489, 0.0
        %v696 = vmin.f32 %v491, 0.0
        %v697 = vmin.f32 %v495, 0.0
        %v698 = vmin.f32 %v497, 0.0
        %v699 = vmin.f32 %v501, 0.0
        %v700 = vmin.f32 %v503, 0.0
        %v701 = vmin.f32 %v507, 0.0
        %v702 = vmin.f32 %v509, 0.0
        %v703 = vmin.f32 %v513, 0.0
        %v704 = vmin.f32 %v515, 0.0
        %v705 = vmin.f32 %v519, 0.0
        %v706 = vmin.f32 %v521, 0.0
        %v707 = vmin.f32 %v525, 0.0
        %v708 = vmin.f32 %v527, 0.0
        %v709 = vmin.f32 %v531, 0.0
        %v710 = vmin.f32 %v533, 0.0
        %v711 = vmin.f32 %v537, 0.0
        %v712 = vmin.f32 %v539, 0.0
        %v713 = vmin.f32 %v543, 0.0
        %v714 = vmin.f32 %v545, 0.0
        %v715 = vmin.f32 %v549, 0.0
        %v716 = vmin.f32 %v551, 0.0
        %v717 = vmin.f32 %v555, 0.0
        %v718 = vmin.f32 %v557, 0.0
        %v719 = vmin.f32 %v561, 0.0
        %v720 = vmin.f32 %v563, 0.0
        %v721 = vmin.f32 %v567, 0.0
        %v722 = vmin.f32 %v569, 0.0
        %v723 = vmin.f32 %v573, 0.0
        %v724 = vmin.f32 %v575, 0.0
        %v725 = vmin.f32 %v579, 0.0
        %v726 = vmin.f32 %v581, 0.0
        %v727 = vmin.f32 %v585, 0.0
        %v728 = vmin.f32 %v587, 0.0
        %v729 = vmin.f32 %v591, 0.0
        %v730 = vmin.f32 %v593, 0.0
        %v731 = vmin.f32 %v597, 0.0
        %v732 = vmin.f32 %v599, 0.0
        %v733 = vmin.f32 %v603, 0.0
        %v734 = vmin.f32 %v605, 0.0
        %v735 = vmul.f32 %v671, 1.442695
        %v736 = vpow.pop %v735
        %v737 = vmul.f32 %v672, 1.442695
        %v738 = vpow.pop %v737
        %v739 = vmul.f32 %v673, 1.442695
        %v740 = vpow.pop %v739
        %v741 = vmul.f32 %v674, 1.442695
        %v742 = vpow.pop %v741
        %v743 = vmul.f32 %v675, 1.442695
        %v744 = vpow.pop %v743
        %v745 = vmul.f32 %v676, 1.442695
        %v746 = vpow.pop %v745
        %v747 = vmul.f32 %v677, 1.442695
        %v748 = vpow.pop %v747
        %v749 = vmul.f32 %v678, 1.442695
        %v750 = vpow.pop %v749
        %v751 = vmul.f32 %v679, 1.442695
        %v752 = vpow.pop %v751
        %v753 = vmul.f32 %v680, 1.442695
        %v754 = vpow.pop %v753
        %v755 = vmul.f32 %v681, 1.442695
        %v756 = vpow.pop %v755
        %v757 = vmul.f32 %v682, 1.442695
        %v758 = vpow.pop %v757
        %v759 = vmul.f32 %v683, 1.442695
        %v760 = vpow.pop %v759
        %v761 = vmul.f32 %v684, 1.442695
        %v762 = vpow.pop %v761
        %v763 = vmul.f32 %v685, 1.442695
        %v764 = vpow.pop %v763
        %v765 = vmul.f32 %v686, 1.442695
        %v766 = vpow.pop %v765
        %v767 = vmul.f32 %v687, 1.442695
        %v768 = vpow.pop %v767
        %v769 = vmul.f32 %v688, 1.442695
        %v770 = vpow.pop %v769
        %v771 = vmul.f32 %v689, 1.442695
        %v772 = vpow.pop %v771
        %v773 = vmul.f32 %v690, 1.442695
        %v774 = vpow.pop %v773
        %v775 = vmul.f32 %v691, 1.442695
        %v776 = vpow.pop %v775
        %v777 = vmul.f32 %v692, 1.442695
        %v778 = vpow.pop %v777
        %v779 = vmul.f32 %v693, 1.442695
        %v780 = vpow.pop %v779
        %v781 = vmul.f32 %v694, 1.442695
        %v782 = vpow.pop %v781
        %v783 = vmul.f32 %v695, 1.442695
        %v784 = vpow.pop %v783
        %v785 = vmul.f32 %v696, 1.442695
        %v786 = vpow.pop %v785
        %v787 = vmul.f32 %v697, 1.442695
        %v788 = vpow.pop %v787
        %v789 = vmul.f32 %v698, 1.442695
        %v790 = vpow.pop %v789
        %v791 = vmul.f32 %v699, 1.442695
        %v792 = vpow.pop %v791
        %v793 = vmul.f32 %v700, 1.442695
        %v794 = vpow.pop %v793
        %v795 = vmul.f32 %v701, 1.442695
        %v796 = vpow.pop %v795
        %v797 = vmul.f32 %v702, 1.442695
        %v798 = vpow.pop %v797
        %v799 = vmul.f32 %v703, 1.442695
        %v800 = vpow.pop %v799
        %v801 = vmul.f32 %v704, 1.442695
        %v802 = vpow.pop %v801
        %v803 = vmul.f32 %v705, 1.442695
        %v804 = vpow.pop %v803
        %v805 = vmul.f32 %v706, 1.442695
        %v806 = vpow.pop %v805
        %v807 = vmul.f32 %v707, 1.442695
        %v808 = vpow.pop %v807
        %v809 = vmul.f32 %v708, 1.442695
        %v810 = vpow.pop %v809
        %v811 = vmul.f32 %v709, 1.442695
        %v812 = vpow.pop %v811
        %v813 = vmul.f32 %v710, 1.442695
        %v814 = vpow.pop %v813
        %v815 = vmul.f32 %v711, 1.442695
        %v816 = vpow.pop %v815
        %v817 = vmul.f32 %v712, 1.442695
        %v818 = vpow.pop %v817
        %v819 = vmul.f32 %v713, 1.442695
        %v820 = vpow.pop %v819
        %v821 = vmul.f32 %v714, 1.442695
        %v822 = vpow.pop %v821
        %v823 = vmul.f32 %v715, 1.442695
        %v824 = vpow.pop %v823
        %v825 = vmul.f32 %v716, 1.442695
        %v826 = vpow.pop %v825
        %v827 = vmul.f32 %v717, 1.442695
        %v828 = vpow.pop %v827
        %v829 = vmul.f32 %v718, 1.442695
        %v830 = vpow.pop %v829
        %v831 = vmul.f32 %v719, 1.442695
        %v832 = vpow.pop %v831
        %v833 = vmul.f32 %v720, 1.442695
        %v834 = vpow.pop %v833
        %v835 = vmul.f32 %v721, 1.442695
        %v836 = vpow.pop %v835
        %v837 = vmul.f32 %v722, 1.442695
        %v838 = vpow.pop %v837
        %v839 = vmul.f32 %v723, 1.442695
        %v840 = vpow.pop %v839
        %v841 = vmul.f32 %v724, 1.442695
        %v842 = vpow.pop %v841
        %v843 = vmul.f32 %v725, 1.442695
        %v844 = vpow.pop %v843
        %v845 = vmul.f32 %v726, 1.442695
        %v846 = vpow.pop %v845
        %v847 = vmul.f32 %v727, 1.442695
        %v848 = vpow.pop %v847
        %v849 = vmul.f32 %v728, 1.442695
        %v850 = vpow.pop %v849
        %v851 = vmul.f32 %v729, 1.442695
        %v852 = vpow.pop %v851
        %v853 = vmul.f32 %v730, 1.442695
        %v854 = vpow.pop %v853
        %v855 = vmul.f32 %v731, 1.442695
        %v856 = vpow.pop %v855
        %v857 = vmul.f32 %v732, 1.442695
        %v858 = vpow.pop %v857
        %v859 = vmul.f32 %v733, 1.442695
        %v860 = vpow.pop %v859
        %v861 = vmul.f32 %v734, 1.442695
        %v862 = vpow.pop %v861
        %v863 = vsub.f32 %v736, 1.0
        %v864 = vsub.f32 %v738, 1.0
        %v865 = vsub.f32 %v740, 1.0
        %v866 = vsub.f32 %v742, 1.0
        %v867 = vsub.f32 %v744, 1.0
        %v868 = vsub.f32 %v746, 1.0
        %v869 = vsub.f32 %v748, 1.0
        %v870 = vsub.f32 %v750, 1.0
        %v871 = vsub.f32 %v752, 1.0
        %v872 = vsub.f32 %v754, 1.0
        %v873 = vsub.f32 %v756, 1.0
        %v874 = vsub.f32 %v758, 1.0
        %v875 = vsub.f32 %v760, 1.0
        %v876 = vsub.f32 %v762, 1.0
        %v877 = vsub.f32 %v764, 1.0
        %v878 = vsub.f32 %v766, 1.0
        %v879 = vsub.f32 %v768, 1.0
        %v880 = vsub.f32 %v770, 1.0
        %v881 = vsub.f32 %v772, 1.0
        %v882 = vsub.f32 %v774, 1.0
        %v883 = vsub.f32 %v776, 1.0
        %v884 = vsub.f32 %v778, 1.0
        %v885 = vsub.f32 %v780, 1.0
        %v886 = vsub.f32 %v782, 1.0
        %v887 = vsub.f32 %v784, 1.0
        %v888 = vsub.f32 %v786, 1.0
        %v889 = vsub.f32 %v788, 1.0
        %v890 = vsub.f32 %v790, 1.0
        %v891 = vsub.f32 %v792, 1.0
        %v892 = vsub.f32 %v794, 1.0
        %v893 = vsub.f32 %v796, 1.0
        %v894 = vsub.f32 %v798, 1.0
        %v895 = vsub.f32 %v800, 1.0
        %v896 = vsub.f32 %v802, 1.0
        %v897 = vsub.f32 %v804, 1.0
        %v898 = vsub.f32 %v806, 1.0
        %v899 = vsub.f32 %v808, 1.0
        %v900 = vsub.f32 %v810, 1.0
        %v901 = vsub.f32 %v812, 1.0
        %v902 = vsub.f32 %v814, 1.0
        %v903 = vsub.f32 %v816, 1.0
        %v904 = vsub.f32 %v818, 1.0
        %v905 = vsub.f32 %v820, 1.0
        %v906 = vsub.f32 %v822, 1.0
        %v907 = vsub.f32 %v824, 1.0
        %v908 = vsub.f32 %v826, 1.0
        %v909 = vsub.f32 %v828, 1.0
        %v910 = vsub.f32 %v830, 1.0
        %v911 = vsub.f32 %v832, 1.0
        %v912 = vsub.f32 %v834, 1.0
        %v913 = vsub.f32 %v836, 1.0
        %v914 = vsub.f32 %v838, 1.0
        %v915 = vsub.f32 %v840, 1.0
        %v916 = vsub.f32 %v842, 1.0
        %v917 = vsub.f32 %v844, 1.0
        %v918 = vsub.f32 %v846, 1.0
        %v919 = vsub.f32 %v848, 1.0
        %v920 = vsub.f32 %v850, 1.0
        %v921 = vsub.f32 %v852, 1.0
        %v922 = vsub.f32 %v854, 1.0
        %v923 = vsub.f32 %v856, 1.0
        %v924 = vsub.f32 %v858, 1.0
        %v925 = vsub.f32 %v860, 1.0
        %v926 = vsub.f32 %v862, 1.0
        %v927 = vsel %vm607, %v417, %v863
        %v928 = vsel %vm608, %v419, %v864
        %v929 = vsel %vm609, %v423, %v865
        %v930 = vsel %vm610, %v425, %v866
        %v931 = vsel %vm611, %v429, %v867
        %v932 = vsel %vm612, %v431, %v868
        %v933 = vsel %vm613, %v435, %v869
        %v934 = vsel %vm614, %v437, %v870
        %v935 = vsel %vm615, %v441, %v871
        %v936 = vsel %vm616, %v443, %v872
        %v937 = vsel %vm617, %v447, %v873
        %v938 = vsel %vm618, %v449, %v874
        %v939 = vsel %vm619, %v453, %v875
        %v940 = vsel %vm620, %v455, %v876
        %v941 = vsel %vm621, %v459, %v877
        %v942 = vsel %vm622, %v461, %v878
        %v943 = vsel %vm623, %v465, %v879
        %v944 = vsel %vm624, %v467, %v880
        %v945 = vsel %vm625, %v471, %v881
        %v946 = vsel %vm626, %v473, %v882
        %v947 = vsel %vm627, %v477, %v883
        %v948 = vsel %vm628, %v479, %v884
        %v949 = vsel %vm629, %v483, %v885
        %v950 = vsel %vm630, %v485, %v886
        %v951 = vsel %vm631, %v489, %v887
        %v952 = vsel %vm632, %v491, %v888
        %v953 = vsel %vm633, %v495, %v889
        %v954 = vsel %vm634, %v497, %v890
        %v955 = vsel %vm635, %v501, %v891
        %v956 = vsel %vm636, %v503, %v892
        %v957 = vsel %vm637, %v507, %v893
        %v958 = vsel %vm638, %v509, %v894
        %v959 = vsel %vm639, %v513, %v895
        %v960 = vsel %vm640, %v515, %v896
        %v961 = vsel %vm641, %v519, %v897
        %v962 = vsel %vm642, %v521, %v898
        %v963 = vsel %vm643, %v525, %v899
        %v964 = vsel %vm644, %v527, %v900
        %v965 = vsel %vm645, %v531, %v901
        %v966 = vsel %vm646, %v533, %v902
        %v967 = vsel %vm647, %v537, %v903
        %v968 = vsel %vm648, %v539, %v904
        %v969 = vsel %vm649, %v543, %v905
        %v970 = vsel %vm650, %v545, %v906
        %v971 = vsel %vm651, %v549, %v907
        %v972 = vsel %vm652, %v551, %v908
        %v973 = vsel %vm653, %v555, %v909
        %v974 = vsel %vm654, %v557, %v910
        %v975 = vsel %vm655, %v561, %v911
        %v976 = vsel %vm656, %v563, %v912
        %v977 = vsel %vm657, %v567, %v913
        %v978 = vsel %vm658, %v569, %v914
        %v979 = vsel %vm659, %v573, %v915
        %v980 = vsel %vm660, %v575, %v916
        %v981 = vsel %vm661, %v579, %v917
        %v982 = vsel %vm662, %v581, %v918
        %v983 = vsel %vm663, %v585, %v919
        %v984 = vsel %vm664, %v587, %v920
        %v985 = vsel %vm665, %v591, %v921
        %v986 = vsel %vm666, %v593, %v922
        %v987 = vsel %vm667, %v597, %v923
        %v988 = vsel %vm668, %v599, %v924
        %v989 = vsel %vm669, %v603, %v925
        %v990 = vsel %vm670, %v605, %v926
        %v991 = vld [vmem:[#allocation7] sm:$0xff]
        %v992 = vld [vmem:[#allocation7 + $0x8] sm:$0xff]
        %v993 = vld [vmem:[#allocation7 + $0x10] sm:$0xff]
        %v994 = vld [vmem:[#allocation7 + $0x18] sm:$0xff]
        %v995 = vld [vmem:[#allocation7 + $0x20] sm:$0xff]
        %v996 = vld [vmem:[#allocation7 + $0x28] sm:$0xff]
        %v997 = vld [vmem:[#allocation7 + $0x30] sm:$0xff]
        %v998 = vld [vmem:[#allocation7 + $0x38] sm:$0xff]
        %v999 = vld [vmem:[#allocation7 + $0x40] sm:$0xff]
        %v1000 = vld [vmem:[#allocation7 + $0x48] sm:$0xff]
        %v1001 = vld [vmem:[#allocation7 + $0x50] sm:$0xff]
        %v1002 = vld [vmem:[#allocation7 + $0x58] sm:$0xff]
        %v1003 = vld [vmem:[#allocation7 + $0x60] sm:$0xff]
        %v1004 = vld [vmem:[#allocation7 + $0x68] sm:$0xff]
        %v1005 = vld [vmem:[#allocation7 + $0x70] sm:$0xff]
        %v1006 = vld [vmem:[#allocation7 + $0x78] sm:$0xff]
        %v1007 = vld [vmem:[#allocation7 + $0x80] sm:$0xff]
        %v1008 = vld [vmem:[#allocation7 + $0x88] sm:$0xff]
        %v1009 = vld [vmem:[#allocation7 + $0x90] sm:$0xff]
        %v1010 = vld [vmem:[#allocation7 + $0x98] sm:$0xff]
        %v1011 = vld [vmem:[#allocation7 + $0xa0] sm:$0xff]
        %v1012 = vld [vmem:[#allocation7 + $0xa8] sm:$0xff]
        %v1013 = vld [vmem:[#allocation7 + $0xb0] sm:$0xff]
        %v1014 = vld [vmem:[#allocation7 + $0xb8] sm:$0xff]
        %v1015 = vld [vmem:[#allocation7 + $0xc0] sm:$0xff]
        %v1016 = vld [vmem:[#allocation7 + $0xc8] sm:$0xff]
        %v1017 = vld [vmem:[#allocation7 + $0xd0] sm:$0xff]
        %v1018 = vld [vmem:[#allocation7 + $0xd8] sm:$0xff]
        %v1019 = vld [vmem:[#allocation7 + $0xe0] sm:$0xff]
        %v1020 = vld [vmem:[#allocation7 + $0xe8] sm:$0xff]
        %v1021 = vld [vmem:[#allocation7 + $0xf0] sm:$0xff]
        %v1022 = vld [vmem:[#allocation7 + $0xf8] sm:$0xff]
        %v1023 = vld [vmem:[%s4] sm:$0x1]
        %v1025 = vlaneseq
        %v1026 = vshrl.u32 %v1025, 7
        %v1027 = vsub.s32 0, %v1026
        %v1028 = vrot.slane %v1023, %v1027
        %1030 = vmatprep.subr.mxu0 %v992
        %1031 = vmatpush1.xpose.msra.mxu0 %v991
        %1032 = vmatprep.subr.mxu0 %v994
        %1033 = vmatpush1.xpose.msra.mxu0 %v993
        %1034 = vmatprep.subr.mxu0 %v996
        %1035 = vmatpush1.xpose.msra.mxu0 %v995
        %1036 = vmatprep.subr.mxu0 %v998
        %1037 = vmatpush1.xpose.msra.mxu0 %v997
        %1038 = vmatprep.subr.mxu0 %v1000
        %1039 = vmatpush1.xpose.msra.mxu0 %v999
        %1040 = vmatprep.subr.mxu0 %v1002
        %1041 = vmatpush1.xpose.msra.mxu0 %v1001
        %1042 = vmatprep.subr.mxu0 %v1004
        %1043 = vmatpush1.xpose.msra.mxu0 %v1003
        %1044 = vmatprep.subr.mxu0 %v1006
        %1045 = vmatpush1.xpose.msra.mxu0 %v1005
        %1046 = vmatprep.subr.mxu0 %v1008
        %1047 = vmatpush1.xpose.msra.mxu0 %v1007
        %1048 = vmatprep.subr.mxu0 %v1010
        %1049 = vmatpush1.xpose.msra.mxu0 %v1009
        %1050 = vmatprep.subr.mxu0 %v1012
        %1051 = vmatpush1.xpose.msra.mxu0 %v1011
        %1052 = vmatprep.subr.mxu0 %v1014
        %1053 = vmatpush1.xpose.msra.mxu0 %v1013
        %1054 = vmatprep.subr.mxu0 %v1016
        %1055 = vmatpush1.xpose.msra.mxu0 %v1015
        %1056 = vmatprep.subr.mxu0 %v1018
        %1057 = vmatpush1.xpose.msra.mxu0 %v1017
        %1058 = vmatprep.subr.mxu0 %v1020
        %1059 = vmatpush1.xpose.msra.mxu0 %v1019
        %1060 = vmatprep.subr.mxu0 %v1022
        %1061 = vmatpush1.xpose.msra.mxu0 %v1021
        %1062 = vmatprep.subr.mxu0 0.0
        %1063 = vmatpush1.xpose.msra.mxu0 0.0
        %1064 = vmatprep.subr.mxu0 0.0
        %1065 = vmatpush1.xpose.msra.mxu0 0.0
        %1066 = vmatprep.subr.mxu0 0.0
        %1067 = vmatpush1.xpose.msra.mxu0 0.0
        %1068 = vmatprep.subr.mxu0 0.0
        %1069 = vmatpush1.xpose.msra.mxu0 0.0
        %1070 = vmatprep.subr.mxu0 0.0
        %1071 = vmatpush1.xpose.msra.mxu0 0.0
        %1072 = vmatprep.subr.mxu0 0.0
        %1073 = vmatpush1.xpose.msra.mxu0 0.0
        %1074 = vmatprep.subr.mxu0 0.0
        %1075 = vmatpush1.xpose.msra.mxu0 0.0
        %1076 = vmatprep.subr.mxu0 0.0
        %1077 = vmatpush1.xpose.msra.mxu0 0.0
        %1078 = vmatprep.subr.mxu0 0.0
        %1079 = vmatpush1.xpose.msra.mxu0 0.0
        %1080 = vmatprep.subr.mxu0 0.0
        %1081 = vmatpush1.xpose.msra.mxu0 0.0
        %1082 = vmatprep.subr.mxu0 0.0
        %1083 = vmatpush1.xpose.msra.mxu0 0.0
        %1084 = vmatprep.subr.mxu0 0.0
        %1085 = vmatpush1.xpose.msra.mxu0 0.0
        %1086 = vmatprep.subr.mxu0 0.0
        %1087 = vmatpush1.xpose.msra.mxu0 0.0
        %1088 = vmatprep.subr.mxu0 0.0
        %1089 = vmatpush1.xpose.msra.mxu0 0.0
        %1090 = vmatprep.subr.mxu0 0.0
        %1091 = vmatpush1.xpose.msra.mxu0 0.0
        %1092 = vmatprep.subr.mxu0 0.0
        %1093 = vmatpush1.xpose.msra.mxu0 0.0
        %1094 = vmatprep.mubr.f32.mxu0 %v928
        %1095 = vmatmul.mubr.f32.gmra.mrb[0].mxu0 %v927
        %v1096 = vpop.f32.mrb[0].mxu0
        %v1097 = vadd.f32 %v1028, %v1096
        %v1098 = vpop.f32.mrb[0].mxu0
        %1099 = vmatprep.mubr.f32.mxu0 %v930
        %1100 = vmatmul.mubr.f32.gmra.mrb[0].mxu0 %v929
        %v1101 = vpop.f32.mrb[0].mxu0
        %v1102 = vadd.f32 %v1028, %v1101
        %v1103 = vpop.f32.mrb[0].mxu0
        %1104 = vmatprep.mubr.f32.mxu0 %v932
        %1105 = vmatmul.mubr.f32.gmra.mrb[0].mxu0 %v931
        %v1106 = vpop.f32.mrb[0].mxu0
        %v1107 = vadd.f32 %v1028, %v1106
        %v1108 = vpop.f32.mrb[0].mxu0
        %1109 = vmatprep.mubr.f32.mxu0 %v934
        %1110 = vmatmul.mubr.f32.gmra.mrb[0].mxu0 %v933
        %v1111 = vpop.f32.mrb[0].mxu0
        %v1112 = vadd.f32 %v1028, %v1111
        %v1113 = vpop.f32.mrb[0].mxu0
        %1114 = vmatprep.mubr.f32.mxu0 %v936
        %1115 = vmatmul.mubr.f32.gmra.mrb[0].mxu0 %v935
        %v1116 = vpop.f32.mrb[0].mxu0
        %v1117 = vadd.f32 %v1028, %v1116
        %v1118 = vpop.f32.mrb[0].mxu0
        %1119 = vmatprep.mubr.f32.mxu0 %v938
        %1120 = vmatmul.mubr.f32.gmra.mrb[0].mxu0 %v937
        %v1121 = vpop.f32.mrb[0].mxu0
        %v1122 = vadd.f32 %v1028, %v1121
        %v1123 = vpop.f32.mrb[0].mxu0
        %1124 = vmatprep.mubr.f32.mxu0 %v940
        %1125 = vmatmul.mubr.f32.gmra.mrb[0].mxu0 %v939
        %v1126 = vpop.f32.mrb[0].mxu0
        %v1127 = vadd.f32 %v1028, %v1126
        %v1128 = vpop.f32.mrb[0].mxu0
        %1129 = vmatprep.mubr.f32.mxu0 %v942
        %1130 = vmatmul.mubr.f32.gmra.mrb[0].mxu0 %v941
        %v1131 = vpop.f32.mrb[0].mxu0
        %v1132 = vadd.f32 %v1028, %v1131
        %v1133 = vpop.f32.mrb[0].mxu0
        %1134 = vmatprep.mubr.f32.mxu0 %v944
        %1135 = vmatmul.mubr.f32.gmra.mrb[0].mxu0 %v943
        %v1136 = vpop.f32.mrb[0].mxu0
        %v1137 = vadd.f32 %v1028, %v1136
        %v1138 = vpop.f32.mrb[0].mxu0
        %1139 = vmatprep.mubr.f32.mxu0 %v946
        %1140 = vmatmul.mubr.f32.gmra.mrb[0].mxu0 %v945
        %v1141 = vpop.f32.mrb[0].mxu0
        %v1142 = vadd.f32 %v1028, %v1141
        %v1143 = vpop.f32.mrb[0].mxu0
        %1144 = vmatprep.mubr.f32.mxu0 %v948
        %1145 = vmatmul.mubr.f32.gmra.mrb[0].mxu0 %v947
        %v1146 = vpop.f32.mrb[0].mxu0
        %v1147 = vadd.f32 %v1028, %v1146
        %v1148 = vpop.f32.mrb[0].mxu0
        %1149 = vmatprep.mubr.f32.mxu0 %v950
        %1150 = vmatmul.mubr.f32.gmra.mrb[0].mxu0 %v949
        %v1151 = vpop.f32.mrb[0].mxu0
        %v1152 = vadd.f32 %v1028, %v1151
        %v1153 = vpop.f32.mrb[0].mxu0
        %1154 = vmatprep.mubr.f32.mxu0 %v952
        %1155 = vmatmul.mubr.f32.gmra.mrb[0].mxu0 %v951
        %v1156 = vpop.f32.mrb[0].mxu0
        %v1157 = vadd.f32 %v1028, %v1156
        %v1158 = vpop.f32.mrb[0].mxu0
        %1159 = vmatprep.mubr.f32.mxu0 %v954
        %1160 = vmatmul.mubr.f32.gmra.mrb[0].mxu0 %v953
        %v1161 = vpop.f32.mrb[0].mxu0
        %v1162 = vadd.f32 %v1028, %v1161
        %v1163 = vpop.f32.mrb[0].mxu0
        %1164 = vmatprep.mubr.f32.mxu0 %v956
        %1165 = vmatmul.mubr.f32.gmra.mrb[0].mxu0 %v955
        %v1166 = vpop.f32.mrb[0].mxu0
        %v1167 = vadd.f32 %v1028, %v1166
        %v1168 = vpop.f32.mrb[0].mxu0
        %1169 = vmatprep.mubr.f32.mxu0 %v958
        %1170 = vmatmul.mubr.f32.gmra.mrb[0].mxu0 %v957
        %v1171 = vpop.f32.mrb[0].mxu0
        %v1172 = vadd.f32 %v1028, %v1171
        %v1173 = vpop.f32.mrb[0].mxu0
        %1174 = vmatprep.mubr.f32.mxu0 %v960
        %1175 = vmatmul.mubr.f32.gmra.mrb[0].mxu0 %v959
        %v1176 = vpop.f32.mrb[0].mxu0
        %v1177 = vadd.f32 %v1028, %v1176
        %v1178 = vpop.f32.mrb[0].mxu0
        %1179 = vmatprep.mubr.f32.mxu0 %v962
        %1180 = vmatmul.mubr.f32.gmra.mrb[0].mxu0 %v961
        %v1181 = vpop.f32.mrb[0].mxu0
        %v1182 = vadd.f32 %v1028, %v1181
        %v1183 = vpop.f32.mrb[0].mxu0
        %1184 = vmatprep.mubr.f32.mxu0 %v964
        %1185 = vmatmul.mubr.f32.gmra.mrb[0].mxu0 %v963
        %v1186 = vpop.f32.mrb[0].mxu0
        %v1187 = vadd.f32 %v1028, %v1186
        %v1188 = vpop.f32.mrb[0].mxu0
        %1189 = vmatprep.mubr.f32.mxu0 %v966
        %1190 = vmatmul.mubr.f32.gmra.mrb[0].mxu0 %v965
        %v1191 = vpop.f32.mrb[0].mxu0
        %v1192 = vadd.f32 %v1028, %v1191
        %v1193 = vpop.f32.mrb[0].mxu0
        %1194 = vmatprep.mubr.f32.mxu0 %v968
        %1195 = vmatmul.mubr.f32.gmra.mrb[0].mxu0 %v967
        %v1196 = vpop.f32.mrb[0].mxu0
        %v1197 = vadd.f32 %v1028, %v1196
        %v1198 = vpop.f32.mrb[0].mxu0
        %1199 = vmatprep.mubr.f32.mxu0 %v970
        %1200 = vmatmul.mubr.f32.gmra.mrb[0].mxu0 %v969
        %v1201 = vpop.f32.mrb[0].mxu0
        %v1202 = vadd.f32 %v1028, %v1201
        %v1203 = vpop.f32.mrb[0].mxu0
        %1204 = vmatprep.mubr.f32.mxu0 %v972
        %1205 = vmatmul.mubr.f32.gmra.mrb[0].mxu0 %v971
        %v1206 = vpop.f32.mrb[0].mxu0
        %v1207 = vadd.f32 %v1028, %v1206
        %v1208 = vpop.f32.mrb[0].mxu0
        %1209 = vmatprep.mubr.f32.mxu0 %v974
        %1210 = vmatmul.mubr.f32.gmra.mrb[0].mxu0 %v973
        %v1211 = vpop.f32.mrb[0].mxu0
        %v1212 = vadd.f32 %v1028, %v1211
        %v1213 = vpop.f32.mrb[0].mxu0
        %1214 = vmatprep.mubr.f32.mxu0 %v976
        %1215 = vmatmul.mubr.f32.gmra.mrb[0].mxu0 %v975
        %v1216 = vpop.f32.mrb[0].mxu0
        %v1217 = vadd.f32 %v1028, %v1216
        %v1218 = vpop.f32.mrb[0].mxu0
        %1219 = vmatprep.mubr.f32.mxu0 %v978
        %1220 = vmatmul.mubr.f32.gmra.mrb[0].mxu0 %v977
        %v1221 = vpop.f32.mrb[0].mxu0
        %v1222 = vadd.f32 %v1028, %v1221
        %v1223 = vpop.f32.mrb[0].mxu0
        %1224 = vmatprep.mubr.f32.mxu0 %v980
        %1225 = vmatmul.mubr.f32.gmra.mrb[0].mxu0 %v979
        %v1226 = vpop.f32.mrb[0].mxu0
        %v1227 = vadd.f32 %v1028, %v1226
        %v1228 = vpop.f32.mrb[0].mxu0
        %1229 = vmatprep.mubr.f32.mxu0 %v982
        %1230 = vmatmul.mubr.f32.gmra.mrb[0].mxu0 %v981
        %v1231 = vpop.f32.mrb[0].mxu0
        %v1232 = vadd.f32 %v1028, %v1231
        %v1233 = vpop.f32.mrb[0].mxu0
        %1234 = vmatprep.mubr.f32.mxu0 %v984
        %1235 = vmatmul.mubr.f32.gmra.mrb[0].mxu0 %v983
        %v1236 = vpop.f32.mrb[0].mxu0
        %v1237 = vadd.f32 %v1028, %v1236
        %v1238 = vpop.f32.mrb[0].mxu0
        %1239 = vmatprep.mubr.f32.mxu0 %v986
        %1240 = vmatmul.mubr.f32.gmra.mrb[0].mxu0 %v985
        %v1241 = vpop.f32.mrb[0].mxu0
        %v1242 = vadd.f32 %v1028, %v1241
        %v1243 = vpop.f32.mrb[0].mxu0
        %1244 = vmatprep.mubr.f32.mxu0 %v988
        %1245 = vmatmul.mubr.f32.gmra.mrb[0].mxu0 %v987
        %v1246 = vpop.f32.mrb[0].mxu0
        %v1247 = vadd.f32 %v1028, %v1246
        %v1248 = vpop.f32.mrb[0].mxu0
        %1249 = vmatprep.mubr.f32.mxu0 %v990
        %1250 = vmatmul.mubr.f32.gmra.mrb[0].mxu0 %v989
        %v1251 = vpop.f32.mrb[0].mxu0
        %v1252 = vadd.f32 %v1028, %v1251
        %v1253 = vpop.f32.mrb[0].mxu0
        %1254 = vdwg.mxu0
        %v1255 = vmul.f32 %v1097, %v274
        %v1256 = vmul.f32 %v1102, %v275
        %v1257 = vmul.f32 %v1107, %v276
        %v1258 = vmul.f32 %v1112, %v277
        %v1259 = vmul.f32 %v1117, %v278
        %v1260 = vmul.f32 %v1122, %v279
        %v1261 = vmul.f32 %v1127, %v280
        %v1262 = vmul.f32 %v1132, %v281
        %v1263 = vmul.f32 %v1137, %v282
        %v1264 = vmul.f32 %v1142, %v283
        %v1265 = vmul.f32 %v1147, %v284
        %v1266 = vmul.f32 %v1152, %v285
        %v1267 = vmul.f32 %v1157, %v286
        %v1268 = vmul.f32 %v1162, %v287
        %v1269 = vmul.f32 %v1167, %v288
        %v1270 = vmul.f32 %v1172, %v289
        %v1271 = vmul.f32 %v1177, %v290
        %v1272 = vmul.f32 %v1182, %v291
        %v1273 = vmul.f32 %v1187, %v292
        %v1274 = vmul.f32 %v1192, %v293
        %v1275 = vmul.f32 %v1197, %v294
        %v1276 = vmul.f32 %v1202, %v295
        %v1277 = vmul.f32 %v1207, %v296
        %v1278 = vmul.f32 %v1212, %v297
        %v1279 = vmul.f32 %v1217, %v298
        %v1280 = vmul.f32 %v1222, %v299
        %v1281 = vmul.f32 %v1227, %v300
        %v1282 = vmul.f32 %v1232, %v301
        %v1283 = vmul.f32 %v1237, %v302
        %v1284 = vmul.f32 %v1242, %v303
        %v1285 = vmul.f32 %v1247, %v304
        %v1286 = vmul.f32 %v1252, %v305
        %1287 = vadd.xlane.f32.xlu0 %v1255
        %v1288 = vpop.xlane.xlu0 %1287
        %1289 = vadd.xlane.f32.xlu0 %v1256
        %v1290 = vpop.xlane.xlu0 %1289
        %1291 = vadd.xlane.f32.xlu0 %v1257
        %v1292 = vpop.xlane.xlu0 %1291
        %1293 = vadd.xlane.f32.xlu0 %v1258
        %v1294 = vpop.xlane.xlu0 %1293
        %1295 = vadd.xlane.f32.xlu0 %v1259
        %v1296 = vpop.xlane.xlu0 %1295
        %1297 = vadd.xlane.f32.xlu0 %v1260
        %v1298 = vpop.xlane.xlu0 %1297
        %1299 = vadd.xlane.f32.xlu0 %v1261
        %v1300 = vpop.xlane.xlu0 %1299
        %1301 = vadd.xlane.f32.xlu0 %v1262
        %v1302 = vpop.xlane.xlu0 %1301
        %1303 = vadd.xlane.f32.xlu0 %v1263
        %v1304 = vpop.xlane.xlu0 %1303
        %1305 = vadd.xlane.f32.xlu0 %v1264
        %v1306 = vpop.xlane.xlu0 %1305
        %1307 = vadd.xlane.f32.xlu0 %v1265
        %v1308 = vpop.xlane.xlu0 %1307
        %1309 = vadd.xlane.f32.xlu0 %v1266
        %v1310 = vpop.xlane.xlu0 %1309
        %1311 = vadd.xlane.f32.xlu0 %v1267
        %v1312 = vpop.xlane.xlu0 %1311
        %1313 = vadd.xlane.f32.xlu0 %v1268
        %v1314 = vpop.xlane.xlu0 %1313
        %1315 = vadd.xlane.f32.xlu0 %v1269
        %v1316 = vpop.xlane.xlu0 %1315
        %1317 = vadd.xlane.f32.xlu0 %v1270
        %v1318 = vpop.xlane.xlu0 %1317
        %1319 = vadd.xlane.f32.xlu0 %v1271
        %v1320 = vpop.xlane.xlu0 %1319
        %1321 = vadd.xlane.f32.xlu0 %v1272
        %v1322 = vpop.xlane.xlu0 %1321
        %1323 = vadd.xlane.f32.xlu0 %v1273
        %v1324 = vpop.xlane.xlu0 %1323
        %1325 = vadd.xlane.f32.xlu0 %v1274
        %v1326 = vpop.xlane.xlu0 %1325
        %1327 = vadd.xlane.f32.xlu0 %v1275
        %v1328 = vpop.xlane.xlu0 %1327
        %1329 = vadd.xlane.f32.xlu0 %v1276
        %v1330 = vpop.xlane.xlu0 %1329
        %1331 = vadd.xlane.f32.xlu0 %v1277
        %v1332 = vpop.xlane.xlu0 %1331
        %1333 = vadd.xlane.f32.xlu0 %v1278
        %v1334 = vpop.xlane.xlu0 %1333
        %1335 = vadd.xlane.f32.xlu0 %v1279
        %v1336 = vpop.xlane.xlu0 %1335
        %1337 = vadd.xlane.f32.xlu0 %v1280
        %v1338 = vpop.xlane.xlu0 %1337
        %1339 = vadd.xlane.f32.xlu0 %v1281
        %v1340 = vpop.xlane.xlu0 %1339
        %1341 = vadd.xlane.f32.xlu0 %v1282
        %v1342 = vpop.xlane.xlu0 %1341
        %1343 = vadd.xlane.f32.xlu0 %v1283
        %v1344 = vpop.xlane.xlu0 %1343
        %1345 = vadd.xlane.f32.xlu0 %v1284
        %v1346 = vpop.xlane.xlu0 %1345
        %1347 = vadd.xlane.f32.xlu0 %v1285
        %v1348 = vpop.xlane.xlu0 %1347
        %1349 = vadd.xlane.f32.xlu0 %v1286
        %v1350 = vpop.xlane.xlu0 %1349
        %v1351 = vmul.f32 %v274, %v274
        %v1352 = vmul.f32 %v275, %v275
        %v1353 = vmul.f32 %v276, %v276
        %v1354 = vmul.f32 %v277, %v277
        %v1355 = vmul.f32 %v278, %v278
        %v1356 = vmul.f32 %v279, %v279
        %v1357 = vmul.f32 %v280, %v280
        %v1358 = vmul.f32 %v281, %v281
        %v1359 = vmul.f32 %v282, %v282
        %v1360 = vmul.f32 %v283, %v283
        %v1361 = vmul.f32 %v284, %v284
        %v1362 = vmul.f32 %v285, %v285
        %v1363 = vmul.f32 %v286, %v286
        %v1364 = vmul.f32 %v287, %v287
        %v1365 = vmul.f32 %v288, %v288
        %v1366 = vmul.f32 %v289, %v289
        %v1367 = vmul.f32 %v290, %v290
        %v1368 = vmul.f32 %v291, %v291
        %v1369 = vmul.f32 %v292, %v292
        %v1370 = vmul.f32 %v293, %v293
        %v1371 = vmul.f32 %v294, %v294
        %v1372 = vmul.f32 %v295, %v295
        %v1373 = vmul.f32 %v296, %v296
        %v1374 = vmul.f32 %v297, %v297
        %v1375 = vmul.f32 %v298, %v298
        %v1376 = vmul.f32 %v299, %v299
        %v1377 = vmul.f32 %v300, %v300
        %v1378 = vmul.f32 %v301, %v301
        %v1379 = vmul.f32 %v302, %v302
        %v1380 = vmul.f32 %v303, %v303
        %v1381 = vmul.f32 %v304, %v304
        %v1382 = vmul.f32 %v305, %v305
        %1383 = vadd.xlane.f32.xlu0 %v1351
        %v1384 = vpop.xlane.xlu0 %1383
        %1385 = vadd.xlane.f32.xlu0 %v1352
        %v1386 = vpop.xlane.xlu0 %1385
        %1387 = vadd.xlane.f32.xlu0 %v1353
        %v1388 = vpop.xlane.xlu0 %1387
        %1389 = vadd.xlane.f32.xlu0 %v1354
        %v1390 = vpop.xlane.xlu0 %1389
        %1391 = vadd.xlane.f32.xlu0 %v1355
        %v1392 = vpop.xlane.xlu0 %1391
        %1393 = vadd.xlane.f32.xlu0 %v1356
        %v1394 = vpop.xlane.xlu0 %1393
        %1395 = vadd.xlane.f32.xlu0 %v1357
        %v1396 = vpop.xlane.xlu0 %1395
        %1397 = vadd.xlane.f32.xlu0 %v1358
        %v1398 = vpop.xlane.xlu0 %1397
        %1399 = vadd.xlane.f32.xlu0 %v1359
        %v1400 = vpop.xlane.xlu0 %1399
        %1401 = vadd.xlane.f32.xlu0 %v1360
        %v1402 = vpop.xlane.xlu0 %1401
        %1403 = vadd.xlane.f32.xlu0 %v1361
        %v1404 = vpop.xlane.xlu0 %1403
        %1405 = vadd.xlane.f32.xlu0 %v1362
        %v1406 = vpop.xlane.xlu0 %1405
        %1407 = vadd.xlane.f32.xlu0 %v1363
        %v1408 = vpop.xlane.xlu0 %1407
        %1409 = vadd.xlane.f32.xlu0 %v1364
        %v1410 = vpop.xlane.xlu0 %1409
        %1411 = vadd.xlane.f32.xlu0 %v1365
        %v1412 = vpop.xlane.xlu0 %1411
        %1413 = vadd.xlane.f32.xlu0 %v1366
        %v1414 = vpop.xlane.xlu0 %1413
        %1415 = vadd.xlane.f32.xlu0 %v1367
        %v1416 = vpop.xlane.xlu0 %1415
        %1417 = vadd.xlane.f32.xlu0 %v1368
        %v1418 = vpop.xlane.xlu0 %1417
        %1419 = vadd.xlane.f32.xlu0 %v1369
        %v1420 = vpop.xlane.xlu0 %1419
        %1421 = vadd.xlane.f32.xlu0 %v1370
        %v1422 = vpop.xlane.xlu0 %1421
        %1423 = vadd.xlane.f32.xlu0 %v1371
        %v1424 = vpop.xlane.xlu0 %1423
        %1425 = vadd.xlane.f32.xlu0 %v1372
        %v1426 = vpop.xlane.xlu0 %1425
        %1427 = vadd.xlane.f32.xlu0 %v1373
        %v1428 = vpop.xlane.xlu0 %1427
        %1429 = vadd.xlane.f32.xlu0 %v1374
        %v1430 = vpop.xlane.xlu0 %1429
        %1431 = vadd.xlane.f32.xlu0 %v1375
        %v1432 = vpop.xlane.xlu0 %1431
        %1433 = vadd.xlane.f32.xlu0 %v1376
        %v1434 = vpop.xlane.xlu0 %1433
        %1435 = vadd.xlane.f32.xlu0 %v1377
        %v1436 = vpop.xlane.xlu0 %1435
        %1437 = vadd.xlane.f32.xlu0 %v1378
        %v1438 = vpop.xlane.xlu0 %1437
        %1439 = vadd.xlane.f32.xlu0 %v1379
        %v1440 = vpop.xlane.xlu0 %1439
        %1441 = vadd.xlane.f32.xlu0 %v1380
        %v1442 = vpop.xlane.xlu0 %1441
        %1443 = vadd.xlane.f32.xlu0 %v1381
        %v1444 = vpop.xlane.xlu0 %1443
        %1445 = vadd.xlane.f32.xlu0 %v1382
        %v1446 = vpop.xlane.xlu0 %1445
        %v1447 = vrcp.pop %v1384
        %v1448 = vrcp.pop %v1386
        %v1449 = vrcp.pop %v1388
        %v1450 = vrcp.pop %v1390
        %v1451 = vrcp.pop %v1392
        %v1452 = vrcp.pop %v1394
        %v1453 = vrcp.pop %v1396
        %v1454 = vrcp.pop %v1398
        %v1455 = vrcp.pop %v1400
        %v1456 = vrcp.pop %v1402
        %v1457 = vrcp.pop %v1404
        %v1458 = vrcp.pop %v1406
        %v1459 = vrcp.pop %v1408
        %v1460 = vrcp.pop %v1410
        %v1461 = vrcp.pop %v1412
        %v1462 = vrcp.pop %v1414
        %v1463 = vrcp.pop %v1416
        %v1464 = vrcp.pop %v1418
        %v1465 = vrcp.pop %v1420
        %v1466 = vrcp.pop %v1422
        %v1467 = vrcp.pop %v1424
        %v1468 = vrcp.pop %v1426
        %v1469 = vrcp.pop %v1428
        %v1470 = vrcp.pop %v1430
        %v1471 = vrcp.pop %v1432
        %v1472 = vrcp.pop %v1434
        %v1473 = vrcp.pop %v1436
        %v1474 = vrcp.pop %v1438
        %v1475 = vrcp.pop %v1440
        %v1476 = vrcp.pop %v1442
        %v1477 = vrcp.pop %v1444
        %v1478 = vrcp.pop %v1446
        %v1479 = vmul.f32 %v1288, %v1447
        %v1480 = vmul.f32 %v1290, %v1448
        %v1481 = vmul.f32 %v1292, %v1449
        %v1482 = vmul.f32 %v1294, %v1450
        %v1483 = vmul.f32 %v1296, %v1451
        %v1484 = vmul.f32 %v1298, %v1452
        %v1485 = vmul.f32 %v1300, %v1453
        %v1486 = vmul.f32 %v1302, %v1454
        %v1487 = vmul.f32 %v1304, %v1455
        %v1488 = vmul.f32 %v1306, %v1456
        %v1489 = vmul.f32 %v1308, %v1457
        %v1490 = vmul.f32 %v1310, %v1458
        %v1491 = vmul.f32 %v1312, %v1459
        %v1492 = vmul.f32 %v1314, %v1460
        %v1493 = vmul.f32 %v1316, %v1461
        %v1494 = vmul.f32 %v1318, %v1462
        %v1495 = vmul.f32 %v1320, %v1463
        %v1496 = vmul.f32 %v1322, %v1464
        %v1497 = vmul.f32 %v1324, %v1465
        %v1498 = vmul.f32 %v1326, %v1466
        %v1499 = vmul.f32 %v1328, %v1467
        %v1500 = vmul.f32 %v1330, %v1468
        %v1501 = vmul.f32 %v1332, %v1469
        %v1502 = vmul.f32 %v1334, %v1470
        %v1503 = vmul.f32 %v1336, %v1471
        %v1504 = vmul.f32 %v1338, %v1472
        %v1505 = vmul.f32 %v1340, %v1473
        %v1506 = vmul.f32 %v1342, %v1474
        %v1507 = vmul.f32 %v1344, %v1475
        %v1508 = vmul.f32 %v1346, %v1476
        %v1509 = vmul.f32 %v1348, %v1477
        %v1510 = vmul.f32 %v1350, %v1478
        %v1511 = vmul.f32 %v1479, %v274
        %v1512 = vmul.f32 %v1480, %v275
        %v1513 = vmul.f32 %v1481, %v276
        %v1514 = vmul.f32 %v1482, %v277
        %v1515 = vmul.f32 %v1483, %v278
        %v1516 = vmul.f32 %v1484, %v279
        %v1517 = vmul.f32 %v1485, %v280
        %v1518 = vmul.f32 %v1486, %v281
        %v1519 = vmul.f32 %v1487, %v282
        %v1520 = vmul.f32 %v1488, %v283
        %v1521 = vmul.f32 %v1489, %v284
        %v1522 = vmul.f32 %v1490, %v285
        %v1523 = vmul.f32 %v1491, %v286
        %v1524 = vmul.f32 %v1492, %v287
        %v1525 = vmul.f32 %v1493, %v288
        %v1526 = vmul.f32 %v1494, %v289
        %v1527 = vmul.f32 %v1495, %v290
        %v1528 = vmul.f32 %v1496, %v291
        %v1529 = vmul.f32 %v1497, %v292
        %v1530 = vmul.f32 %v1498, %v293
        %v1531 = vmul.f32 %v1499, %v294
        %v1532 = vmul.f32 %v1500, %v295
        %v1533 = vmul.f32 %v1501, %v296
        %v1534 = vmul.f32 %v1502, %v297
        %v1535 = vmul.f32 %v1503, %v298
        %v1536 = vmul.f32 %v1504, %v299
        %v1537 = vmul.f32 %v1505, %v300
        %v1538 = vmul.f32 %v1506, %v301
        %v1539 = vmul.f32 %v1507, %v302
        %v1540 = vmul.f32 %v1508, %v303
        %v1541 = vmul.f32 %v1509, %v304
        %v1542 = vmul.f32 %v1510, %v305
        %v1543 = vsub.f32 %v1097, %v1511
        %v1544 = vsub.f32 %v1102, %v1512
        %v1545 = vsub.f32 %v1107, %v1513
        %v1546 = vsub.f32 %v1112, %v1514
        %v1547 = vsub.f32 %v1117, %v1515
        %v1548 = vsub.f32 %v1122, %v1516
        %v1549 = vsub.f32 %v1127, %v1517
        %v1550 = vsub.f32 %v1132, %v1518
        %v1551 = vsub.f32 %v1137, %v1519
        %v1552 = vsub.f32 %v1142, %v1520
        %v1553 = vsub.f32 %v1147, %v1521
        %v1554 = vsub.f32 %v1152, %v1522
        %v1555 = vsub.f32 %v1157, %v1523
        %v1556 = vsub.f32 %v1162, %v1524
        %v1557 = vsub.f32 %v1167, %v1525
        %v1558 = vsub.f32 %v1172, %v1526
        %v1559 = vsub.f32 %v1177, %v1527
        %v1560 = vsub.f32 %v1182, %v1528
        %v1561 = vsub.f32 %v1187, %v1529
        %v1562 = vsub.f32 %v1192, %v1530
        %v1563 = vsub.f32 %v1197, %v1531
        %v1564 = vsub.f32 %v1202, %v1532
        %v1565 = vsub.f32 %v1207, %v1533
        %v1566 = vsub.f32 %v1212, %v1534
        %v1567 = vsub.f32 %v1217, %v1535
        %v1568 = vsub.f32 %v1222, %v1536
        %v1569 = vsub.f32 %v1227, %v1537
        %v1570 = vsub.f32 %v1232, %v1538
        %v1571 = vsub.f32 %v1237, %v1539
        %v1572 = vsub.f32 %v1242, %v1540
        %v1573 = vsub.f32 %v1247, %v1541
        %v1574 = vsub.f32 %v1252, %v1542
        %1575 = vst [vmem:[%s271] sm:$0xff] %v1543
        %1576 = vst [vmem:[%s271 + $0x8] sm:$0xff] %v1544
        %1577 = vst [vmem:[%s271 + $0x10] sm:$0xff] %v1545
        %1578 = vst [vmem:[%s271 + $0x18] sm:$0xff] %v1546
        %1579 = vst [vmem:[%s271 + $0x20] sm:$0xff] %v1547
        %1580 = vst [vmem:[%s271 + $0x28] sm:$0xff] %v1548
        %1581 = vst [vmem:[%s271 + $0x30] sm:$0xff] %v1549
        %1582 = vst [vmem:[%s271 + $0x38] sm:$0xff] %v1550
        %1583 = vst [vmem:[%s271 + $0x40] sm:$0xff] %v1551
        %1584 = vst [vmem:[%s271 + $0x48] sm:$0xff] %v1552
        %1585 = vst [vmem:[%s271 + $0x50] sm:$0xff] %v1553
        %1586 = vst [vmem:[%s271 + $0x58] sm:$0xff] %v1554
        %1587 = vst [vmem:[%s271 + $0x60] sm:$0xff] %v1555
        %1588 = vst [vmem:[%s271 + $0x68] sm:$0xff] %v1556
        %1589 = vst [vmem:[%s271 + $0x70] sm:$0xff] %v1557
        %1590 = vst [vmem:[%s271 + $0x78] sm:$0xff] %v1558
        %1591 = vst [vmem:[%s271 + $0x80] sm:$0xff] %v1559
        %1592 = vst [vmem:[%s271 + $0x88] sm:$0xff] %v1560
        %1593 = vst [vmem:[%s271 + $0x90] sm:$0xff] %v1561
        %1594 = vst [vmem:[%s271 + $0x98] sm:$0xff] %v1562
        %1595 = vst [vmem:[%s271 + $0xa0] sm:$0xff] %v1563
        %1596 = vst [vmem:[%s271 + $0xa8] sm:$0xff] %v1564
        %1597 = vst [vmem:[%s271 + $0xb0] sm:$0xff] %v1565
        %1598 = vst [vmem:[%s271 + $0xb8] sm:$0xff] %v1566
        %1599 = vst [vmem:[%s271 + $0xc0] sm:$0xff] %v1567
        %1600 = vst [vmem:[%s271 + $0xc8] sm:$0xff] %v1568
        %1601 = vst [vmem:[%s271 + $0xd0] sm:$0xff] %v1569
        %1602 = vst [vmem:[%s271 + $0xd8] sm:$0xff] %v1570
        %1603 = vst [vmem:[%s271 + $0xe0] sm:$0xff] %v1571
        %1604 = vst [vmem:[%s271 + $0xe8] sm:$0xff] %v1572
        %1605 = vst [vmem:[%s271 + $0xf0] sm:$0xff] %v1573
        %1606 = vst [vmem:[%s271 + $0xf8] sm:$0xff] %v1574
        %s1607 = sand.u32 %s141, 1
        %s1608 = scalar_lea.sflag [#allocation4], %s1607
        %s1609 = sand.u32 %s141, 1
        %s1610 = smul.addr %s1609, 256
        %s1611 = scalar_lea.vmem [#allocation8], %s1610
        // Predicated region
        $region53: #{tpu_custom_call.1} parent=39 // pred_check
          %p1612 = pneg %p151
        $region54: #{tpu_custom_call.1} parent=39 // pred_check_branch
          %1614 = sbr.rel (%p1612) target = $region56
        $region55: #{tpu_custom_call.1} parent=39 // pred_region
          %s1615 = smul.u32 32, %s23
          %s1617 = ssub.s32 4096, 4096
          %1618 = vsyncadd %s1608, %s1617
          %s1619 = smul.addr %s1615, 128
          %s1620 = scalar_lea.hbm %s5, %s1619
          %s1621 = sshll.u32 %s1611, 4
          %s1622 = int_to_ptr.vmem [resolvable:$true] %s1621
          %1627 = dma.vmem_to_hbm [thread:$0]  %s1622, 4096, %s1620, %s1608, 128, 128, 8
        $region56: #{tpu_custom_call.1} parent=39 // pred_fallthru
          _
      $region40: #{tpu_custom_call.1} parent=5 // pred_fallthru
        _
      %p1628 = scmp.le.s32.totalorder 2, %s18
      // Predicated region
      $region57: #{tpu_custom_call.1} parent=5 // pred_check
        %p1629 = pneg %p1628
      $region58: #{tpu_custom_call.1} parent=5 // pred_check_branch
        %1631 = sbr.rel (%p1629) target = $region60
      $region59: #{tpu_custom_call.1} parent=5 // pred_region
        %s1632 = ssub.s32 %s18, 2
        // Predicated region
        $region61: #{tpu_custom_call.1} parent=59 // pred_check
          %p1633 = pneg %p157
        $region62: #{tpu_custom_call.1} parent=59 // pred_check_branch
          %1635 = sbr.rel (%p1633) target = $region64
        $region63: #{tpu_custom_call.1} parent=59 // pred_region
          %s1636 = sand.u32 %s142, 1
          %s1637 = scalar_lea.sflag [#allocation4], %s1636
          %s1638 = sand.u32 %s142, 1
          %s1639 = smul.addr %s1638, 256
          %s1640 = scalar_lea.vmem [#allocation8], %s1639
          %1641 = dma.done %s1637, 4096
        $region64: #{tpu_custom_call.1} parent=59 // pred_fallthru
          _
      $region60: #{tpu_custom_call.1} parent=5 // pred_fallthru
        _
    $region6: #{tpu_custom_call.1} parent=1 // loop_footer
      %s22 = sadd.s32 1, %s18
    $region7: #{tpu_custom_call.1} parent=1 // loop_footer_branch
      %17 = sbr.rel target = $region3
    $region8: #{tpu_custom_call.1} parent=1 // loop_exit
      _
    %1642 = vsyncpa [#allocation3], 1
    %s1643 = scalar_lea.sflag [#allocation3], 1
    %1644 = vsyncpa %s1643, 1
    %1645 = vsyncpa [#allocation6], 1
    %1646 = vsyncpa [#allocation4], 1
    %s1647 = scalar_lea.sflag [#allocation4], 1
    %1648 = vsyncpa %s1647, 1

// kernel: tpu_custom_call.1
$region0: #{tpu_custom_call.1}
  #allocation0 [shape = 'u32[]', space=smem, size = 0x4, offset = 0x4, fixed_abs, tag = 'smem constant byte address 0x4 - core index']
  #allocation1 [shape = 'u32[144,128]{1,0:T(1,128)}', space=vmem, size = 0x12000, scoped, tag = 'internal scratch']
  %s0 = inlined_call_operand.hbm [shape: f32[1024,128], index: 0, kind: input, shape index: {}]
  %s1 = inlined_call_operand.hbm [shape: f32[256,128], index: 1, kind: input, shape index: {}]
  %s2 = inlined_call_operand.vmem [shape: f32[1,256], index: 2, kind: input, shape index: {}]
  %s3 = inlined_call_operand.hbm [shape: f32[128,256], index: 3, kind: input, shape index: {}]
  %s4 = inlined_call_operand.vmem [shape: f32[1,128], index: 4, kind: input, shape index: {}]
  %s5 = inlined_call_operand.hbm [shape: f32[1024,128], index: 5, kind: output, shape index: {}]
  %s6 = sld [smem:[#allocation0]]
  $region65: #{tpu_custom_call.1} parent=0
    _
  %s8 = ssub.s32 1, %s6
  %s9 = scalar_select 0, %s8, %s6
  $region1: #{tpu_custom_call.1} parent=0
    #allocation2 [shape = 'u8[262144]{0}', space=vmem, size = 0x40000, scoped, tag = 'input window, operand 0']
    #allocation3 [shape = 's32[2]{0}', space=sflag, size = 0x8, scoped, tag = 'scoped memory for tpu_custom_call.1']
    #allocation4 [shape = 's32[2]{0}', space=sflag, size = 0x8, scoped, tag = 'scoped memory for tpu_custom_call.1']
    #allocation5 [shape = 'u8[131072]{0}', space=vmem, size = 0x20000, scoped, tag = 'input window, operand 1, single buffered']
    #allocation6 [shape = 's32[1]{0}', space=sflag, size = 0x4, scoped, tag = 'scoped memory for tpu_custom_call.1']
    #allocation7 [shape = 'u8[131072]{0}', space=vmem, size = 0x20000, scoped, tag = 'input window, operand 3, single buffered']
    #allocation8 [shape = 'u8[262144]{0}', space=vmem, size = 0x40000, scoped, tag = 'output window, operand 0']
    %10 = vsyncpa [#allocation3], 0
    %s11 = scalar_lea.sflag [#allocation3], 1
    %12 = vsyncpa %s11, 0
    %13 = vsyncpa [#allocation6], 0
    %14 = vsyncpa [#allocation4], 0
    %s15 = scalar_lea.sflag [#allocation4], 1
    %16 = vsyncpa %s15, 0
    loop: start=0, step=1, limit=6
    $region2: #{tpu_custom_call.1} parent=1 // loop_pre_header
      _
    $region3: #{tpu_custom_call.1} parent=1 // loop_header
      %s18 = sphi 0, %s22
      %p19 = scmp.ge.s32.totalorder %s18, 6
      %s28 = sphi 0, %s30
      %s31 = sphi 0, %s28
      %s32 = sphi 0, %s31
      %s48 = sphi 0, %s32
      %s52 = sphi 0, %s52
      %s54 = sphi 0, %s52
      %s55 = sphi 0, %s54
      %s69 = sphi 0, %s55
      %s73 = sphi 0, %s73
      %s75 = sphi 0, %s73
      %s76 = sphi 0, %s75
      %s90 = sphi 0, %s76
      %s94 = sphi 0, %s94
      %s96 = sphi 0, %s94
      %s97 = sphi 0, %s96
      %s111 = sphi 0, %s97
      %s115 = sphi 0, %s115
      %s117 = sphi 0, %s115
      %s118 = sphi 0, %s117
      %s132 = sphi 0, %s118
      %s138 = sphi 0, %s140
      %s141 = sphi 0, %s138
      %s142 = sphi 0, %s141
      %s158 = sphi 0, %s142
    $region4: #{tpu_custom_call.1} parent=1 // loop_header_branch
      %21 = sbr.rel (%p19) target = $region8
    $region5: #{tpu_custom_call.1} parent=1 // loop_body
      %s23 = ssub.s32 %s18, 1
      %s24 = ssub.s32 %s18, 2
      %s25 = sadd.s32 %s18, 1
      %s26 = ssub.s32 %s18, %s25
      %p27 = scmp.eq.s32.totalorder %s26, 0
      %s29 = sadd.s32 %s28, 1
      %s30 = scalar_select %p27, %s28, %s29
      %p33 = pneg %p27
      %p34 = scmp.eq.s32.totalorder %s18, 3
      %p35 = por %p33, %p34
      %p36 = scmp.ne.s32.totalorder %s28, %s31
      %p37 = scmp.eq.s32.totalorder %s18, 0
      %p38 = por %p36, %p37
      %p39 = scmp.ne.s32.totalorder %s28, %s31
      %p40 = scmp.eq.s32.totalorder %s23, 3
      %p41 = por %p39, %p40
      %p42 = scmp.ne.s32.totalorder %s31, %s32
      %p43 = scmp.eq.s32.totalorder %s23, 0
      %p44 = por %p42, %p43
      %p45 = scmp.ne.s32.totalorder %s31, %s32
      %p46 = scmp.eq.s32.totalorder %s24, 3
      %p47 = por %p45, %p46
      %p49 = scmp.ne.s32.totalorder %s32, %s48
      %p50 = scmp.eq.s32.totalorder %s24, 0
      %p51 = por %p49, %p50
      %s53 = sadd.s32 %s52, 1
      %p56 = scmp.eq.s32.totalorder %s18, 3
      %p57 = scmp.ne.s32.totalorder %s52, %s54
      %p58 = scmp.eq.s32.totalorder %s18, 0
      %p59 = por %p57, %p58
      %p60 = scmp.ne.s32.totalorder %s52, %s54
      %p61 = scmp.eq.s32.totalorder %s23, 3
      %p62 = por %p60, %p61
      %p63 = scmp.ne.s32.totalorder %s54, %s55
      %p64 = scmp.eq.s32.totalorder %s23, 0
      %p65 = por %p63, %p64
      %p66 = scmp.ne.s32.totalorder %s54, %s55
      %p67 = scmp.eq.s32.totalorder %s24, 3
      %p68 = por %p66, %p67
      %p70 = scmp.ne.s32.totalorder %s55, %s69
      %p71 = scmp.eq.s32.totalorder %s24, 0
      %p72 = por %p70, %p71
      %s74 = sadd.s32 %s73, 1
      %p77 = scmp.eq.s32.totalorder %s18, 3
      %p78 = scmp.ne.s32.totalorder %s73, %s75
      %p79 = scmp.eq.s32.totalorder %s18, 0
      %p80 = por %p78, %p79
      %p81 = scmp.ne.s32.totalorder %s73, %s75
      %p82 = scmp.eq.s32.totalorder %s23, 3
      %p83 = por %p81, %p82
      %p84 = scmp.ne.s32.totalorder %s75, %s76
      %p85 = scmp.eq.s32.totalorder %s23, 0
      %p86 = por %p84, %p85
      %p87 = scmp.ne.s32.totalorder %s75, %s76
      %p88 = scmp.eq.s32.totalorder %s24, 3
      %p89 = por %p87, %p88
      %p91 = scmp.ne.s32.totalorder %s76, %s90
      %p92 = scmp.eq.s32.totalorder %s24, 0
      %p93 = por %p91, %p92
      %s95 = sadd.s32 %s94, 1
      %p98 = scmp.eq.s32.totalorder %s18, 3
      %p99 = scmp.ne.s32.totalorder %s94, %s96
      %p100 = scmp.eq.s32.totalorder %s18, 0
      %p101 = por %p99, %p100
      %p102 = scmp.ne.s32.totalorder %s94, %s96
      %p103 = scmp.eq.s32.totalorder %s23, 3
      %p104 = por %p102, %p103
      %p105 = scmp.ne.s32.totalorder %s96, %s97
      %p106 = scmp.eq.s32.totalorder %s23, 0
      %p107 = por %p105, %p106
      %p108 = scmp.ne.s32.totalorder %s96, %s97
      %p109 = scmp.eq.s32.totalorder %s24, 3
      %p110 = por %p108, %p109
      %p112 = scmp.ne.s32.totalorder %s97, %s111
      %p113 = scmp.eq.s32.totalorder %s24, 0
      %p114 = por %p112, %p113
      %s116 = sadd.s32 %s115, 1
      %p119 = scmp.eq.s32.totalorder %s18, 3
      %p120 = scmp.ne.s32.totalorder %s115, %s117
      %p121 = scmp.eq.s32.totalorder %s18, 0
      %p122 = por %p120, %p121
      %p123 = scmp.ne.s32.totalorder %s115, %s117
      %p124 = scmp.eq.s32.totalorder %s23, 3
      %p125 = por %p123, %p124
      %p126 = scmp.ne.s32.totalorder %s117, %s118
      %p127 = scmp.eq.s32.totalorder %s23, 0
      %p128 = por %p126, %p127
      %p129 = scmp.ne.s32.totalorder %s117, %s118
      %p130 = scmp.eq.s32.totalorder %s24, 3
      %p131 = por %p129, %p130
      %p133 = scmp.ne.s32.totalorder %s118, %s132
      %p134 = scmp.eq.s32.totalorder %s24, 0
      %p135 = por %p133, %p134
      %s136 = ssub.s32 %s18, %s25
      %p137 = scmp.eq.s32.totalorder %s136, 0
      %s139 = sadd.s32 %s138, 1
      %s140 = scalar_select %p137, %s138, %s139
      %p143 = pneg %p137
      %p144 = scmp.eq.s32.totalorder %s18, 3
      %p145 = por %p143, %p144
      %p146 = scmp.ne.s32.totalorder %s138, %s141
      %p147 = scmp.eq.s32.totalorder %s18, 0
      %p148 = por %p146, %p147
      %p149 = scmp.ne.s32.totalorder %s138, %s141
      %p150 = scmp.eq.s32.totalorder %s23, 3
      %p151 = por %p149, %p150
      %p152 = scmp.ne.s32.totalorder %s141, %s142
      %p153 = scmp.eq.s32.totalorder %s23, 0
      %p154 = por %p152, %p153
      %p155 = scmp.ne.s32.totalorder %s141, %s142
      %p156 = scmp.eq.s32.totalorder %s24, 3
      %p157 = por %p155, %p156
      %p159 = scmp.ne.s32.totalorder %s142, %s158
      %p160 = scmp.eq.s32.totalorder %s24, 0
      %p161 = por %p159, %p160
      %p162 = scmp.le.s32.totalorder 1, %s18
      %p163 = scmp.lt.s32.totalorder %s18, 5
      %p164 = pnand %p162, %p163
      %p165 = pneg %p164
      // Predicated region
      $region9: #{tpu_custom_call.1} parent=5 // pred_check
        _
      $region10: #{tpu_custom_call.1} parent=5 // pred_check_branch
        %167 = sbr.rel (%p164) target = $region12
      $region11: #{tpu_custom_call.1} parent=5 // pred_region
        %s168 = ssub.s32 %s18, 1
        // Predicated region
        $region13: #{tpu_custom_call.1} parent=11 // pred_check
          %p169 = pneg %p65
        $region14: #{tpu_custom_call.1} parent=11 // pred_check_branch
          %171 = sbr.rel (%p169) target = $region16
        $region15: #{tpu_custom_call.1} parent=11 // pred_region
          %s173 = ssub.s32 4096, 4096
          %174 = vsyncadd [#allocation6], %s173
          %s175 = sshll.u32 [#allocation5], 4
          %s176 = int_to_ptr.vmem [resolvable:$true] %s175
          %181 = dma.hbm_to_vmem [thread:$0]  %s1, 4096, %s176, [#allocation6], 128, 128, 8
        $region16: #{tpu_custom_call.1} parent=11 // pred_fallthru
          _
        // Predicated region
        $region17: #{tpu_custom_call.1} parent=11 // pred_check
          %p182 = pneg %p86
        $region18: #{tpu_custom_call.1} parent=11 // pred_check_branch
          %184 = sbr.rel (%p182) target = $region20
        $region19: #{tpu_custom_call.1} parent=11 // pred_region
          _
        $region20: #{tpu_custom_call.1} parent=11 // pred_fallthru
          _
        // Predicated region
        $region21: #{tpu_custom_call.1} parent=11 // pred_check
          %p185 = pneg %p107
        $region22: #{tpu_custom_call.1} parent=11 // pred_check_branch
          %187 = sbr.rel (%p185) target = $region24
        $region23: #{tpu_custom_call.1} parent=11 // pred_region
          %s189 = ssub.s32 4096, 4096
          %190 = vsyncadd [#allocation6], %s189
          %s191 = sshll.u32 [#allocation7], 4
          %s192 = int_to_ptr.vmem [resolvable:$true] %s191
          %197 = dma.hbm_to_vmem [thread:$0]  %s3, 4096, %s192, [#allocation6], 256, 256, 16
        $region24: #{tpu_custom_call.1} parent=11 // pred_fallthru
          _
        // Predicated region
        $region25: #{tpu_custom_call.1} parent=11 // pred_check
          %p198 = pneg %p128
        $region26: #{tpu_custom_call.1} parent=11 // pred_check_branch
          %200 = sbr.rel (%p198) target = $region28
        $region27: #{tpu_custom_call.1} parent=11 // pred_region
          _
        $region28: #{tpu_custom_call.1} parent=11 // pred_fallthru
          _
      $region12: #{tpu_custom_call.1} parent=5 // pred_fallthru
        _
      %p201 = scmp.lt.s32.totalorder %s18, 4
      // Predicated region
      $region29: #{tpu_custom_call.1} parent=5 // pred_check
        %p202 = pneg %p201
      $region30: #{tpu_custom_call.1} parent=5 // pred_check_branch
        %204 = sbr.rel (%p202) target = $region32
      $region31: #{tpu_custom_call.1} parent=5 // pred_region
        // Predicated region
        $region33: #{tpu_custom_call.1} parent=31 // pred_check
          %p205 = pneg %p38
        $region34: #{tpu_custom_call.1} parent=31 // pred_check_branch
          %207 = sbr.rel (%p205) target = $region36
        $region35: #{tpu_custom_call.1} parent=31 // pred_region
          %s208 = sand.u32 %s28, 1
          %s209 = scalar_lea.sflag [#allocation3], %s208
          %s210 = sand.u32 %s28, 1
          %s211 = smul.addr %s210, 256
          %s212 = scalar_lea.vmem [#allocation2], %s211
          %s213 = smul.u32 32, %s18
          %s215 = ssub.s32 4096, 4096
          %216 = vsyncadd %s209, %s215
          %s217 = smul.addr %s213, 128
          %s218 = scalar_lea.hbm %s0, %s217
          %s219 = sshll.u32 %s212, 4
          %s220 = int_to_ptr.vmem [resolvable:$true] %s219
          %225 = dma.hbm_to_vmem [thread:$0]  %s218, 4096, %s220, %s209, 128, 128, 8
        $region36: #{tpu_custom_call.1} parent=31 // pred_fallthru
          _
      $region32: #{tpu_custom_call.1} parent=5 // pred_fallthru
        _
      %p226 = scmp.le.s32.totalorder 1, %s18
      %p227 = scmp.lt.s32.totalorder %s18, 5
      %p228 = pnand %p226, %p227
      %p229 = pneg %p228
      // Predicated region
      $region37: #{tpu_custom_call.1} parent=5 // pred_check
        _
      $region38: #{tpu_custom_call.1} parent=5 // pred_check_branch
        %231 = sbr.rel (%p228) target = $region40
      $region39: #{tpu_custom_call.1} parent=5 // pred_region
        %s232 = ssub.s32 %s18, 1
        %s233 = sand.u32 %s31, 1
        %s234 = scalar_lea.sflag [#allocation3], %s233
        %s235 = sand.u32 %s31, 1
        %s236 = smul.addr %s235, 256
        %s237 = scalar_lea.vmem [#allocation2], %s236
        // Predicated region
        $region41: #{tpu_custom_call.1} parent=39 // pred_check
          %p238 = pneg %p44
        $region42: #{tpu_custom_call.1} parent=39 // pred_check_branch
          %240 = sbr.rel (%p238) target = $region44
        $region43: #{tpu_custom_call.1} parent=39 // pred_region
          %241 = dma.done %s234, 4096
        $region44: #{tpu_custom_call.1} parent=39 // pred_fallthru
          _
        // Predicated region
        $region45: #{tpu_custom_call.1} parent=39 // pred_check
          %p242 = pneg %p65
        $region46: #{tpu_custom_call.1} parent=39 // pred_check_branch
          %244 = sbr.rel (%p242) target = $region48
        $region47: #{tpu_custom_call.1} parent=39 // pred_region
          %245 = dma.done [#allocation6], 4096
        $region48: #{tpu_custom_call.1} parent=39 // pred_fallthru
          _
        // Predicated region
        $region49: #{tpu_custom_call.1} parent=39 // pred_check
          %p246 = pneg %p107
        $region50: #{tpu_custom_call.1} parent=39 // pred_check_branch
          %248 = sbr.rel (%p246) target = $region52
        $region51: #{tpu_custom_call.1} parent=39 // pred_region
          %249 = dma.done [#allocation6], 4096
        $region52: #{tpu_custom_call.1} parent=39 // pred_fallthru
          _
        %s250 = sand.u32 %s31, 1
        %s251 = scalar_lea.sflag [#allocation3], %s250
        %s252 = sand.u32 %s31, 1
        %s253 = smul.addr %s252, 256
        %s254 = scalar_lea.vmem [#allocation2], %s253
        %p255 = pneg %p44
        %p256 = pneg %p41
        %p257 = pneg %p65
        %p258 = pneg %p62
        %p259 = pneg %p86
        %p260 = pneg %p83
        %p261 = pneg %p107
        %p262 = pneg %p104
        %p263 = pneg %p128
        %p264 = pneg %p125
        %p265 = pneg %p154
        %p266 = pneg %p151
        %s267 = sand.u32 %s141, 1
        %s268 = scalar_lea.sflag [#allocation4], %s267
        %s269 = sand.u32 %s141, 1
        %s270 = smul.addr %s269, 256
        %s271 = scalar_lea.vmem [#allocation8], %s270
        %s272 = smul.u32 32, %s23
        %s273 = smul.u32 32, %s23
        %v274 = vld [vmem:[%s237] sm:$0xff]
        %v275 = vld [vmem:[%s237 + $0x8] sm:$0xff]
        %v276 = vld [vmem:[%s237 + $0x10] sm:$0xff]
        %v277 = vld [vmem:[%s237 + $0x18] sm:$0xff]
        %v278 = vld [vmem:[%s237 + $0x20] sm:$0xff]
        %v279 = vld [vmem:[%s237 + $0x28] sm:$0xff]
        %v280 = vld [vmem:[%s237 + $0x30] sm:$0xff]
        %v281 = vld [vmem:[%s237 + $0x38] sm:$0xff]
        %v282 = vld [vmem:[%s237 + $0x40] sm:$0xff]
        %v283 = vld [vmem:[%s237 + $0x48] sm:$0xff]
        %v284 = vld [vmem:[%s237 + $0x50] sm:$0xff]
        %v285 = vld [vmem:[%s237 + $0x58] sm:$0xff]
        %v286 = vld [vmem:[%s237 + $0x60] sm:$0xff]
        %v287 = vld [vmem:[%s237 + $0x68] sm:$0xff]
        %v288 = vld [vmem:[%s237 + $0x70] sm:$0xff]
        %v289 = vld [vmem:[%s237 + $0x78] sm:$0xff]
        %v290 = vld [vmem:[%s237 + $0x80] sm:$0xff]
        %v291 = vld [vmem:[%s237 + $0x88] sm:$0xff]
        %v292 = vld [vmem:[%s237 + $0x90] sm:$0xff]
        %v293 = vld [vmem:[%s237 + $0x98] sm:$0xff]
        %v294 = vld [vmem:[%s237 + $0xa0] sm:$0xff]
        %v295 = vld [vmem:[%s237 + $0xa8] sm:$0xff]
        %v296 = vld [vmem:[%s237 + $0xb0] sm:$0xff]
        %v297 = vld [vmem:[%s237 + $0xb8] sm:$0xff]
        %v298 = vld [vmem:[%s237 + $0xc0] sm:$0xff]
        %v299 = vld [vmem:[%s237 + $0xc8] sm:$0xff]
        %v300 = vld [vmem:[%s237 + $0xd0] sm:$0xff]
        %v301 = vld [vmem:[%s237 + $0xd8] sm:$0xff]
        %v302 = vld [vmem:[%s237 + $0xe0] sm:$0xff]
        %v303 = vld [vmem:[%s237 + $0xe8] sm:$0xff]
        %v304 = vld [vmem:[%s237 + $0xf0] sm:$0xff]
        %v305 = vld [vmem:[%s237 + $0xf8] sm:$0xff]
        %v306 = vld [vmem:[#allocation5] sm:$0xff]
        %v307 = vld [vmem:[#allocation5 + $0x8] sm:$0xff]
        %v308 = vld [vmem:[#allocation5 + $0x10] sm:$0xff]
        %v309 = vld [vmem:[#allocation5 + $0x18] sm:$0xff]
        %v310 = vld [vmem:[#allocation5 + $0x20] sm:$0xff]
        %v311 = vld [vmem:[#allocation5 + $0x28] sm:$0xff]
        %v312 = vld [vmem:[#allocation5 + $0x30] sm:$0xff]
        %v313 = vld [vmem:[#allocation5 + $0x38] sm:$0xff]
        %v314 = vld [vmem:[#allocation5 + $0x40] sm:$0xff]
        %v315 = vld [vmem:[#allocation5 + $0x48] sm:$0xff]
        %v316 = vld [vmem:[#allocation5 + $0x50] sm:$0xff]
        %v317 = vld [vmem:[#allocation5 + $0x58] sm:$0xff]
        %v318 = vld [vmem:[#allocation5 + $0x60] sm:$0xff]
        %v319 = vld [vmem:[#allocation5 + $0x68] sm:$0xff]
        %v320 = vld [vmem:[#allocation5 + $0x70] sm:$0xff]
        %v321 = vld [vmem:[#allocation5 + $0x78] sm:$0xff]
        %v322 = vld [vmem:[#allocation5 + $0x80] sm:$0xff]
        %v323 = vld [vmem:[#allocation5 + $0x88] sm:$0xff]
        %v324 = vld [vmem:[#allocation5 + $0x90] sm:$0xff]
        %v325 = vld [vmem:[#allocation5 + $0x98] sm:$0xff]
        %v326 = vld [vmem:[#allocation5 + $0xa0] sm:$0xff]
        %v327 = vld [vmem:[#allocation5 + $0xa8] sm:$0xff]
        %v328 = vld [vmem:[#allocation5 + $0xb0] sm:$0xff]
        %v329 = vld [vmem:[#allocation5 + $0xb8] sm:$0xff]
        %v330 = vld [vmem:[#allocation5 + $0xc0] sm:$0xff]
        %v331 = vld [vmem:[#allocation5 + $0xc8] sm:$0xff]
        %v332 = vld [vmem:[#allocation5 + $0xd0] sm:$0xff]
        %v333 = vld [vmem:[#allocation5 + $0xd8] sm:$0xff]
        %v334 = vld [vmem:[#allocation5 + $0xe0] sm:$0xff]
        %v335 = vld [vmem:[#allocation5 + $0xe8] sm:$0xff]
        %v336 = vld [vmem:[#allocation5 + $0xf0] sm:$0xff]
        %v337 = vld [vmem:[#allocation5 + $0xf8] sm:$0xff]
        %v338 = vld [vmem:[%s2] sm:$0x3]
        %v340 = vlaneseq
        %v341 = vshrl.u32 %v340, 7
        %v342 = vsub.s32 0, %v341
        %v343 = vrot.slane %v338, %v342
        %v344 = vlaneseq
        %v345 = vshrl.u32 %v344, 7
        %v346 = vsub.s32 1, %v345
        %v347 = vrot.slane %v338, %v346
        %350 = vmatprep.subr.mxu0 0.0
        %351 = vmatpush1.xpose.msra.mxu0 %v306
        %352 = vmatprep.subr.mxu0 0.0
        %353 = vmatpush1.xpose.msra.mxu0 %v307
        %354 = vmatprep.subr.mxu0 0.0
        %355 = vmatpush1.xpose.msra.mxu0 %v308
        %356 = vmatprep.subr.mxu0 0.0
        %357 = vmatpush1.xpose.msra.mxu0 %v309
        %358 = vmatprep.subr.mxu0 0.0
        %359 = vmatpush1.xpose.msra.mxu0 %v310
        %360 = vmatprep.subr.mxu0 0.0
        %361 = vmatpush1.xpose.msra.mxu0 %v311
        %362 = vmatprep.subr.mxu0 0.0
        %363 = vmatpush1.xpose.msra.mxu0 %v312
        %364 = vmatprep.subr.mxu0 0.0
        %365 = vmatpush1.xpose.msra.mxu0 %v313
        %366 = vmatprep.subr.mxu0 0.0
        %367 = vmatpush1.xpose.msra.mxu0 %v314
        %368 = vmatprep.subr.mxu0 0.0
        %369 = vmatpush1.xpose.msra.mxu0 %v315
        %370 = vmatprep.subr.mxu0 0.0
        %371 = vmatpush1.xpose.msra.mxu0 %v316
        %372 = vmatprep.subr.mxu0 0.0
        %373 = vmatpush1.xpose.msra.mxu0 %v317
        %374 = vmatprep.subr.mxu0 0.0
        %375 = vmatpush1.xpose.msra.mxu0 %v318
        %376 = vmatprep.subr.mxu0 0.0
        %377 = vmatpush1.xpose.msra.mxu0 %v319
        %378 = vmatprep.subr.mxu0 0.0
        %379 = vmatpush1.xpose.msra.mxu0 %v320
        %380 = vmatprep.subr.mxu0 0.0
        %381 = vmatpush1.xpose.msra.mxu0 %v321
        %382 = vmatprep.subr.mxu0 0.0
        %383 = vmatpush1.xpose.msra.mxu0 %v322
        %384 = vmatprep.subr.mxu0 0.0
        %385 = vmatpush1.xpose.msra.mxu0 %v323
        %386 = vmatprep.subr.mxu0 0.0
        %387 = vmatpush1.xpose.msra.mxu0 %v324
        %388 = vmatprep.subr.mxu0 0.0
        %389 = vmatpush1.xpose.msra.mxu0 %v325
        %390 = vmatprep.subr.mxu0 0.0
        %391 = vmatpush1.xpose.msra.mxu0 %v326
        %392 = vmatprep.subr.mxu0 0.0
        %393 = vmatpush1.xpose.msra.mxu0 %v327
        %394 = vmatprep.subr.mxu0 0.0
        %395 = vmatpush1.xpose.msra.mxu0 %v328
        %396 = vmatprep.subr.mxu0 0.0
        %397 = vmatpush1.xpose.msra.mxu0 %v329
        %398 = vmatprep.subr.mxu0 0.0
        %399 = vmatpush1.xpose.msra.mxu0 %v330
        %400 = vmatprep.subr.mxu0 0.0
        %401 = vmatpush1.xpose.msra.mxu0 %v331
        %402 = vmatprep.subr.mxu0 0.0
        %403 = vmatpush1.xpose.msra.mxu0 %v332
        %404 = vmatprep.subr.mxu0 0.0
        %405 = vmatpush1.xpose.msra.mxu0 %v333
        %406 = vmatprep.subr.mxu0 0.0
        %407 = vmatpush1.xpose.msra.mxu0 %v334
        %408 = vmatprep.subr.mxu0 0.0
        %409 = vmatpush1.xpose.msra.mxu0 %v335
        %410 = vmatprep.subr.mxu0 0.0
        %411 = vmatpush1.xpose.msra.mxu0 %v336
        %412 = vmatprep.subr.mxu0 0.0
        %413 = vmatpush1.xpose.msra.mxu0 %v337
        %414 = vmatprep.mubr.f32.mxu0 0.0
        %415 = vmatmul.mubr.f32.gmra.mrb[0].mxu0 %v274
        %v416 = vpop.f32.mrb[0].mxu0
        %v417 = vadd.f32 %v343, %v416
        %v418 = vpop.f32.mrb[0].mxu0
        %v419 = vadd.f32 %v347, %v418
        %420 = vmatprep.mubr.f32.mxu0 0.0
        %421 = vmatmul.mubr.f32.gmra.mrb[0].mxu0 %v275
        %v422 = vpop.f32.mrb[0].mxu0
        %v423 = vadd.f32 %v343, %v422
        %v424 = vpop.f32.mrb[0].mxu0
        %v425 = vadd.f32 %v347, %v424
        %426 = vmatprep.mubr.f32.mxu0 0.0
        %427 = vmatmul.mubr.f32.gmra.mrb[0].mxu0 %v276
        %v428 = vpop.f32.mrb[0].mxu0
        %v429 = vadd.f32 %v343, %v428
        %v430 = vpop.f32.mrb[0].mxu0
        %v431 = vadd.f32 %v347, %v430
        %432 = vmatprep.mubr.f32.mxu0 0.0
        %433 = vmatmul.mubr.f32.gmra.mrb[0].mxu0 %v277
        %v434 = vpop.f32.mrb[0].mxu0
        %v435 = vadd.f32 %v343, %v434
        %v436 = vpop.f32.mrb[0].mxu0
        %v437 = vadd.f32 %v347, %v436
        %438 = vmatprep.mubr.f32.mxu0 0.0
        %439 = vmatmul.mubr.f32.gmra.mrb[0].mxu0 %v278
        %v440 = vpop.f32.mrb[0].mxu0
        %v441 = vadd.f32 %v343, %v440
        %v442 = vpop.f32.mrb[0].mxu0
        %v443 = vadd.f32 %v347, %v442
        %444 = vmatprep.mubr.f32.mxu0 0.0
        %445 = vmatmul.mubr.f32.gmra.mrb[0].mxu0 %v279
        %v446 = vpop.f32.mrb[0].mxu0
        %v447 = vadd.f32 %v343, %v446
        %v448 = vpop.f32.mrb[0].mxu0
        %v449 = vadd.f32 %v347, %v448
        %450 = vmatprep.mubr.f32.mxu0 0.0
        %451 = vmatmul.mubr.f32.gmra.mrb[0].mxu0 %v280
        %v452 = vpop.f32.mrb[0].mxu0
        %v453 = vadd.f32 %v343, %v452
        %v454 = vpop.f32.mrb[0].mxu0
        %v455 = vadd.f32 %v347, %v454
        %456 = vmatprep.mubr.f32.mxu0 0.0
        %457 = vmatmul.mubr.f32.gmra.mrb[0].mxu0 %v281
        %v458 = vpop.f32.mrb[0].mxu0
        %v459 = vadd.f32 %v343, %v458
        %v460 = vpop.f32.mrb[0].mxu0
        %v461 = vadd.f32 %v347, %v460
        %462 = vmatprep.mubr.f32.mxu0 0.0
        %463 = vmatmul.mubr.f32.gmra.mrb[0].mxu0 %v282
        %v464 = vpop.f32.mrb[0].mxu0
        %v465 = vadd.f32 %v343, %v464
        %v466 = vpop.f32.mrb[0].mxu0
        %v467 = vadd.f32 %v347, %v466
        %468 = vmatprep.mubr.f32.mxu0 0.0
        %469 = vmatmul.mubr.f32.gmra.mrb[0].mxu0 %v283
        %v470 = vpop.f32.mrb[0].mxu0
        %v471 = vadd.f32 %v343, %v470
        %v472 = vpop.f32.mrb[0].mxu0
        %v473 = vadd.f32 %v347, %v472
        %474 = vmatprep.mubr.f32.mxu0 0.0
        %475 = vmatmul.mubr.f32.gmra.mrb[0].mxu0 %v284
        %v476 = vpop.f32.mrb[0].mxu0
        %v477 = vadd.f32 %v343, %v476
        %v478 = vpop.f32.mrb[0].mxu0
        %v479 = vadd.f32 %v347, %v478
        %480 = vmatprep.mubr.f32.mxu0 0.0
        %481 = vmatmul.mubr.f32.gmra.mrb[0].mxu0 %v285
        %v482 = vpop.f32.mrb[0].mxu0
        %v483 = vadd.f32 %v343, %v482
        %v484 = vpop.f32.mrb[0].mxu0
        %v485 = vadd.f32 %v347, %v484
        %486 = vmatprep.mubr.f32.mxu0 0.0
        %487 = vmatmul.mubr.f32.gmra.mrb[0].mxu0 %v286
        %v488 = vpop.f32.mrb[0].mxu0
        %v489 = vadd.f32 %v343, %v488
        %v490 = vpop.f32.mrb[0].mxu0
        %v491 = vadd.f32 %v347, %v490
        %492 = vmatprep.mubr.f32.mxu0 0.0
        %493 = vmatmul.mubr.f32.gmra.mrb[0].mxu0 %v287
        %v494 = vpop.f32.mrb[0].mxu0
        %v495 = vadd.f32 %v343, %v494
        %v496 = vpop.f32.mrb[0].mxu0
        %v497 = vadd.f32 %v347, %v496
        %498 = vmatprep.mubr.f32.mxu0 0.0
        %499 = vmatmul.mubr.f32.gmra.mrb[0].mxu0 %v288
        %v500 = vpop.f32.mrb[0].mxu0
        %v501 = vadd.f32 %v343, %v500
        %v502 = vpop.f32.mrb[0].mxu0
        %v503 = vadd.f32 %v347, %v502
        %504 = vmatprep.mubr.f32.mxu0 0.0
        %505 = vmatmul.mubr.f32.gmra.mrb[0].mxu0 %v289
        %v506 = vpop.f32.mrb[0].mxu0
        %v507 = vadd.f32 %v343, %v506
        %v508 = vpop.f32.mrb[0].mxu0
        %v509 = vadd.f32 %v347, %v508
        %510 = vmatprep.mubr.f32.mxu0 0.0
        %511 = vmatmul.mubr.f32.gmra.mrb[0].mxu0 %v290
        %v512 = vpop.f32.mrb[0].mxu0
        %v513 = vadd.f32 %v343, %v512
        %v514 = vpop.f32.mrb[0].mxu0
        %v515 = vadd.f32 %v347, %v514
        %516 = vmatprep.mubr.f32.mxu0 0.0
        %517 = vmatmul.mubr.f32.gmra.mrb[0].mxu0 %v291
        %v518 = vpop.f32.mrb[0].mxu0
        %v519 = vadd.f32 %v343, %v518
        %v520 = vpop.f32.mrb[0].mxu0
        %v521 = vadd.f32 %v347, %v520
        %522 = vmatprep.mubr.f32.mxu0 0.0
        %523 = vmatmul.mubr.f32.gmra.mrb[0].mxu0 %v292
        %v524 = vpop.f32.mrb[0].mxu0
        %v525 = vadd.f32 %v343, %v524
        %v526 = vpop.f32.mrb[0].mxu0
        %v527 = vadd.f32 %v347, %v526
        %528 = vmatprep.mubr.f32.mxu0 0.0
        %529 = vmatmul.mubr.f32.gmra.mrb[0].mxu0 %v293
        %v530 = vpop.f32.mrb[0].mxu0
        %v531 = vadd.f32 %v343, %v530
        %v532 = vpop.f32.mrb[0].mxu0
        %v533 = vadd.f32 %v347, %v532
        %534 = vmatprep.mubr.f32.mxu0 0.0
        %535 = vmatmul.mubr.f32.gmra.mrb[0].mxu0 %v294
        %v536 = vpop.f32.mrb[0].mxu0
        %v537 = vadd.f32 %v343, %v536
        %v538 = vpop.f32.mrb[0].mxu0
        %v539 = vadd.f32 %v347, %v538
        %540 = vmatprep.mubr.f32.mxu0 0.0
        %541 = vmatmul.mubr.f32.gmra.mrb[0].mxu0 %v295
        %v542 = vpop.f32.mrb[0].mxu0
        %v543 = vadd.f32 %v343, %v542
        %v544 = vpop.f32.mrb[0].mxu0
        %v545 = vadd.f32 %v347, %v544
        %546 = vmatprep.mubr.f32.mxu0 0.0
        %547 = vmatmul.mubr.f32.gmra.mrb[0].mxu0 %v296
        %v548 = vpop.f32.mrb[0].mxu0
        %v549 = vadd.f32 %v343, %v548
        %v550 = vpop.f32.mrb[0].mxu0
        %v551 = vadd.f32 %v347, %v550
        %552 = vmatprep.mubr.f32.mxu0 0.0
        %553 = vmatmul.mubr.f32.gmra.mrb[0].mxu0 %v297
        %v554 = vpop.f32.mrb[0].mxu0
        %v555 = vadd.f32 %v343, %v554
        %v556 = vpop.f32.mrb[0].mxu0
        %v557 = vadd.f32 %v347, %v556
        %558 = vmatprep.mubr.f32.mxu0 0.0
        %559 = vmatmul.mubr.f32.gmra.mrb[0].mxu0 %v298
        %v560 = vpop.f32.mrb[0].mxu0
        %v561 = vadd.f32 %v343, %v560
        %v562 = vpop.f32.mrb[0].mxu0
        %v563 = vadd.f32 %v347, %v562
        %564 = vmatprep.mubr.f32.mxu0 0.0
        %565 = vmatmul.mubr.f32.gmra.mrb[0].mxu0 %v299
        %v566 = vpop.f32.mrb[0].mxu0
        %v567 = vadd.f32 %v343, %v566
        %v568 = vpop.f32.mrb[0].mxu0
        %v569 = vadd.f32 %v347, %v568
        %570 = vmatprep.mubr.f32.mxu0 0.0
        %571 = vmatmul.mubr.f32.gmra.mrb[0].mxu0 %v300
        %v572 = vpop.f32.mrb[0].mxu0
        %v573 = vadd.f32 %v343, %v572
        %v574 = vpop.f32.mrb[0].mxu0
        %v575 = vadd.f32 %v347, %v574
        %576 = vmatprep.mubr.f32.mxu0 0.0
        %577 = vmatmul.mubr.f32.gmra.mrb[0].mxu0 %v301
        %v578 = vpop.f32.mrb[0].mxu0
        %v579 = vadd.f32 %v343, %v578
        %v580 = vpop.f32.mrb[0].mxu0
        %v581 = vadd.f32 %v347, %v580
        %582 = vmatprep.mubr.f32.mxu0 0.0
        %583 = vmatmul.mubr.f32.gmra.mrb[0].mxu0 %v302
        %v584 = vpop.f32.mrb[0].mxu0
        %v585 = vadd.f32 %v343, %v584
        %v586 = vpop.f32.mrb[0].mxu0
        %v587 = vadd.f32 %v347, %v586
        %588 = vmatprep.mubr.f32.mxu0 0.0
        %589 = vmatmul.mubr.f32.gmra.mrb[0].mxu0 %v303
        %v590 = vpop.f32.mrb[0].mxu0
        %v591 = vadd.f32 %v343, %v590
        %v592 = vpop.f32.mrb[0].mxu0
        %v593 = vadd.f32 %v347, %v592
        %594 = vmatprep.mubr.f32.mxu0 0.0
        %595 = vmatmul.mubr.f32.gmra.mrb[0].mxu0 %v304
        %v596 = vpop.f32.mrb[0].mxu0
        %v597 = vadd.f32 %v343, %v596
        %v598 = vpop.f32.mrb[0].mxu0
        %v599 = vadd.f32 %v347, %v598
        %600 = vmatprep.mubr.f32.mxu0 0.0
        %601 = vmatmul.mubr.f32.gmra.mrb[0].mxu0 %v305
        %v602 = vpop.f32.mrb[0].mxu0
        %v603 = vadd.f32 %v343, %v602
        %v604 = vpop.f32.mrb[0].mxu0
        %v605 = vadd.f32 %v347, %v604
        %606 = vdwg.mxu0
        %vm607 = vcmp.gt.f32.partialorder %v417, 0.0
        %vm608 = vcmp.gt.f32.partialorder %v419, 0.0
        %vm609 = vcmp.gt.f32.partialorder %v423, 0.0
        %vm610 = vcmp.gt.f32.partialorder %v425, 0.0
        %vm611 = vcmp.gt.f32.partialorder %v429, 0.0
        %vm612 = vcmp.gt.f32.partialorder %v431, 0.0
        %vm613 = vcmp.gt.f32.partialorder %v435, 0.0
        %vm614 = vcmp.gt.f32.partialorder %v437, 0.0
        %vm615 = vcmp.gt.f32.partialorder %v441, 0.0
        %vm616 = vcmp.gt.f32.partialorder %v443, 0.0
        %vm617 = vcmp.gt.f32.partialorder %v447, 0.0
        %vm618 = vcmp.gt.f32.partialorder %v449, 0.0
        %vm619 = vcmp.gt.f32.partialorder %v453, 0.0
        %vm620 = vcmp.gt.f32.partialorder %v455, 0.0
        %vm621 = vcmp.gt.f32.partialorder %v459, 0.0
        %vm622 = vcmp.gt.f32.partialorder %v461, 0.0
        %vm623 = vcmp.gt.f32.partialorder %v465, 0.0
        %vm624 = vcmp.gt.f32.partialorder %v467, 0.0
        %vm625 = vcmp.gt.f32.partialorder %v471, 0.0
        %vm626 = vcmp.gt.f32.partialorder %v473, 0.0
        %vm627 = vcmp.gt.f32.partialorder %v477, 0.0
        %vm628 = vcmp.gt.f32.partialorder %v479, 0.0
        %vm629 = vcmp.gt.f32.partialorder %v483, 0.0
        %vm630 = vcmp.gt.f32.partialorder %v485, 0.0
        %vm631 = vcmp.gt.f32.partialorder %v489, 0.0
        %vm632 = vcmp.gt.f32.partialorder %v491, 0.0
        %vm633 = vcmp.gt.f32.partialorder %v495, 0.0
        %vm634 = vcmp.gt.f32.partialorder %v497, 0.0
        %vm635 = vcmp.gt.f32.partialorder %v501, 0.0
        %vm636 = vcmp.gt.f32.partialorder %v503, 0.0
        %vm637 = vcmp.gt.f32.partialorder %v507, 0.0
        %vm638 = vcmp.gt.f32.partialorder %v509, 0.0
        %vm639 = vcmp.gt.f32.partialorder %v513, 0.0
        %vm640 = vcmp.gt.f32.partialorder %v515, 0.0
        %vm641 = vcmp.gt.f32.partialorder %v519, 0.0
        %vm642 = vcmp.gt.f32.partialorder %v521, 0.0
        %vm643 = vcmp.gt.f32.partialorder %v525, 0.0
        %vm644 = vcmp.gt.f32.partialorder %v527, 0.0
        %vm645 = vcmp.gt.f32.partialorder %v531, 0.0
        %vm646 = vcmp.gt.f32.partialorder %v533, 0.0
        %vm647 = vcmp.gt.f32.partialorder %v537, 0.0
        %vm648 = vcmp.gt.f32.partialorder %v539, 0.0
        %vm649 = vcmp.gt.f32.partialorder %v543, 0.0
        %vm650 = vcmp.gt.f32.partialorder %v545, 0.0
        %vm651 = vcmp.gt.f32.partialorder %v549, 0.0
        %vm652 = vcmp.gt.f32.partialorder %v551, 0.0
        %vm653 = vcmp.gt.f32.partialorder %v555, 0.0
        %vm654 = vcmp.gt.f32.partialorder %v557, 0.0
        %vm655 = vcmp.gt.f32.partialorder %v561, 0.0
        %vm656 = vcmp.gt.f32.partialorder %v563, 0.0
        %vm657 = vcmp.gt.f32.partialorder %v567, 0.0
        %vm658 = vcmp.gt.f32.partialorder %v569, 0.0
        %vm659 = vcmp.gt.f32.partialorder %v573, 0.0
        %vm660 = vcmp.gt.f32.partialorder %v575, 0.0
        %vm661 = vcmp.gt.f32.partialorder %v579, 0.0
        %vm662 = vcmp.gt.f32.partialorder %v581, 0.0
        %vm663 = vcmp.gt.f32.partialorder %v585, 0.0
        %vm664 = vcmp.gt.f32.partialorder %v587, 0.0
        %vm665 = vcmp.gt.f32.partialorder %v591, 0.0
        %vm666 = vcmp.gt.f32.partialorder %v593, 0.0
        %vm667 = vcmp.gt.f32.partialorder %v597, 0.0
        %vm668 = vcmp.gt.f32.partialorder %v599, 0.0
        %vm669 = vcmp.gt.f32.partialorder %v603, 0.0
        %vm670 = vcmp.gt.f32.partialorder %v605, 0.0
        %v671 = vmin.f32 %v417, 0.0
        %v672 = vmin.f32 %v419, 0.0
        %v673 = vmin.f32 %v423, 0.0
        %v674 = vmin.f32 %v425, 0.0
        %v675 = vmin.f32 %v429, 0.0
        %v676 = vmin.f32 %v431, 0.0
        %v677 = vmin.f32 %v435, 0.0
        %v678 = vmin.f32 %v437, 0.0
        %v679 = vmin.f32 %v441, 0.0
        %v680 = vmin.f32 %v443, 0.0
        %v681 = vmin.f32 %v447, 0.0
        %v682 = vmin.f32 %v449, 0.0
        %v683 = vmin.f32 %v453, 0.0
        %v684 = vmin.f32 %v455, 0.0
        %v685 = vmin.f32 %v459, 0.0
        %v686 = vmin.f32 %v461, 0.0
        %v687 = vmin.f32 %v465, 0.0
        %v688 = vmin.f32 %v467, 0.0
        %v689 = vmin.f32 %v471, 0.0
        %v690 = vmin.f32 %v473, 0.0
        %v691 = vmin.f32 %v477, 0.0
        %v692 = vmin.f32 %v479, 0.0
        %v693 = vmin.f32 %v483, 0.0
        %v694 = vmin.f32 %v485, 0.0
        %v695 = vmin.f32 %v489, 0.0
        %v696 = vmin.f32 %v491, 0.0
        %v697 = vmin.f32 %v495, 0.0
        %v698 = vmin.f32 %v497, 0.0
        %v699 = vmin.f32 %v501, 0.0
        %v700 = vmin.f32 %v503, 0.0
        %v701 = vmin.f32 %v507, 0.0
        %v702 = vmin.f32 %v509, 0.0
        %v703 = vmin.f32 %v513, 0.0
        %v704 = vmin.f32 %v515, 0.0
        %v705 = vmin.f32 %v519, 0.0
        %v706 = vmin.f32 %v521, 0.0
        %v707 = vmin.f32 %v525, 0.0
        %v708 = vmin.f32 %v527, 0.0
        %v709 = vmin.f32 %v531, 0.0
        %v710 = vmin.f32 %v533, 0.0
        %v711 = vmin.f32 %v537, 0.0
        %v712 = vmin.f32 %v539, 0.0
        %v713 = vmin.f32 %v543, 0.0
        %v714 = vmin.f32 %v545, 0.0
        %v715 = vmin.f32 %v549, 0.0
        %v716 = vmin.f32 %v551, 0.0
        %v717 = vmin.f32 %v555, 0.0
        %v718 = vmin.f32 %v557, 0.0
        %v719 = vmin.f32 %v561, 0.0
        %v720 = vmin.f32 %v563, 0.0
        %v721 = vmin.f32 %v567, 0.0
        %v722 = vmin.f32 %v569, 0.0
        %v723 = vmin.f32 %v573, 0.0
        %v724 = vmin.f32 %v575, 0.0
        %v725 = vmin.f32 %v579, 0.0
        %v726 = vmin.f32 %v581, 0.0
        %v727 = vmin.f32 %v585, 0.0
        %v728 = vmin.f32 %v587, 0.0
        %v729 = vmin.f32 %v591, 0.0
        %v730 = vmin.f32 %v593, 0.0
        %v731 = vmin.f32 %v597, 0.0
        %v732 = vmin.f32 %v599, 0.0
        %v733 = vmin.f32 %v603, 0.0
        %v734 = vmin.f32 %v605, 0.0
        %v735 = vmul.f32 %v671, 1.442695
        %v736 = vpow.pop %v735
        %v737 = vmul.f32 %v672, 1.442695
        %v738 = vpow.pop %v737
        %v739 = vmul.f32 %v673, 1.442695
        %v740 = vpow.pop %v739
        %v741 = vmul.f32 %v674, 1.442695
        %v742 = vpow.pop %v741
        %v743 = vmul.f32 %v675, 1.442695
        %v744 = vpow.pop %v743
        %v745 = vmul.f32 %v676, 1.442695
        %v746 = vpow.pop %v745
        %v747 = vmul.f32 %v677, 1.442695
        %v748 = vpow.pop %v747
        %v749 = vmul.f32 %v678, 1.442695
        %v750 = vpow.pop %v749
        %v751 = vmul.f32 %v679, 1.442695
        %v752 = vpow.pop %v751
        %v753 = vmul.f32 %v680, 1.442695
        %v754 = vpow.pop %v753
        %v755 = vmul.f32 %v681, 1.442695
        %v756 = vpow.pop %v755
        %v757 = vmul.f32 %v682, 1.442695
        %v758 = vpow.pop %v757
        %v759 = vmul.f32 %v683, 1.442695
        %v760 = vpow.pop %v759
        %v761 = vmul.f32 %v684, 1.442695
        %v762 = vpow.pop %v761
        %v763 = vmul.f32 %v685, 1.442695
        %v764 = vpow.pop %v763
        %v765 = vmul.f32 %v686, 1.442695
        %v766 = vpow.pop %v765
        %v767 = vmul.f32 %v687, 1.442695
        %v768 = vpow.pop %v767
        %v769 = vmul.f32 %v688, 1.442695
        %v770 = vpow.pop %v769
        %v771 = vmul.f32 %v689, 1.442695
        %v772 = vpow.pop %v771
        %v773 = vmul.f32 %v690, 1.442695
        %v774 = vpow.pop %v773
        %v775 = vmul.f32 %v691, 1.442695
        %v776 = vpow.pop %v775
        %v777 = vmul.f32 %v692, 1.442695
        %v778 = vpow.pop %v777
        %v779 = vmul.f32 %v693, 1.442695
        %v780 = vpow.pop %v779
        %v781 = vmul.f32 %v694, 1.442695
        %v782 = vpow.pop %v781
        %v783 = vmul.f32 %v695, 1.442695
        %v784 = vpow.pop %v783
        %v785 = vmul.f32 %v696, 1.442695
        %v786 = vpow.pop %v785
        %v787 = vmul.f32 %v697, 1.442695
        %v788 = vpow.pop %v787
        %v789 = vmul.f32 %v698, 1.442695
        %v790 = vpow.pop %v789
        %v791 = vmul.f32 %v699, 1.442695
        %v792 = vpow.pop %v791
        %v793 = vmul.f32 %v700, 1.442695
        %v794 = vpow.pop %v793
        %v795 = vmul.f32 %v701, 1.442695
        %v796 = vpow.pop %v795
        %v797 = vmul.f32 %v702, 1.442695
        %v798 = vpow.pop %v797
        %v799 = vmul.f32 %v703, 1.442695
        %v800 = vpow.pop %v799
        %v801 = vmul.f32 %v704, 1.442695
        %v802 = vpow.pop %v801
        %v803 = vmul.f32 %v705, 1.442695
        %v804 = vpow.pop %v803
        %v805 = vmul.f32 %v706, 1.442695
        %v806 = vpow.pop %v805
        %v807 = vmul.f32 %v707, 1.442695
        %v808 = vpow.pop %v807
        %v809 = vmul.f32 %v708, 1.442695
        %v810 = vpow.pop %v809
        %v811 = vmul.f32 %v709, 1.442695
        %v812 = vpow.pop %v811
        %v813 = vmul.f32 %v710, 1.442695
        %v814 = vpow.pop %v813
        %v815 = vmul.f32 %v711, 1.442695
        %v816 = vpow.pop %v815
        %v817 = vmul.f32 %v712, 1.442695
        %v818 = vpow.pop %v817
        %v819 = vmul.f32 %v713, 1.442695
        %v820 = vpow.pop %v819
        %v821 = vmul.f32 %v714, 1.442695
        %v822 = vpow.pop %v821
        %v823 = vmul.f32 %v715, 1.442695
        %v824 = vpow.pop %v823
        %v825 = vmul.f32 %v716, 1.442695
        %v826 = vpow.pop %v825
        %v827 = vmul.f32 %v717, 1.442695
        %v828 = vpow.pop %v827
        %v829 = vmul.f32 %v718, 1.442695
        %v830 = vpow.pop %v829
        %v831 = vmul.f32 %v719, 1.442695
        %v832 = vpow.pop %v831
        %v833 = vmul.f32 %v720, 1.442695
        %v834 = vpow.pop %v833
        %v835 = vmul.f32 %v721, 1.442695
        %v836 = vpow.pop %v835
        %v837 = vmul.f32 %v722, 1.442695
        %v838 = vpow.pop %v837
        %v839 = vmul.f32 %v723, 1.442695
        %v840 = vpow.pop %v839
        %v841 = vmul.f32 %v724, 1.442695
        %v842 = vpow.pop %v841
        %v843 = vmul.f32 %v725, 1.442695
        %v844 = vpow.pop %v843
        %v845 = vmul.f32 %v726, 1.442695
        %v846 = vpow.pop %v845
        %v847 = vmul.f32 %v727, 1.442695
        %v848 = vpow.pop %v847
        %v849 = vmul.f32 %v728, 1.442695
        %v850 = vpow.pop %v849
        %v851 = vmul.f32 %v729, 1.442695
        %v852 = vpow.pop %v851
        %v853 = vmul.f32 %v730, 1.442695
        %v854 = vpow.pop %v853
        %v855 = vmul.f32 %v731, 1.442695
        %v856 = vpow.pop %v855
        %v857 = vmul.f32 %v732, 1.442695
        %v858 = vpow.pop %v857
        %v859 = vmul.f32 %v733, 1.442695
        %v860 = vpow.pop %v859
        %v861 = vmul.f32 %v734, 1.442695
        %v862 = vpow.pop %v861
        %v863 = vsub.f32 %v736, 1.0
        %v864 = vsub.f32 %v738, 1.0
        %v865 = vsub.f32 %v740, 1.0
        %v866 = vsub.f32 %v742, 1.0
        %v867 = vsub.f32 %v744, 1.0
        %v868 = vsub.f32 %v746, 1.0
        %v869 = vsub.f32 %v748, 1.0
        %v870 = vsub.f32 %v750, 1.0
        %v871 = vsub.f32 %v752, 1.0
        %v872 = vsub.f32 %v754, 1.0
        %v873 = vsub.f32 %v756, 1.0
        %v874 = vsub.f32 %v758, 1.0
        %v875 = vsub.f32 %v760, 1.0
        %v876 = vsub.f32 %v762, 1.0
        %v877 = vsub.f32 %v764, 1.0
        %v878 = vsub.f32 %v766, 1.0
        %v879 = vsub.f32 %v768, 1.0
        %v880 = vsub.f32 %v770, 1.0
        %v881 = vsub.f32 %v772, 1.0
        %v882 = vsub.f32 %v774, 1.0
        %v883 = vsub.f32 %v776, 1.0
        %v884 = vsub.f32 %v778, 1.0
        %v885 = vsub.f32 %v780, 1.0
        %v886 = vsub.f32 %v782, 1.0
        %v887 = vsub.f32 %v784, 1.0
        %v888 = vsub.f32 %v786, 1.0
        %v889 = vsub.f32 %v788, 1.0
        %v890 = vsub.f32 %v790, 1.0
        %v891 = vsub.f32 %v792, 1.0
        %v892 = vsub.f32 %v794, 1.0
        %v893 = vsub.f32 %v796, 1.0
        %v894 = vsub.f32 %v798, 1.0
        %v895 = vsub.f32 %v800, 1.0
        %v896 = vsub.f32 %v802, 1.0
        %v897 = vsub.f32 %v804, 1.0
        %v898 = vsub.f32 %v806, 1.0
        %v899 = vsub.f32 %v808, 1.0
        %v900 = vsub.f32 %v810, 1.0
        %v901 = vsub.f32 %v812, 1.0
        %v902 = vsub.f32 %v814, 1.0
        %v903 = vsub.f32 %v816, 1.0
        %v904 = vsub.f32 %v818, 1.0
        %v905 = vsub.f32 %v820, 1.0
        %v906 = vsub.f32 %v822, 1.0
        %v907 = vsub.f32 %v824, 1.0
        %v908 = vsub.f32 %v826, 1.0
        %v909 = vsub.f32 %v828, 1.0
        %v910 = vsub.f32 %v830, 1.0
        %v911 = vsub.f32 %v832, 1.0
        %v912 = vsub.f32 %v834, 1.0
        %v913 = vsub.f32 %v836, 1.0
        %v914 = vsub.f32 %v838, 1.0
        %v915 = vsub.f32 %v840, 1.0
        %v916 = vsub.f32 %v842, 1.0
        %v917 = vsub.f32 %v844, 1.0
        %v918 = vsub.f32 %v846, 1.0
        %v919 = vsub.f32 %v848, 1.0
        %v920 = vsub.f32 %v850, 1.0
        %v921 = vsub.f32 %v852, 1.0
        %v922 = vsub.f32 %v854, 1.0
        %v923 = vsub.f32 %v856, 1.0
        %v924 = vsub.f32 %v858, 1.0
        %v925 = vsub.f32 %v860, 1.0
        %v926 = vsub.f32 %v862, 1.0
        %v927 = vsel %vm607, %v417, %v863
        %v928 = vsel %vm608, %v419, %v864
        %v929 = vsel %vm609, %v423, %v865
        %v930 = vsel %vm610, %v425, %v866
        %v931 = vsel %vm611, %v429, %v867
        %v932 = vsel %vm612, %v431, %v868
        %v933 = vsel %vm613, %v435, %v869
        %v934 = vsel %vm614, %v437, %v870
        %v935 = vsel %vm615, %v441, %v871
        %v936 = vsel %vm616, %v443, %v872
        %v937 = vsel %vm617, %v447, %v873
        %v938 = vsel %vm618, %v449, %v874
        %v939 = vsel %vm619, %v453, %v875
        %v940 = vsel %vm620, %v455, %v876
        %v941 = vsel %vm621, %v459, %v877
        %v942 = vsel %vm622, %v461, %v878
        %v943 = vsel %vm623, %v465, %v879
        %v944 = vsel %vm624, %v467, %v880
        %v945 = vsel %vm625, %v471, %v881
        %v946 = vsel %vm626, %v473, %v882
        %v947 = vsel %vm627, %v477, %v883
        %v948 = vsel %vm628, %v479, %v884
        %v949 = vsel %vm629, %v483, %v885
        %v950 = vsel %vm630, %v485, %v886
        %v951 = vsel %vm631, %v489, %v887
        %v952 = vsel %vm632, %v491, %v888
        %v953 = vsel %vm633, %v495, %v889
        %v954 = vsel %vm634, %v497, %v890
        %v955 = vsel %vm635, %v501, %v891
        %v956 = vsel %vm636, %v503, %v892
        %v957 = vsel %vm637, %v507, %v893
        %v958 = vsel %vm638, %v509, %v894
        %v959 = vsel %vm639, %v513, %v895
        %v960 = vsel %vm640, %v515, %v896
        %v961 = vsel %vm641, %v519, %v897
        %v962 = vsel %vm642, %v521, %v898
        %v963 = vsel %vm643, %v525, %v899
        %v964 = vsel %vm644, %v527, %v900
        %v965 = vsel %vm645, %v531, %v901
        %v966 = vsel %vm646, %v533, %v902
        %v967 = vsel %vm647, %v537, %v903
        %v968 = vsel %vm648, %v539, %v904
        %v969 = vsel %vm649, %v543, %v905
        %v970 = vsel %vm650, %v545, %v906
        %v971 = vsel %vm651, %v549, %v907
        %v972 = vsel %vm652, %v551, %v908
        %v973 = vsel %vm653, %v555, %v909
        %v974 = vsel %vm654, %v557, %v910
        %v975 = vsel %vm655, %v561, %v911
        %v976 = vsel %vm656, %v563, %v912
        %v977 = vsel %vm657, %v567, %v913
        %v978 = vsel %vm658, %v569, %v914
        %v979 = vsel %vm659, %v573, %v915
        %v980 = vsel %vm660, %v575, %v916
        %v981 = vsel %vm661, %v579, %v917
        %v982 = vsel %vm662, %v581, %v918
        %v983 = vsel %vm663, %v585, %v919
        %v984 = vsel %vm664, %v587, %v920
        %v985 = vsel %vm665, %v591, %v921
        %v986 = vsel %vm666, %v593, %v922
        %v987 = vsel %vm667, %v597, %v923
        %v988 = vsel %vm668, %v599, %v924
        %v989 = vsel %vm669, %v603, %v925
        %v990 = vsel %vm670, %v605, %v926
        %v991 = vld [vmem:[#allocation7] sm:$0xff]
        %v992 = vld [vmem:[#allocation7 + $0x8] sm:$0xff]
        %v993 = vld [vmem:[#allocation7 + $0x10] sm:$0xff]
        %v994 = vld [vmem:[#allocation7 + $0x18] sm:$0xff]
        %v995 = vld [vmem:[#allocation7 + $0x20] sm:$0xff]
        %v996 = vld [vmem:[#allocation7 + $0x28] sm:$0xff]
        %v997 = vld [vmem:[#allocation7 + $0x30] sm:$0xff]
        %v998 = vld [vmem:[#allocation7 + $0x38] sm:$0xff]
        %v999 = vld [vmem:[#allocation7 + $0x40] sm:$0xff]
        %v1000 = vld [vmem:[#allocation7 + $0x48] sm:$0xff]
        %v1001 = vld [vmem:[#allocation7 + $0x50] sm:$0xff]
        %v1002 = vld [vmem:[#allocation7 + $0x58] sm:$0xff]
        %v1003 = vld [vmem:[#allocation7 + $0x60] sm:$0xff]
        %v1004 = vld [vmem:[#allocation7 + $0x68] sm:$0xff]
        %v1005 = vld [vmem:[#allocation7 + $0x70] sm:$0xff]
        %v1006 = vld [vmem:[#allocation7 + $0x78] sm:$0xff]
        %v1007 = vld [vmem:[#allocation7 + $0x80] sm:$0xff]
        %v1008 = vld [vmem:[#allocation7 + $0x88] sm:$0xff]
        %v1009 = vld [vmem:[#allocation7 + $0x90] sm:$0xff]
        %v1010 = vld [vmem:[#allocation7 + $0x98] sm:$0xff]
        %v1011 = vld [vmem:[#allocation7 + $0xa0] sm:$0xff]
        %v1012 = vld [vmem:[#allocation7 + $0xa8] sm:$0xff]
        %v1013 = vld [vmem:[#allocation7 + $0xb0] sm:$0xff]
        %v1014 = vld [vmem:[#allocation7 + $0xb8] sm:$0xff]
        %v1015 = vld [vmem:[#allocation7 + $0xc0] sm:$0xff]
        %v1016 = vld [vmem:[#allocation7 + $0xc8] sm:$0xff]
        %v1017 = vld [vmem:[#allocation7 + $0xd0] sm:$0xff]
        %v1018 = vld [vmem:[#allocation7 + $0xd8] sm:$0xff]
        %v1019 = vld [vmem:[#allocation7 + $0xe0] sm:$0xff]
        %v1020 = vld [vmem:[#allocation7 + $0xe8] sm:$0xff]
        %v1021 = vld [vmem:[#allocation7 + $0xf0] sm:$0xff]
        %v1022 = vld [vmem:[#allocation7 + $0xf8] sm:$0xff]
        %v1023 = vld [vmem:[%s4] sm:$0x1]
        %v1025 = vlaneseq
        %v1026 = vshrl.u32 %v1025, 7
        %v1027 = vsub.s32 0, %v1026
        %v1028 = vrot.slane %v1023, %v1027
        %1030 = vmatprep.subr.mxu0 %v992
        %1031 = vmatpush1.xpose.msra.mxu0 %v991
        %1032 = vmatprep.subr.mxu0 %v994
        %1033 = vmatpush1.xpose.msra.mxu0 %v993
        %1034 = vmatprep.subr.mxu0 %v996
        %1035 = vmatpush1.xpose.msra.mxu0 %v995
        %1036 = vmatprep.subr.mxu0 %v998
        %1037 = vmatpush1.xpose.msra.mxu0 %v997
        %1038 = vmatprep.subr.mxu0 %v1000
        %1039 = vmatpush1.xpose.msra.mxu0 %v999
        %1040 = vmatprep.subr.mxu0 %v1002
        %1041 = vmatpush1.xpose.msra.mxu0 %v1001
        %1042 = vmatprep.subr.mxu0 %v1004
        %1043 = vmatpush1.xpose.msra.mxu0 %v1003
        %1044 = vmatprep.subr.mxu0 %v1006
        %1045 = vmatpush1.xpose.msra.mxu0 %v1005
        %1046 = vmatprep.subr.mxu0 %v1008
        %1047 = vmatpush1.xpose.msra.mxu0 %v1007
        %1048 = vmatprep.subr.mxu0 %v1010
        %1049 = vmatpush1.xpose.msra.mxu0 %v1009
        %1050 = vmatprep.subr.mxu0 %v1012
        %1051 = vmatpush1.xpose.msra.mxu0 %v1011
        %1052 = vmatprep.subr.mxu0 %v1014
        %1053 = vmatpush1.xpose.msra.mxu0 %v1013
        %1054 = vmatprep.subr.mxu0 %v1016
        %1055 = vmatpush1.xpose.msra.mxu0 %v1015
        %1056 = vmatprep.subr.mxu0 %v1018
        %1057 = vmatpush1.xpose.msra.mxu0 %v1017
        %1058 = vmatprep.subr.mxu0 %v1020
        %1059 = vmatpush1.xpose.msra.mxu0 %v1019
        %1060 = vmatprep.subr.mxu0 %v1022
        %1061 = vmatpush1.xpose.msra.mxu0 %v1021
        %1062 = vmatprep.subr.mxu0 0.0
        %1063 = vmatpush1.xpose.msra.mxu0 0.0
        %1064 = vmatprep.subr.mxu0 0.0
        %1065 = vmatpush1.xpose.msra.mxu0 0.0
        %1066 = vmatprep.subr.mxu0 0.0
        %1067 = vmatpush1.xpose.msra.mxu0 0.0
        %1068 = vmatprep.subr.mxu0 0.0
        %1069 = vmatpush1.xpose.msra.mxu0 0.0
        %1070 = vmatprep.subr.mxu0 0.0
        %1071 = vmatpush1.xpose.msra.mxu0 0.0
        %1072 = vmatprep.subr.mxu0 0.0
        %1073 = vmatpush1.xpose.msra.mxu0 0.0
        %1074 = vmatprep.subr.mxu0 0.0
        %1075 = vmatpush1.xpose.msra.mxu0 0.0
        %1076 = vmatprep.subr.mxu0 0.0
        %1077 = vmatpush1.xpose.msra.mxu0 0.0
        %1078 = vmatprep.subr.mxu0 0.0
        %1079 = vmatpush1.xpose.msra.mxu0 0.0
        %1080 = vmatprep.subr.mxu0 0.0
        %1081 = vmatpush1.xpose.msra.mxu0 0.0
        %1082 = vmatprep.subr.mxu0 0.0
        %1083 = vmatpush1.xpose.msra.mxu0 0.0
        %1084 = vmatprep.subr.mxu0 0.0
        %1085 = vmatpush1.xpose.msra.mxu0 0.0
        %1086 = vmatprep.subr.mxu0 0.0
        %1087 = vmatpush1.xpose.msra.mxu0 0.0
        %1088 = vmatprep.subr.mxu0 0.0
        %1089 = vmatpush1.xpose.msra.mxu0 0.0
        %1090 = vmatprep.subr.mxu0 0.0
        %1091 = vmatpush1.xpose.msra.mxu0 0.0
        %1092 = vmatprep.subr.mxu0 0.0
        %1093 = vmatpush1.xpose.msra.mxu0 0.0
        %1094 = vmatprep.mubr.f32.mxu0 %v928
        %1095 = vmatmul.mubr.f32.gmra.mrb[0].mxu0 %v927
        %v1096 = vpop.f32.mrb[0].mxu0
        %v1097 = vadd.f32 %v1028, %v1096
        %v1098 = vpop.f32.mrb[0].mxu0
        %1099 = vmatprep.mubr.f32.mxu0 %v930
        %1100 = vmatmul.mubr.f32.gmra.mrb[0].mxu0 %v929
        %v1101 = vpop.f32.mrb[0].mxu0
        %v1102 = vadd.f32 %v1028, %v1101
        %v1103 = vpop.f32.mrb[0].mxu0
        %1104 = vmatprep.mubr.f32.mxu0 %v932
        %1105 = vmatmul.mubr.f32.gmra.mrb[0].mxu0 %v931
        %v1106 = vpop.f32.mrb[0].mxu0
        %v1107 = vadd.f32 %v1028, %v1106
        %v1108 = vpop.f32.mrb[0].mxu0
        %1109 = vmatprep.mubr.f32.mxu0 %v934
        %1110 = vmatmul.mubr.f32.gmra.mrb[0].mxu0 %v933
        %v1111 = vpop.f32.mrb[0].mxu0
        %v1112 = vadd.f32 %v1028, %v1111
        %v1113 = vpop.f32.mrb[0].mxu0
        %1114 = vmatprep.mubr.f32.mxu0 %v936
        %1115 = vmatmul.mubr.f32.gmra.mrb[0].mxu0 %v935
        %v1116 = vpop.f32.mrb[0].mxu0
        %v1117 = vadd.f32 %v1028, %v1116
        %v1118 = vpop.f32.mrb[0].mxu0
        %1119 = vmatprep.mubr.f32.mxu0 %v938
        %1120 = vmatmul.mubr.f32.gmra.mrb[0].mxu0 %v937
        %v1121 = vpop.f32.mrb[0].mxu0
        %v1122 = vadd.f32 %v1028, %v1121
        %v1123 = vpop.f32.mrb[0].mxu0
        %1124 = vmatprep.mubr.f32.mxu0 %v940
        %1125 = vmatmul.mubr.f32.gmra.mrb[0].mxu0 %v939
        %v1126 = vpop.f32.mrb[0].mxu0
        %v1127 = vadd.f32 %v1028, %v1126
        %v1128 = vpop.f32.mrb[0].mxu0
        %1129 = vmatprep.mubr.f32.mxu0 %v942
        %1130 = vmatmul.mubr.f32.gmra.mrb[0].mxu0 %v941
        %v1131 = vpop.f32.mrb[0].mxu0
        %v1132 = vadd.f32 %v1028, %v1131
        %v1133 = vpop.f32.mrb[0].mxu0
        %1134 = vmatprep.mubr.f32.mxu0 %v944
        %1135 = vmatmul.mubr.f32.gmra.mrb[0].mxu0 %v943
        %v1136 = vpop.f32.mrb[0].mxu0
        %v1137 = vadd.f32 %v1028, %v1136
        %v1138 = vpop.f32.mrb[0].mxu0
        %1139 = vmatprep.mubr.f32.mxu0 %v946
        %1140 = vmatmul.mubr.f32.gmra.mrb[0].mxu0 %v945
        %v1141 = vpop.f32.mrb[0].mxu0
        %v1142 = vadd.f32 %v1028, %v1141
        %v1143 = vpop.f32.mrb[0].mxu0
        %1144 = vmatprep.mubr.f32.mxu0 %v948
        %1145 = vmatmul.mubr.f32.gmra.mrb[0].mxu0 %v947
        %v1146 = vpop.f32.mrb[0].mxu0
        %v1147 = vadd.f32 %v1028, %v1146
        %v1148 = vpop.f32.mrb[0].mxu0
        %1149 = vmatprep.mubr.f32.mxu0 %v950
        %1150 = vmatmul.mubr.f32.gmra.mrb[0].mxu0 %v949
        %v1151 = vpop.f32.mrb[0].mxu0
        %v1152 = vadd.f32 %v1028, %v1151
        %v1153 = vpop.f32.mrb[0].mxu0
        %1154 = vmatprep.mubr.f32.mxu0 %v952
        %1155 = vmatmul.mubr.f32.gmra.mrb[0].mxu0 %v951
        %v1156 = vpop.f32.mrb[0].mxu0
        %v1157 = vadd.f32 %v1028, %v1156
        %v1158 = vpop.f32.mrb[0].mxu0
        %1159 = vmatprep.mubr.f32.mxu0 %v954
        %1160 = vmatmul.mubr.f32.gmra.mrb[0].mxu0 %v953
        %v1161 = vpop.f32.mrb[0].mxu0
        %v1162 = vadd.f32 %v1028, %v1161
        %v1163 = vpop.f32.mrb[0].mxu0
        %1164 = vmatprep.mubr.f32.mxu0 %v956
        %1165 = vmatmul.mubr.f32.gmra.mrb[0].mxu0 %v955
        %v1166 = vpop.f32.mrb[0].mxu0
        %v1167 = vadd.f32 %v1028, %v1166
        %v1168 = vpop.f32.mrb[0].mxu0
        %1169 = vmatprep.mubr.f32.mxu0 %v958
        %1170 = vmatmul.mubr.f32.gmra.mrb[0].mxu0 %v957
        %v1171 = vpop.f32.mrb[0].mxu0
        %v1172 = vadd.f32 %v1028, %v1171
        %v1173 = vpop.f32.mrb[0].mxu0
        %1174 = vmatprep.mubr.f32.mxu0 %v960
        %1175 = vmatmul.mubr.f32.gmra.mrb[0].mxu0 %v959
        %v1176 = vpop.f32.mrb[0].mxu0
        %v1177 = vadd.f32 %v1028, %v1176
        %v1178 = vpop.f32.mrb[0].mxu0
        %1179 = vmatprep.mubr.f32.mxu0 %v962
        %1180 = vmatmul.mubr.f32.gmra.mrb[0].mxu0 %v961
        %v1181 = vpop.f32.mrb[0].mxu0
        %v1182 = vadd.f32 %v1028, %v1181
        %v1183 = vpop.f32.mrb[0].mxu0
        %1184 = vmatprep.mubr.f32.mxu0 %v964
        %1185 = vmatmul.mubr.f32.gmra.mrb[0].mxu0 %v963
        %v1186 = vpop.f32.mrb[0].mxu0
        %v1187 = vadd.f32 %v1028, %v1186
        %v1188 = vpop.f32.mrb[0].mxu0
        %1189 = vmatprep.mubr.f32.mxu0 %v966
        %1190 = vmatmul.mubr.f32.gmra.mrb[0].mxu0 %v965
        %v1191 = vpop.f32.mrb[0].mxu0
        %v1192 = vadd.f32 %v1028, %v1191
        %v1193 = vpop.f32.mrb[0].mxu0
        %1194 = vmatprep.mubr.f32.mxu0 %v968
        %1195 = vmatmul.mubr.f32.gmra.mrb[0].mxu0 %v967
        %v1196 = vpop.f32.mrb[0].mxu0
        %v1197 = vadd.f32 %v1028, %v1196
        %v1198 = vpop.f32.mrb[0].mxu0
        %1199 = vmatprep.mubr.f32.mxu0 %v970
        %1200 = vmatmul.mubr.f32.gmra.mrb[0].mxu0 %v969
        %v1201 = vpop.f32.mrb[0].mxu0
        %v1202 = vadd.f32 %v1028, %v1201
        %v1203 = vpop.f32.mrb[0].mxu0
        %1204 = vmatprep.mubr.f32.mxu0 %v972
        %1205 = vmatmul.mubr.f32.gmra.mrb[0].mxu0 %v971
        %v1206 = vpop.f32.mrb[0].mxu0
        %v1207 = vadd.f32 %v1028, %v1206
        %v1208 = vpop.f32.mrb[0].mxu0
        %1209 = vmatprep.mubr.f32.mxu0 %v974
        %1210 = vmatmul.mubr.f32.gmra.mrb[0].mxu0 %v973
        %v1211 = vpop.f32.mrb[0].mxu0
        %v1212 = vadd.f32 %v1028, %v1211
        %v1213 = vpop.f32.mrb[0].mxu0
        %1214 = vmatprep.mubr.f32.mxu0 %v976
        %1215 = vmatmul.mubr.f32.gmra.mrb[0].mxu0 %v975
        %v1216 = vpop.f32.mrb[0].mxu0
        %v1217 = vadd.f32 %v1028, %v1216
        %v1218 = vpop.f32.mrb[0].mxu0
        %1219 = vmatprep.mubr.f32.mxu0 %v978
        %1220 = vmatmul.mubr.f32.gmra.mrb[0].mxu0 %v977
        %v1221 = vpop.f32.mrb[0].mxu0
        %v1222 = vadd.f32 %v1028, %v1221
        %v1223 = vpop.f32.mrb[0].mxu0
        %1224 = vmatprep.mubr.f32.mxu0 %v980
        %1225 = vmatmul.mubr.f32.gmra.mrb[0].mxu0 %v979
        %v1226 = vpop.f32.mrb[0].mxu0
        %v1227 = vadd.f32 %v1028, %v1226
        %v1228 = vpop.f32.mrb[0].mxu0
        %1229 = vmatprep.mubr.f32.mxu0 %v982
        %1230 = vmatmul.mubr.f32.gmra.mrb[0].mxu0 %v981
        %v1231 = vpop.f32.mrb[0].mxu0
        %v1232 = vadd.f32 %v1028, %v1231
        %v1233 = vpop.f32.mrb[0].mxu0
        %1234 = vmatprep.mubr.f32.mxu0 %v984
        %1235 = vmatmul.mubr.f32.gmra.mrb[0].mxu0 %v983
        %v1236 = vpop.f32.mrb[0].mxu0
        %v1237 = vadd.f32 %v1028, %v1236
        %v1238 = vpop.f32.mrb[0].mxu0
        %1239 = vmatprep.mubr.f32.mxu0 %v986
        %1240 = vmatmul.mubr.f32.gmra.mrb[0].mxu0 %v985
        %v1241 = vpop.f32.mrb[0].mxu0
        %v1242 = vadd.f32 %v1028, %v1241
        %v1243 = vpop.f32.mrb[0].mxu0
        %1244 = vmatprep.mubr.f32.mxu0 %v988
        %1245 = vmatmul.mubr.f32.gmra.mrb[0].mxu0 %v987
        %v1246 = vpop.f32.mrb[0].mxu0
        %v1247 = vadd.f32 %v1028, %v1246
        %v1248 = vpop.f32.mrb[0].mxu0
        %1249 = vmatprep.mubr.f32.mxu0 %v990
        %1250 = vmatmul.mubr.f32.gmra.mrb[0].mxu0 %v989
        %v1251 = vpop.f32.mrb[0].mxu0
        %v1252 = vadd.f32 %v1028, %v1251
        %v1253 = vpop.f32.mrb[0].mxu0
        %1254 = vdwg.mxu0
        %v1255 = vmul.f32 %v1097, %v274
        %v1256 = vmul.f32 %v1102, %v275
        %v1257 = vmul.f32 %v1107, %v276
        %v1258 = vmul.f32 %v1112, %v277
        %v1259 = vmul.f32 %v1117, %v278
        %v1260 = vmul.f32 %v1122, %v279
        %v1261 = vmul.f32 %v1127, %v280
        %v1262 = vmul.f32 %v1132, %v281
        %v1263 = vmul.f32 %v1137, %v282
        %v1264 = vmul.f32 %v1142, %v283
        %v1265 = vmul.f32 %v1147, %v284
        %v1266 = vmul.f32 %v1152, %v285
        %v1267 = vmul.f32 %v1157, %v286
        %v1268 = vmul.f32 %v1162, %v287
        %v1269 = vmul.f32 %v1167, %v288
        %v1270 = vmul.f32 %v1172, %v289
        %v1271 = vmul.f32 %v1177, %v290
        %v1272 = vmul.f32 %v1182, %v291
        %v1273 = vmul.f32 %v1187, %v292
        %v1274 = vmul.f32 %v1192, %v293
        %v1275 = vmul.f32 %v1197, %v294
        %v1276 = vmul.f32 %v1202, %v295
        %v1277 = vmul.f32 %v1207, %v296
        %v1278 = vmul.f32 %v1212, %v297
        %v1279 = vmul.f32 %v1217, %v298
        %v1280 = vmul.f32 %v1222, %v299
        %v1281 = vmul.f32 %v1227, %v300
        %v1282 = vmul.f32 %v1232, %v301
        %v1283 = vmul.f32 %v1237, %v302
        %v1284 = vmul.f32 %v1242, %v303
        %v1285 = vmul.f32 %v1247, %v304
        %v1286 = vmul.f32 %v1252, %v305
        %1287 = vadd.xlane.f32.xlu0 %v1255
        %v1288 = vpop.xlane.xlu0 %1287
        %1289 = vadd.xlane.f32.xlu0 %v1256
        %v1290 = vpop.xlane.xlu0 %1289
        %1291 = vadd.xlane.f32.xlu0 %v1257
        %v1292 = vpop.xlane.xlu0 %1291
        %1293 = vadd.xlane.f32.xlu0 %v1258
        %v1294 = vpop.xlane.xlu0 %1293
        %1295 = vadd.xlane.f32.xlu0 %v1259
        %v1296 = vpop.xlane.xlu0 %1295
        %1297 = vadd.xlane.f32.xlu0 %v1260
        %v1298 = vpop.xlane.xlu0 %1297
        %1299 = vadd.xlane.f32.xlu0 %v1261
        %v1300 = vpop.xlane.xlu0 %1299
        %1301 = vadd.xlane.f32.xlu0 %v1262
        %v1302 = vpop.xlane.xlu0 %1301
        %1303 = vadd.xlane.f32.xlu0 %v1263
        %v1304 = vpop.xlane.xlu0 %1303
        %1305 = vadd.xlane.f32.xlu0 %v1264
        %v1306 = vpop.xlane.xlu0 %1305
        %1307 = vadd.xlane.f32.xlu0 %v1265
        %v1308 = vpop.xlane.xlu0 %1307
        %1309 = vadd.xlane.f32.xlu0 %v1266
        %v1310 = vpop.xlane.xlu0 %1309
        %1311 = vadd.xlane.f32.xlu0 %v1267
        %v1312 = vpop.xlane.xlu0 %1311
        %1313 = vadd.xlane.f32.xlu0 %v1268
        %v1314 = vpop.xlane.xlu0 %1313
        %1315 = vadd.xlane.f32.xlu0 %v1269
        %v1316 = vpop.xlane.xlu0 %1315
        %1317 = vadd.xlane.f32.xlu0 %v1270
        %v1318 = vpop.xlane.xlu0 %1317
        %1319 = vadd.xlane.f32.xlu0 %v1271
        %v1320 = vpop.xlane.xlu0 %1319
        %1321 = vadd.xlane.f32.xlu0 %v1272
        %v1322 = vpop.xlane.xlu0 %1321
        %1323 = vadd.xlane.f32.xlu0 %v1273
        %v1324 = vpop.xlane.xlu0 %1323
        %1325 = vadd.xlane.f32.xlu0 %v1274
        %v1326 = vpop.xlane.xlu0 %1325
        %1327 = vadd.xlane.f32.xlu0 %v1275
        %v1328 = vpop.xlane.xlu0 %1327
        %1329 = vadd.xlane.f32.xlu0 %v1276
        %v1330 = vpop.xlane.xlu0 %1329
        %1331 = vadd.xlane.f32.xlu0 %v1277
        %v1332 = vpop.xlane.xlu0 %1331
        %1333 = vadd.xlane.f32.xlu0 %v1278
        %v1334 = vpop.xlane.xlu0 %1333
        %1335 = vadd.xlane.f32.xlu0 %v1279
        %v1336 = vpop.xlane.xlu0 %1335
        %1337 = vadd.xlane.f32.xlu0 %v1280
        %v1338 = vpop.xlane.xlu0 %1337
        %1339 = vadd.xlane.f32.xlu0 %v1281
        %v1340 = vpop.xlane.xlu0 %1339
        %1341 = vadd.xlane.f32.xlu0 %v1282
        %v1342 = vpop.xlane.xlu0 %1341
        %1343 = vadd.xlane.f32.xlu0 %v1283
        %v1344 = vpop.xlane.xlu0 %1343
        %1345 = vadd.xlane.f32.xlu0 %v1284
        %v1346 = vpop.xlane.xlu0 %1345
        %1347 = vadd.xlane.f32.xlu0 %v1285
        %v1348 = vpop.xlane.xlu0 %1347
        %1349 = vadd.xlane.f32.xlu0 %v1286
        %v1350 = vpop.xlane.xlu0 %1349
        %v1351 = vmul.f32 %v274, %v274
        %v1352 = vmul.f32 %v275, %v275
        %v1353 = vmul.f32 %v276, %v276
        %v1354 = vmul.f32 %v277, %v277
        %v1355 = vmul.f32 %v278, %v278
        %v1356 = vmul.f32 %v279, %v279
        %v1357 = vmul.f32 %v280, %v280
        %v1358 = vmul.f32 %v281, %v281
        %v1359 = vmul.f32 %v282, %v282
        %v1360 = vmul.f32 %v283, %v283
        %v1361 = vmul.f32 %v284, %v284
        %v1362 = vmul.f32 %v285, %v285
        %v1363 = vmul.f32 %v286, %v286
        %v1364 = vmul.f32 %v287, %v287
        %v1365 = vmul.f32 %v288, %v288
        %v1366 = vmul.f32 %v289, %v289
        %v1367 = vmul.f32 %v290, %v290
        %v1368 = vmul.f32 %v291, %v291
        %v1369 = vmul.f32 %v292, %v292
        %v1370 = vmul.f32 %v293, %v293
        %v1371 = vmul.f32 %v294, %v294
        %v1372 = vmul.f32 %v295, %v295
        %v1373 = vmul.f32 %v296, %v296
        %v1374 = vmul.f32 %v297, %v297
        %v1375 = vmul.f32 %v298, %v298
        %v1376 = vmul.f32 %v299, %v299
        %v1377 = vmul.f32 %v300, %v300
        %v1378 = vmul.f32 %v301, %v301
        %v1379 = vmul.f32 %v302, %v302
        %v1380 = vmul.f32 %v303, %v303
        %v1381 = vmul.f32 %v304, %v304
        %v1382 = vmul.f32 %v305, %v305
        %1383 = vadd.xlane.f32.xlu0 %v1351
        %v1384 = vpop.xlane.xlu0 %1383
        %1385 = vadd.xlane.f32.xlu0 %v1352
        %v1386 = vpop.xlane.xlu0 %1385
        %1387 = vadd.xlane.f32.xlu0 %v1353
        %v1388 = vpop.xlane.xlu0 %1387
        %1389 = vadd.xlane.f32.xlu0 %v1354
        %v1390 = vpop.xlane.xlu0 %1389
        %1391 = vadd.xlane.f32.xlu0 %v1355
        %v1392 = vpop.xlane.xlu0 %1391
        %1393 = vadd.xlane.f32.xlu0 %v1356
        %v1394 = vpop.xlane.xlu0 %1393
        %1395 = vadd.xlane.f32.xlu0 %v1357
        %v1396 = vpop.xlane.xlu0 %1395
        %1397 = vadd.xlane.f32.xlu0 %v1358
        %v1398 = vpop.xlane.xlu0 %1397
        %1399 = vadd.xlane.f32.xlu0 %v1359
        %v1400 = vpop.xlane.xlu0 %1399
        %1401 = vadd.xlane.f32.xlu0 %v1360
        %v1402 = vpop.xlane.xlu0 %1401
        %1403 = vadd.xlane.f32.xlu0 %v1361
        %v1404 = vpop.xlane.xlu0 %1403
        %1405 = vadd.xlane.f32.xlu0 %v1362
        %v1406 = vpop.xlane.xlu0 %1405
        %1407 = vadd.xlane.f32.xlu0 %v1363
        %v1408 = vpop.xlane.xlu0 %1407
        %1409 = vadd.xlane.f32.xlu0 %v1364
        %v1410 = vpop.xlane.xlu0 %1409
        %1411 = vadd.xlane.f32.xlu0 %v1365
        %v1412 = vpop.xlane.xlu0 %1411
        %1413 = vadd.xlane.f32.xlu0 %v1366
        %v1414 = vpop.xlane.xlu0 %1413
        %1415 = vadd.xlane.f32.xlu0 %v1367
        %v1416 = vpop.xlane.xlu0 %1415
        %1417 = vadd.xlane.f32.xlu0 %v1368
        %v1418 = vpop.xlane.xlu0 %1417
        %1419 = vadd.xlane.f32.xlu0 %v1369
        %v1420 = vpop.xlane.xlu0 %1419
        %1421 = vadd.xlane.f32.xlu0 %v1370
        %v1422 = vpop.xlane.xlu0 %1421
        %1423 = vadd.xlane.f32.xlu0 %v1371
        %v1424 = vpop.xlane.xlu0 %1423
        %1425 = vadd.xlane.f32.xlu0 %v1372
        %v1426 = vpop.xlane.xlu0 %1425
        %1427 = vadd.xlane.f32.xlu0 %v1373
        %v1428 = vpop.xlane.xlu0 %1427
        %1429 = vadd.xlane.f32.xlu0 %v1374
        %v1430 = vpop.xlane.xlu0 %1429
        %1431 = vadd.xlane.f32.xlu0 %v1375
        %v1432 = vpop.xlane.xlu0 %1431
        %1433 = vadd.xlane.f32.xlu0 %v1376
        %v1434 = vpop.xlane.xlu0 %1433
        %1435 = vadd.xlane.f32.xlu0 %v1377
        %v1436 = vpop.xlane.xlu0 %1435
        %1437 = vadd.xlane.f32.xlu0 %v1378
        %v1438 = vpop.xlane.xlu0 %1437
        %1439 = vadd.xlane.f32.xlu0 %v1379
        %v1440 = vpop.xlane.xlu0 %1439
        %1441 = vadd.xlane.f32.xlu0 %v1380
        %v1442 = vpop.xlane.xlu0 %1441
        %1443 = vadd.xlane.f32.xlu0 %v1381
        %v1444 = vpop.xlane.xlu0 %1443
        %1445 = vadd.xlane.f32.xlu0 %v1382
        %v1446 = vpop.xlane.xlu0 %1445
        %v1447 = vrcp.pop %v1384
        %v1448 = vrcp.pop %v1386
        %v1449 = vrcp.pop %v1388
        %v1450 = vrcp.pop %v1390
        %v1451 = vrcp.pop %v1392
        %v1452 = vrcp.pop %v1394
        %v1453 = vrcp.pop %v1396
        %v1454 = vrcp.pop %v1398
        %v1455 = vrcp.pop %v1400
        %v1456 = vrcp.pop %v1402
        %v1457 = vrcp.pop %v1404
        %v1458 = vrcp.pop %v1406
        %v1459 = vrcp.pop %v1408
        %v1460 = vrcp.pop %v1410
        %v1461 = vrcp.pop %v1412
        %v1462 = vrcp.pop %v1414
        %v1463 = vrcp.pop %v1416
        %v1464 = vrcp.pop %v1418
        %v1465 = vrcp.pop %v1420
        %v1466 = vrcp.pop %v1422
        %v1467 = vrcp.pop %v1424
        %v1468 = vrcp.pop %v1426
        %v1469 = vrcp.pop %v1428
        %v1470 = vrcp.pop %v1430
        %v1471 = vrcp.pop %v1432
        %v1472 = vrcp.pop %v1434
        %v1473 = vrcp.pop %v1436
        %v1474 = vrcp.pop %v1438
        %v1475 = vrcp.pop %v1440
        %v1476 = vrcp.pop %v1442
        %v1477 = vrcp.pop %v1444
        %v1478 = vrcp.pop %v1446
        %v1479 = vmul.f32 %v1288, %v1447
        %v1480 = vmul.f32 %v1290, %v1448
        %v1481 = vmul.f32 %v1292, %v1449
        %v1482 = vmul.f32 %v1294, %v1450
        %v1483 = vmul.f32 %v1296, %v1451
        %v1484 = vmul.f32 %v1298, %v1452
        %v1485 = vmul.f32 %v1300, %v1453
        %v1486 = vmul.f32 %v1302, %v1454
        %v1487 = vmul.f32 %v1304, %v1455
        %v1488 = vmul.f32 %v1306, %v1456
        %v1489 = vmul.f32 %v1308, %v1457
        %v1490 = vmul.f32 %v1310, %v1458
        %v1491 = vmul.f32 %v1312, %v1459
        %v1492 = vmul.f32 %v1314, %v1460
        %v1493 = vmul.f32 %v1316, %v1461
        %v1494 = vmul.f32 %v1318, %v1462
        %v1495 = vmul.f32 %v1320, %v1463
        %v1496 = vmul.f32 %v1322, %v1464
        %v1497 = vmul.f32 %v1324, %v1465
        %v1498 = vmul.f32 %v1326, %v1466
        %v1499 = vmul.f32 %v1328, %v1467
        %v1500 = vmul.f32 %v1330, %v1468
        %v1501 = vmul.f32 %v1332, %v1469
        %v1502 = vmul.f32 %v1334, %v1470
        %v1503 = vmul.f32 %v1336, %v1471
        %v1504 = vmul.f32 %v1338, %v1472
        %v1505 = vmul.f32 %v1340, %v1473
        %v1506 = vmul.f32 %v1342, %v1474
        %v1507 = vmul.f32 %v1344, %v1475
        %v1508 = vmul.f32 %v1346, %v1476
        %v1509 = vmul.f32 %v1348, %v1477
        %v1510 = vmul.f32 %v1350, %v1478
        %v1511 = vmul.f32 %v1479, %v274
        %v1512 = vmul.f32 %v1480, %v275
        %v1513 = vmul.f32 %v1481, %v276
        %v1514 = vmul.f32 %v1482, %v277
        %v1515 = vmul.f32 %v1483, %v278
        %v1516 = vmul.f32 %v1484, %v279
        %v1517 = vmul.f32 %v1485, %v280
        %v1518 = vmul.f32 %v1486, %v281
        %v1519 = vmul.f32 %v1487, %v282
        %v1520 = vmul.f32 %v1488, %v283
        %v1521 = vmul.f32 %v1489, %v284
        %v1522 = vmul.f32 %v1490, %v285
        %v1523 = vmul.f32 %v1491, %v286
        %v1524 = vmul.f32 %v1492, %v287
        %v1525 = vmul.f32 %v1493, %v288
        %v1526 = vmul.f32 %v1494, %v289
        %v1527 = vmul.f32 %v1495, %v290
        %v1528 = vmul.f32 %v1496, %v291
        %v1529 = vmul.f32 %v1497, %v292
        %v1530 = vmul.f32 %v1498, %v293
        %v1531 = vmul.f32 %v1499, %v294
        %v1532 = vmul.f32 %v1500, %v295
        %v1533 = vmul.f32 %v1501, %v296
        %v1534 = vmul.f32 %v1502, %v297
        %v1535 = vmul.f32 %v1503, %v298
        %v1536 = vmul.f32 %v1504, %v299
        %v1537 = vmul.f32 %v1505, %v300
        %v1538 = vmul.f32 %v1506, %v301
        %v1539 = vmul.f32 %v1507, %v302
        %v1540 = vmul.f32 %v1508, %v303
        %v1541 = vmul.f32 %v1509, %v304
        %v1542 = vmul.f32 %v1510, %v305
        %v1543 = vsub.f32 %v1097, %v1511
        %v1544 = vsub.f32 %v1102, %v1512
        %v1545 = vsub.f32 %v1107, %v1513
        %v1546 = vsub.f32 %v1112, %v1514
        %v1547 = vsub.f32 %v1117, %v1515
        %v1548 = vsub.f32 %v1122, %v1516
        %v1549 = vsub.f32 %v1127, %v1517
        %v1550 = vsub.f32 %v1132, %v1518
        %v1551 = vsub.f32 %v1137, %v1519
        %v1552 = vsub.f32 %v1142, %v1520
        %v1553 = vsub.f32 %v1147, %v1521
        %v1554 = vsub.f32 %v1152, %v1522
        %v1555 = vsub.f32 %v1157, %v1523
        %v1556 = vsub.f32 %v1162, %v1524
        %v1557 = vsub.f32 %v1167, %v1525
        %v1558 = vsub.f32 %v1172, %v1526
        %v1559 = vsub.f32 %v1177, %v1527
        %v1560 = vsub.f32 %v1182, %v1528
        %v1561 = vsub.f32 %v1187, %v1529
        %v1562 = vsub.f32 %v1192, %v1530
        %v1563 = vsub.f32 %v1197, %v1531
        %v1564 = vsub.f32 %v1202, %v1532
        %v1565 = vsub.f32 %v1207, %v1533
        %v1566 = vsub.f32 %v1212, %v1534
        %v1567 = vsub.f32 %v1217, %v1535
        %v1568 = vsub.f32 %v1222, %v1536
        %v1569 = vsub.f32 %v1227, %v1537
        %v1570 = vsub.f32 %v1232, %v1538
        %v1571 = vsub.f32 %v1237, %v1539
        %v1572 = vsub.f32 %v1242, %v1540
        %v1573 = vsub.f32 %v1247, %v1541
        %v1574 = vsub.f32 %v1252, %v1542
        %1575 = vst [vmem:[%s271] sm:$0xff] %v1543
        %1576 = vst [vmem:[%s271 + $0x8] sm:$0xff] %v1544
        %1577 = vst [vmem:[%s271 + $0x10] sm:$0xff] %v1545
        %1578 = vst [vmem:[%s271 + $0x18] sm:$0xff] %v1546
        %1579 = vst [vmem:[%s271 + $0x20] sm:$0xff] %v1547
        %1580 = vst [vmem:[%s271 + $0x28] sm:$0xff] %v1548
        %1581 = vst [vmem:[%s271 + $0x30] sm:$0xff] %v1549
        %1582 = vst [vmem:[%s271 + $0x38] sm:$0xff] %v1550
        %1583 = vst [vmem:[%s271 + $0x40] sm:$0xff] %v1551
        %1584 = vst [vmem:[%s271 + $0x48] sm:$0xff] %v1552
        %1585 = vst [vmem:[%s271 + $0x50] sm:$0xff] %v1553
        %1586 = vst [vmem:[%s271 + $0x58] sm:$0xff] %v1554
        %1587 = vst [vmem:[%s271 + $0x60] sm:$0xff] %v1555
        %1588 = vst [vmem:[%s271 + $0x68] sm:$0xff] %v1556
        %1589 = vst [vmem:[%s271 + $0x70] sm:$0xff] %v1557
        %1590 = vst [vmem:[%s271 + $0x78] sm:$0xff] %v1558
        %1591 = vst [vmem:[%s271 + $0x80] sm:$0xff] %v1559
        %1592 = vst [vmem:[%s271 + $0x88] sm:$0xff] %v1560
        %1593 = vst [vmem:[%s271 + $0x90] sm:$0xff] %v1561
        %1594 = vst [vmem:[%s271 + $0x98] sm:$0xff] %v1562
        %1595 = vst [vmem:[%s271 + $0xa0] sm:$0xff] %v1563
        %1596 = vst [vmem:[%s271 + $0xa8] sm:$0xff] %v1564
        %1597 = vst [vmem:[%s271 + $0xb0] sm:$0xff] %v1565
        %1598 = vst [vmem:[%s271 + $0xb8] sm:$0xff] %v1566
        %1599 = vst [vmem:[%s271 + $0xc0] sm:$0xff] %v1567
        %1600 = vst [vmem:[%s271 + $0xc8] sm:$0xff] %v1568
        %1601 = vst [vmem:[%s271 + $0xd0] sm:$0xff] %v1569
        %1602 = vst [vmem:[%s271 + $0xd8] sm:$0xff] %v1570
        %1603 = vst [vmem:[%s271 + $0xe0] sm:$0xff] %v1571
        %1604 = vst [vmem:[%s271 + $0xe8] sm:$0xff] %v1572
        %1605 = vst [vmem:[%s271 + $0xf0] sm:$0xff] %v1573
        %1606 = vst [vmem:[%s271 + $0xf8] sm:$0xff] %v1574
        %s1607 = sand.u32 %s141, 1
        %s1608 = scalar_lea.sflag [#allocation4], %s1607
        %s1609 = sand.u32 %s141, 1
        %s1610 = smul.addr %s1609, 256
        %s1611 = scalar_lea.vmem [#allocation8], %s1610
        // Predicated region
        $region53: #{tpu_custom_call.1} parent=39 // pred_check
          %p1612 = pneg %p151
        $region54: #{tpu_custom_call.1} parent=39 // pred_check_branch
          %1614 = sbr.rel (%p1612) target = $region56
        $region55: #{tpu_custom_call.1} parent=39 // pred_region
          %s1615 = smul.u32 32, %s23
          %s1617 = ssub.s32 4096, 4096
          %1618 = vsyncadd %s1608, %s1617
          %s1619 = smul.addr %s1615, 128
          %s1620 = scalar_lea.hbm %s5, %s1619
          %s1621 = sshll.u32 %s1611, 4
          %s1622 = int_to_ptr.vmem [resolvable:$true] %s1621
          %1627 = dma.vmem_to_hbm [thread:$0]  %s1622, 4096, %s1620, %s1608, 128, 128, 8
        $region56: #{tpu_custom_call.1} parent=39 // pred_fallthru
          _
      $region40: #{tpu_custom_call.1} parent=5 // pred_fallthru
        _
      %p1628 = scmp.le.s32.totalorder 2, %s18
      // Predicated region
      $region57: #{tpu_custom_call.1} parent=5 // pred_check
        %p1629 = pneg %p1628
      $region58: #{tpu_custom_call.1} parent=5 // pred_check_branch
        %1631 = sbr.rel (%p1629) target = $region60
      $region59: #{tpu_custom_call.1} parent=5 // pred_region
        %s1632 = ssub.s32 %s18, 2
        // Predicated region
        $region61: #{tpu_custom_call.1} parent=59 // pred_check
          %p1633 = pneg %p157
        $region62: #{tpu_custom_call.1} parent=59 // pred_check_branch
          %1635 = sbr.rel (%p1633) target = $region64
        $region63: #{tpu_custom_call.1} parent=59 // pred_region
          %s1636 = sand.u32 %s142, 1
          %s1637 = scalar_lea.sflag [#allocation4], %s1636
          %s1638 = sand.u32 %s142, 1
          %s1639 = smul.addr %s1638, 256
          %s1640 = scalar_lea.vmem [#allocation8], %s1639
          %1641 = dma.done %s1637, 4096
        $region64: #{tpu_custom_call.1} parent=59 // pred_fallthru
          _
      $region60: #{tpu_custom_call.1} parent=5 // pred_fallthru
        _
    $region6: #{tpu_custom_call.1} parent=1 // loop_footer
      %s22 = sadd.s32 1, %s18
    $region7: #{tpu_custom_call.1} parent=1 // loop_footer_branch
      %17 = sbr.rel target = $region3
    $region8: #{tpu_custom_call.1} parent=1 // loop_exit
      _
    %1642 = vsyncpa [#allocation3], 1
    %s1643 = scalar_lea.sflag [#allocation3], 1
    %1644 = vsyncpa %s1643, 1
    %1645 = vsyncpa [#allocation6], 1
    %1646 = vsyncpa [#allocation4], 1
    %s1647 = scalar_lea.sflag [#allocation4], 1
    %1648 = vsyncpa %s1647, 1

</llo_original>
